<compile_context>
chip_gen: v7x
topology: tpu7x:2x2x1
jax: 0.10.0
libtpu: 0.0.40
codegen_flags: <defaults>
</compile_context>

<pallas_src>
import functools

import numpy as np
import jax
import jax.numpy as jnp
from jax import lax
from jax.experimental import pallas as pl
from jax.experimental.pallas import tpu as pltpu


def _round_up(x, m):
    return (x + m - 1) // m * m


_VMEM_LIMIT = 48 * 1024 * 1024   # below v7x 64MiB physical, above v5e 16MiB default


# ----------------------------------------------------------------------------
# Pallas kernel 1: weight-stationary matmul + bias (+ReLU), single K block
# ----------------------------------------------------------------------------
def _matmul_bias_kernel(x_ref, w_ref, b_ref, o_ref, *, relu):
    y = jnp.dot(x_ref[...], w_ref[...], preferred_element_type=jnp.float32)
    y = y + b_ref[...]
    if relu:
        y = jnp.maximum(y, 0.0)
    o_ref[...] = y.astype(o_ref.dtype)


def matmul_bias(x, w, b, *, relu=False, compute_dtype=jnp.bfloat16, out_dtype=None):
    """out = [relu](x @ w + b).  x:(M,K), w:(K,N), b:(N,).

    Single full-extent K block (no K padding, no k grid axis / accumulator).
    Grid is (N-tiles, M-tiles) with M innermost so every weight tile is DMA'd
    from HBM exactly once.  tm/tn are adaptive (feedback: tiny tm for the M=2
    head GEMVs, large tm for the huge-M VGG matmuls).
    """
    M, K = x.shape
    K2, N = w.shape
    assert K == K2 and b.shape == (N,)
    out_dtype = out_dtype or compute_dtype

    x = x.astype(compute_dtype)
    w = w.astype(compute_dtype)
    b = b.astype(jnp.float32)

    if M <= 16:
        tm = 16
    elif M <= 4096:
        tm = 256
    else:
        tm = 1024
    Mp = _round_up(M, tm)

    bytes_per = jnp.dtype(compute_dtype).itemsize
    if N <= 512:
        tn = N                                  # single full-extent block
    else:
        tn = 128
        for cand in (256, 512, 1024, 2048, 4096):
            if cand <= N and K * cand * bytes_per * 2 <= 16 * 1024 * 1024:
                tn = cand
    Np = _round_up(N, tn)

    if Mp != M:
        x = jnp.pad(x, ((0, Mp - M), (0, 0)))
    if Np != N:
        w = jnp.pad(w, ((0, 0), (0, Np - N)))
        b = jnp.pad(b, (0, Np - N))
    b2 = b.reshape(1, Np)

    grid = (Np // tn, Mp // tm)                 # weight-tile outer, M-tile inner
    out = pl.pallas_call(
        functools.partial(_matmul_bias_kernel, relu=relu),
        out_shape=jax.ShapeDtypeStruct((Mp, Np), out_dtype),
        grid_spec=pltpu.PrefetchScalarGridSpec(
            num_scalar_prefetch=0,
            grid=grid,
            in_specs=[
                pl.BlockSpec((tm, K), lambda j, i: (i, 0)),
                pl.BlockSpec((K, tn), lambda j, i: (0, j)),
                pl.BlockSpec((1, tn), lambda j, i: (0, j)),
            ],
            out_specs=pl.BlockSpec((tm, tn), lambda j, i: (i, j)),
        ),
        compiler_params=pltpu.CompilerParams(
            dimension_semantics=("parallel", "parallel"),
            vmem_limit_bytes=_VMEM_LIMIT),
    )(x, w, b2)
    if (Mp, Np) != (M, N):
        out = out[:M, :N]
    return out


# ----------------------------------------------------------------------------
# Pallas kernel 2: implicit-GEMM 3x3 stride-1 conv (no materialized im2col)
# ----------------------------------------------------------------------------
def _conv3x3_kernel(x_ref, w_ref, b_ref, o_ref, *, TH, Wpad, Wo, kh, kw, relu):
    # x_ref: (Hpad, Wpad, Cin)  full zero-padded image (bf16), VMEM resident
    # w_ref: (kh*kw, Cin, Cout) tap-major weights (bf16)
    # b_ref: (1, Cout)          f32 bias
    # o_ref: (TH, Wo, Cout)     one output row-chunk
    c = pl.program_id(1)
    cin = x_ref.shape[-1]
    cout = o_ref.shape[-1]
    L = TH * Wpad

    # kh row slabs, flattened along (row, col) -> reused for every dj tap.
    slabs = []
    for di in range(kh):
        s = x_ref[pl.ds(c * TH + di, TH)]              # (TH, Wpad, Cin)
        slabs.append(s.reshape(L, cin))

    acc = jnp.zeros((L, cout), jnp.float32)
    for dj in range(kw):
        z = jnp.zeros((L, cout), jnp.float32)
        for di in range(kh):
            z = z + jnp.dot(slabs[di], w_ref[di * kw + dj],
                            preferred_element_type=jnp.float32)
        if dj == 0:
            acc = acc + z
        else:
            # out[.., w] needs z[.., w+dj]: shift left by dj along the
            # row-major spatial axis; the tail only lands in columns >= Wo
            # which are discarded below.
            acc = acc + jnp.concatenate(
                [z[dj:], jnp.zeros((dj, cout), jnp.float32)], axis=0)

    y = acc.reshape(TH, Wpad, cout)[:, :Wo, :] + b_ref[...].reshape(1, 1, cout)
    if relu:
        y = jnp.maximum(y, 0.0)
    o_ref[...] = y.astype(o_ref.dtype)


def conv2d_3x3_direct(x, wtap, b, *, padding=1, relu=True,
                      compute_dtype=jnp.bfloat16):
    """Implicit-GEMM 3x3 stride-1 conv.  x:(N,H,W,Cin) NHWC,
    wtap:(9,Cin,Cout) tap-major, b:(Cout,)."""
    N, H, W, Cin = x.shape
    ntap, Cin2, Cout = wtap.shape
    kh = kw = 3
    assert ntap == kh * kw and Cin == Cin2
    Ho = H + 2 * padding - kh + 1
    Wo = W + 2 * padding - kw + 1
    n_chunks = -(-Ho // 16)
    TH = -(-Ho // n_chunks)
    Wpad = _round_up(W + 2 * padding, 8)
    Hpad = max(H + 2 * padding, n_chunks * TH + kh - 1)

    xp = jnp.pad(x.astype(compute_dtype),
                 ((0, 0),
                  (padding, Hpad - H - padding),
                  (padding, Wpad - W - padding),
                  (0, 0)))
    b2 = b.reshape(1, Cout).astype(jnp.float32)

    out = pl.pallas_call(
        functools.partial(_conv3x3_kernel, TH=TH, Wpad=Wpad, Wo=Wo,
                          kh=kh, kw=kw, relu=relu),
        out_shape=jax.ShapeDtypeStruct((N, n_chunks * TH, Wo, Cout),
                                       compute_dtype),
        grid_spec=pltpu.PrefetchScalarGridSpec(
            num_scalar_prefetch=0,
            grid=(N, n_chunks),
            in_specs=[
                # full image, constant along the chunk axis -> DMA'd once per image
                pl.BlockSpec((None, Hpad, Wpad, Cin), lambda n, c: (n, 0, 0, 0)),
                # full weight, constant index -> DMA'd once for the whole layer
                pl.BlockSpec((kh * kw, Cin, Cout), lambda n, c: (0, 0, 0)),
                pl.BlockSpec((1, Cout), lambda n, c: (0, 0)),
            ],
            out_specs=pl.BlockSpec((None, TH, Wo, Cout),
                                   lambda n, c: (n, c, 0, 0)),
        ),
        compiler_params=pltpu.CompilerParams(
            dimension_semantics=("parallel", "arbitrary"),
            vmem_limit_bytes=_VMEM_LIMIT),
    )(xp, wtap.astype(compute_dtype), b2)
    return out[:, :Ho]


# ----------------------------------------------------------------------------
# Pallas kernel 3: 2x2 stride-2 max pool, ceil mode (whole image per step)
# ----------------------------------------------------------------------------
def _maxpool_kernel(x_ref, o_ref):
    x = x_ref[...]                                    # (Hp, Wp, C)
    Hp, Wp, C = x.shape
    m = jnp.max(x.reshape(Hp // 2, 2, Wp, C), axis=1)         # row pairs (cheap)
    m = jnp.max(m.reshape(Hp // 2, Wp // 2, 2, C), axis=2)    # col pairs (XLU)
    o_ref[...] = m.astype(o_ref.dtype)


def maxpool2x2_ceil(x):
    """2x2 / stride-2 max pool with ceil_mode=True.  x: (N,H,W,C) NHWC."""
    N, H, W, C = x.shape
    Hp, Wp = _round_up(H, 2), _round_up(W, 2)
    if (Hp, Wp) != (H, W):
        x = jnp.pad(x, ((0, 0), (0, Hp - H), (0, Wp - W), (0, 0)),
                    constant_values=-jnp.inf)
    H2, W2 = Hp // 2, Wp // 2
    return pl.pallas_call(
        _maxpool_kernel,
        out_shape=jax.ShapeDtypeStruct((N, H2, W2, C), x.dtype),
        grid_spec=pltpu.PrefetchScalarGridSpec(
            num_scalar_prefetch=0,
            grid=(N,),
            in_specs=[pl.BlockSpec((None, Hp, Wp, C), lambda n: (n, 0, 0, 0))],
            out_specs=pl.BlockSpec((None, H2, W2, C), lambda n: (n, 0, 0, 0)),
        ),
        compiler_params=pltpu.CompilerParams(
            dimension_semantics=("parallel",),
            vmem_limit_bytes=_VMEM_LIMIT),
    )(x)


# ----------------------------------------------------------------------------
# Conv wrappers on top of the kernels
# ----------------------------------------------------------------------------
def conv2d_im2col(x, wmat, b, *, kh, kw, padding=0, relu=False,
                  compute_dtype=jnp.bfloat16, out_dtype=None):
    """Stride-1 conv via materialized im2col + the Pallas matmul.
    Used for small-Cin convs (where per-tap implicit GEMM would under-fill the
    MXU contraction dim), conv6 (7x7 on a 7x7 map), the 1x1 convs."""
    N, H, W, Cin = x.shape
    Cout = wmat.shape[1]
    x = x.astype(compute_dtype)
    if padding:
        x = jnp.pad(x, ((0, 0), (padding, padding), (padding, padding), (0, 0)))
    Hp, Wp = x.shape[1], x.shape[2]
    Ho, Wo = Hp - kh + 1, Wp - kw + 1
    if kh == 1 and kw == 1:
        patches = x.reshape(N * Ho * Wo, Cin)
    else:
        # feature order (di, dj, cin), cin fastest -- matches the weight packing
        cols = [x[:, i:i + Ho, j:j + Wo, :] for i in range(kh) for j in range(kw)]
        patches = jnp.concatenate(cols, axis=-1).reshape(N * Ho * Wo, kh * kw * Cin)
    out = matmul_bias(patches, wmat, b, relu=relu,
                      compute_dtype=compute_dtype, out_dtype=out_dtype)
    return out.reshape(N, Ho, Wo, Cout)


def conv_transpose_up_final(x, w_up_mat, img_h, img_w):
    """ConvTranspose2d(C, C, k=64, s=32, bias=False) on a 1x1 spatial input,
    followed by the FCN32 crop [:, 31:31+H, 31:31+W, :].  Kept in f32."""
    N, Hs, Ws, C = x.shape
    # TODO(synk): only the 1x1-spatial-input case (what this architecture
    # produces for small images) is implemented; general strided transposed
    # conv is not required here.
    assert Hs == 1 and Ws == 1
    k = int(round((w_up_mat.shape[1] // C) ** 0.5))
    y = matmul_bias(x.reshape(N, C).astype(jnp.float32), w_up_mat,
                    jnp.zeros((w_up_mat.shape[1],), jnp.float32),
                    relu=False, compute_dtype=jnp.float32, out_dtype=jnp.float32)
    y = y.reshape(N, k, k, C)
    return y[:, 31:31 + img_h, 31:31 + img_w, :]


# ----------------------------------------------------------------------------
# FCN32 model definition (VGG16 features + fc-as-conv head + 32x upsample)
# ----------------------------------------------------------------------------
VGG_CFG = [
    ("C", 3, 64, 3, 100), ("C", 64, 64, 3, 1), ("M",),
    ("C", 64, 128, 3, 1), ("C", 128, 128, 3, 1), ("M",),
    ("C", 128, 256, 3, 1), ("C", 256, 256, 3, 1), ("C", 256, 256, 3, 1), ("M",),
    ("C", 256, 512, 3, 1), ("C", 512, 512, 3, 1), ("C", 512, 512, 3, 1), ("M",),
    ("C", 512, 512, 3, 1), ("C", 512, 512, 3, 1), ("C", 512, 512, 3, 1), ("M",),
]


def _use_direct_conv(cin, k):
    # implicit GEMM only where each per-tap matmul still fills the MXU K dim
    return k == 3 and cin >= 128


def upsampling_init_weight(in_c, out_c, k):
    """Standard FCN bilinear-interpolation init for ConvTranspose2d weights."""
    factor = (k + 1) // 2
    center = factor - 1 if k % 2 == 1 else factor - 0.5
    r = np.arange(k, dtype=np.float64)
    f1 = 1.0 - np.abs(r - center) / factor
    filt = (f1[:, None] * f1[None, :]).astype(np.float32)
    w = np.zeros((in_c, out_c, k, k), dtype=np.float32)
    d = np.arange(min(in_c, out_c))
    w[d, d] = filt
    return jnp.asarray(w)


def init_params(key, num_classes=21):
    """Deterministic synthetic init (same shapes as the PyTorch module)."""
    n_conv = sum(1 for s in VGG_CFG if s[0] == "C")
    keys = jax.random.split(key, 2 * n_conv + 8)
    ki = 0
    vgg = []
    for spec in VGG_CFG:
        if spec[0] == "M":
            continue
        _, cin, cout, k, _pad = spec
        fan_in = cin * k * k
        w = jax.random.normal(keys[ki], (cout, cin, k, k), jnp.float32) * np.sqrt(2.0 / fan_in)
        b = 0.01 * jax.random.normal(keys[ki + 1], (cout,), jnp.float32)
        ki += 2
        vgg.append((w, b))
    conv6_w = jax.random.normal(keys[ki], (4096, 512, 7, 7), jnp.float32) * np.sqrt(2.0 / (512 * 49)); ki += 1
    conv6_b = 0.01 * jax.random.normal(keys[ki], (4096,), jnp.float32); ki += 1
    conv7_w = jax.random.normal(keys[ki], (4096, 4096, 1, 1), jnp.float32) * np.sqrt(2.0 / 4096); ki += 1
    conv7_b = 0.01 * jax.random.normal(keys[ki], (4096,), jnp.float32); ki += 1
    # reference module does self.output[6].weight.data.fill_(0)
    out_w = jnp.zeros((num_classes, 4096, 1, 1), jnp.float32)
    out_b = 0.1 * jax.random.normal(keys[ki], (num_classes,), jnp.float32); ki += 1
    up_w = upsampling_init_weight(num_classes, num_classes, 64)   # frozen
    return dict(vgg=vgg, conv6=(conv6_w, conv6_b), conv7=(conv7_w, conv7_b),
                out=(out_w, out_b), up=up_w)


def preprocess_params(params, num_classes=21):
    """One-time packing of PyTorch-layout weights into kernel-ready layouts:
    bf16 matmul/tap matrices, f32 biases.  Score conv + upsample stay f32."""
    bf = jnp.bfloat16
    vgg = []
    for (w, bias), spec in zip(params["vgg"], [s for s in VGG_CFG if s[0] == "C"]):
        cout, cin, kh, kw = w.shape
        if _use_direct_conv(cin, kh):
            packed = jnp.transpose(w, (2, 3, 1, 0)).reshape(kh * kw, cin, cout).astype(bf)
        else:
            packed = jnp.transpose(w, (2, 3, 1, 0)).reshape(kh * kw * cin, cout).astype(bf)
        vgg.append((packed, bias.astype(jnp.float32)))
    w6, b6 = params["conv6"]
    w6m = jnp.transpose(w6, (2, 3, 1, 0)).reshape(7 * 7 * 512, 4096).astype(bf)
    w7, b7 = params["conv7"]
    w7m = jnp.transpose(w7, (2, 3, 1, 0)).reshape(4096, 4096).astype(bf)
    wo, bo = params["out"]
    wom = jnp.transpose(wo, (2, 3, 1, 0)).reshape(4096, num_classes).astype(jnp.float32)
    up = params["up"]
    upm = jnp.transpose(up, (0, 2, 3, 1)).reshape(num_classes, 64 * 64 * num_classes).astype(jnp.float32)
    return dict(vgg=vgg, conv6=(w6m, b6.astype(jnp.float32)),
                conv7=(w7m, b7.astype(jnp.float32)),
                out=(wom, bo.astype(jnp.float32)), up=upm)


@jax.jit
def fcn32_forward(prepped, x_nchw):
    """x_nchw: (N, 3, H, W) float32 -> (N, num_classes, H, W) float32."""
    img_h, img_w = x_nchw.shape[2], x_nchw.shape[3]
    x = jnp.transpose(x_nchw, (0, 2, 3, 1)).astype(jnp.bfloat16)   # NCHW -> NHWC
    ci = 0
    for spec in VGG_CFG:
        if spec[0] == "M":
            x = maxpool2x2_ceil(x)                                 # ceil_mode=True
        else:
            _, cin, cout, k, pad = spec
            wp, bp = prepped["vgg"][ci]; ci += 1
            if _use_direct_conv(cin, k):
                x = conv2d_3x3_direct(x, wp, bp, padding=pad, relu=True)
            else:
                x = conv2d_im2col(x, wp, bp, kh=k, kw=k, padding=pad, relu=True)
    w6, b6 = prepped["conv6"]
    x = conv2d_im2col(x, w6, b6, kh=7, kw=7, padding=0, relu=True)  # conv6+ReLU; Dropout==identity (inference)
    w7, b7 = prepped["conv7"]
    x = conv2d_im2col(x, w7, b7, kh=1, kw=1, padding=0, relu=True)  # conv7+ReLU; Dropout==identity
    wo, bo = prepped["out"]
    x = conv2d_im2col(x.astype(jnp.float32), wo, bo, kh=1, kw=1, padding=0,
                      relu=False, compute_dtype=jnp.float32, out_dtype=jnp.float32)
    x = conv_transpose_up_final(x, prepped["up"], img_h, img_w)
    return jnp.transpose(x, (0, 3, 1, 2)).astype(jnp.float32)       # NHWC -> NCHW


# ----------------------------------------------------------------------------
# Self tests (small shapes): kernels vs. pure-JAX references
# ----------------------------------------------------------------------------
def _selftest():
    key = jax.random.PRNGKey(1)
    kx, kw_, kb = jax.random.split(key, 3)

    # --- 3x3 convs (both paths) vs. lax.conv reference ---
    N, H, W, Cin, Cout = 1, 37, 21, 16, 32
    x = jax.random.normal(kx, (N, H, W, Cin), jnp.float32)
    w = jax.random.normal(kw_, (Cout, Cin, 3, 3), jnp.float32) * 0.1
    b = jax.random.normal(kb, (Cout,), jnp.float32)
    x32 = x.astype(jnp.bfloat16).astype(jnp.float32)
    w32 = w.astype(jnp.bfloat16).astype(jnp.float32)
    ref = lax.conv_general_dilated(
        x32, w32, (1, 1), ((1, 1), (1, 1)),
        dimension_numbers=("NHWC", "OIHW", "NHWC")) + b[None, None, None, :]
    ref = np.asarray(jnp.maximum(ref, 0.0))

    wtap = jnp.transpose(w, (2, 3, 1, 0)).reshape(9, Cin, Cout)
    got = conv2d_3x3_direct(x, wtap, b, padding=1, relu=True).astype(jnp.float32)
    np.testing.assert_allclose(np.asarray(got), ref, rtol=5e-2, atol=5e-2)

    wmat = jnp.transpose(w, (2, 3, 1, 0)).reshape(9 * Cin, Cout)
    got2 = conv2d_im2col(x, wmat, b, kh=3, kw=3, padding=1, relu=True).astype(jnp.float32)
    np.testing.assert_allclose(np.asarray(got2), ref, rtol=5e-2, atol=5e-2)

    # --- ceil-mode 2x2 max pool (odd H and W) ---
    xp = jax.random.normal(kx, (2, 7, 9, 64), jnp.float32).astype(jnp.bfloat16)
    got3 = maxpool2x2_ceil(xp).astype(jnp.float32)
    padded = jnp.pad(xp.astype(jnp.float32), ((0, 0), (0, 1), (0, 1), (0, 0)),
                     constant_values=-jnp.inf)
    ref3 = jnp.max(padded.reshape(2, 4, 2, 5, 2, 64), axis=(2, 4))
    np.testing.assert_allclose(np.asarray(got3), np.asarray(ref3), rtol=0, atol=0)


# ----------------------------------------------------------------------------
if __name__ == "__main__":
    _selftest()

    num_classes = 21
    key = jax.random.PRNGKey(0)
    k_x, k_p = jax.random.split(key)
    x = jax.random.normal(k_x, (2, 3, 16, 16), dtype=jnp.float32)   # NCHW like PyTorch
    params = init_params(k_p, num_classes=num_classes)
    prepped = preprocess_params(params, num_classes=num_classes)

    out = fcn32_forward(prepped, x)
    out = jax.block_until_ready(out)
    assert out.shape == (2, num_classes, 16, 16), out.shape

    # Sanity check: because the final score conv weight is zero (as in the
    # reference module), the output must equal bias[c] * bilinear_filter
    # cropped at [31:31+H, 31:31+W] (this part of the net runs in f32).
    k = 64
    factor = (k + 1) // 2
    center = factor - 0.5
    r = np.arange(k, dtype=np.float64)
    f1 = 1.0 - np.abs(r - center) / factor
    filt = (f1[:, None] * f1[None, :]).astype(np.float32)
    bias = np.asarray(params["out"][1])
    expected = bias[None, :, None, None] * filt[31:31 + 16, 31:31 + 16][None, None, :, :]
    np.testing.assert_allclose(np.asarray(out),
                               np.broadcast_to(expected, out.shape),
                               rtol=1e-4, atol=1e-5)
    print("KERNEL_OK")
</pallas_src>

<mosaic_0001>
module attributes {stable_mosaic.version = 11 : i64} {
  func.func @_conv3x3_kernel(%arg0: i32, %arg1: i32, %arg2: memref<1x41x24x16xbf16, #tpu.memory_space<vmem>>, %arg3: memref<9x16x32xbf16, #tpu.memory_space<vmem>>, %arg4: memref<1x32xf32, #tpu.memory_space<vmem>>, %arg5: memref<1x13x21x32xbf16, #tpu.memory_space<vmem>>) attributes {dimension_semantics = [#tpu.dimension_semantics<parallel>, #tpu.dimension_semantics<arbitrary>], iteration_bounds = array<i64: 1, 3>, scalar_prefetch = 0 : i64, scratch_operands = 0 : i64, tpu.core_type = #tpu.core_type<tc>, window_params = [{transform_indices = @transform_0, window_bounds = array<i64: 1, 41, 24, 16>}, {pipeline_mode = #tpu.pipeline_mode<synchronous>, transform_indices = @transform_1, window_bounds = array<i64: 9, 16, 32>}, {pipeline_mode = #tpu.pipeline_mode<synchronous>, transform_indices = @transform_2, window_bounds = array<i64: 1, 32>}, {transform_indices = @transform_3, window_bounds = array<i64: 1, 13, 21, 32>}]} {
    %c13_i32 = arith.constant 13 : i32
    %0 = arith.muli %arg1, %c13_i32 : i32
    %c0_i32 = arith.constant 0 : i32
    %1 = arith.addi %0, %c0_i32 : i32
    %c0 = arith.constant 0 : index
    %2 = arith.index_cast %1 : i32 to index
    %c0_0 = arith.constant 0 : index
    %c0_1 = arith.constant 0 : index
    %3 = vector.load %arg2[%c0, %2, %c0_0, %c0_1] : memref<1x41x24x16xbf16, #tpu.memory_space<vmem>>, vector<1x13x24x16xbf16>
    %4 = vector.shape_cast %3 : vector<1x13x24x16xbf16> to vector<13x24x16xbf16>
    %5 = vector.shape_cast %4 : vector<13x24x16xbf16> to vector<312x16xbf16>
    %c13_i32_2 = arith.constant 13 : i32
    %6 = arith.muli %arg1, %c13_i32_2 : i32
    %c1_i32 = arith.constant 1 : i32
    %7 = arith.addi %6, %c1_i32 : i32
    %c0_3 = arith.constant 0 : index
    %8 = arith.index_cast %7 : i32 to index
    %c0_4 = arith.constant 0 : index
    %c0_5 = arith.constant 0 : index
    %9 = vector.load %arg2[%c0_3, %8, %c0_4, %c0_5] : memref<1x41x24x16xbf16, #tpu.memory_space<vmem>>, vector<1x13x24x16xbf16>
    %10 = vector.shape_cast %9 : vector<1x13x24x16xbf16> to vector<13x24x16xbf16>
    %11 = vector.shape_cast %10 : vector<13x24x16xbf16> to vector<312x16xbf16>
    %c13_i32_6 = arith.constant 13 : i32
    %12 = arith.muli %arg1, %c13_i32_6 : i32
    %c2_i32 = arith.constant 2 : i32
    %13 = arith.addi %12, %c2_i32 : i32
    %c0_7 = arith.constant 0 : index
    %14 = arith.index_cast %13 : i32 to index
    %c0_8 = arith.constant 0 : index
    %c0_9 = arith.constant 0 : index
    %15 = vector.load %arg2[%c0_7, %14, %c0_8, %c0_9] : memref<1x41x24x16xbf16, #tpu.memory_space<vmem>>, vector<1x13x24x16xbf16>
    %16 = vector.shape_cast %15 : vector<1x13x24x16xbf16> to vector<13x24x16xbf16>
    %17 = vector.shape_cast %16 : vector<13x24x16xbf16> to vector<312x16xbf16>
    %cst = arith.constant 0.000000e+00 : f32
    %18 = vector.broadcast %cst : f32 to vector<312x32xf32>
    %cst_10 = arith.constant 0.000000e+00 : f32
    %19 = vector.broadcast %cst_10 : f32 to vector<312x32xf32>
    %c0_11 = arith.constant 0 : index
    %c0_12 = arith.constant 0 : index
    %c0_13 = arith.constant 0 : index
    %20 = vector.load %arg3[%c0_11, %c0_12, %c0_13] : memref<9x16x32xbf16, #tpu.memory_space<vmem>>, vector<1x16x32xbf16>
    %21 = vector.shape_cast %20 : vector<1x16x32xbf16> to vector<16x32xbf16>
    %cst_14 = arith.constant dense<0.000000e+00> : vector<312x32xf32>
    %22 = tpu.matmul %5, %21, %cst_14 {dimension_numbers = #tpu.dot_dimension_numbers<[1], [0], [0], [1], [0, 0, 1, 1], [], []>} : vector<312x16xbf16>, vector<16x32xbf16>, vector<312x32xf32> -> vector<312x32xf32>
    %23 = arith.addf %19, %22 : vector<312x32xf32>
    %c3 = arith.constant 3 : index
    %c0_15 = arith.constant 0 : index
    %c0_16 = arith.constant 0 : index
    %24 = vector.load %arg3[%c3, %c0_15, %c0_16] : memref<9x16x32xbf16, #tpu.memory_space<vmem>>, vector<1x16x32xbf16>
    %25 = vector.shape_cast %24 : vector<1x16x32xbf16> to vector<16x32xbf16>
    %cst_17 = arith.constant dense<0.000000e+00> : vector<312x32xf32>
    %26 = tpu.matmul %11, %25, %cst_17 {dimension_numbers = #tpu.dot_dimension_numbers<[1], [0], [0], [1], [0, 0, 1, 1], [], []>} : vector<312x16xbf16>, vector<16x32xbf16>, vector<312x32xf32> -> vector<312x32xf32>
    %27 = arith.addf %23, %26 : vector<312x32xf32>
    %c6 = arith.constant 6 : index
    %c0_18 = arith.constant 0 : index
    %c0_19 = arith.constant 0 : index
    %28 = vector.load %arg3[%c6, %c0_18, %c0_19] : memref<9x16x32xbf16, #tpu.memory_space<vmem>>, vector<1x16x32xbf16>
    %29 = vector.shape_cast %28 : vector<1x16x32xbf16> to vector<16x32xbf16>
    %cst_20 = arith.constant dense<0.000000e+00> : vector<312x32xf32>
    %30 = tpu.matmul %17, %29, %cst_20 {dimension_numbers = #tpu.dot_dimension_numbers<[1], [0], [0], [1], [0, 0, 1, 1], [], []>} : vector<312x16xbf16>, vector<16x32xbf16>, vector<312x32xf32> -> vector<312x32xf32>
    %31 = arith.addf %27, %30 : vector<312x32xf32>
    %32 = arith.addf %18, %31 : vector<312x32xf32>
    %cst_21 = arith.constant 0.000000e+00 : f32
    %33 = vector.broadcast %cst_21 : f32 to vector<312x32xf32>
    %c1 = arith.constant 1 : index
    %c0_22 = arith.constant 0 : index
    %c0_23 = arith.constant 0 : index
    %34 = vector.load %arg3[%c1, %c0_22, %c0_23] : memref<9x16x32xbf16, #tpu.memory_space<vmem>>, vector<1x16x32xbf16>
    %35 = vector.shape_cast %34 : vector<1x16x32xbf16> to vector<16x32xbf16>
    %cst_24 = arith.constant dense<0.000000e+00> : vector<312x32xf32>
    %36 = tpu.matmul %5, %35, %cst_24 {dimension_numbers = #tpu.dot_dimension_numbers<[1], [0], [0], [1], [0, 0, 1, 1], [], []>} : vector<312x16xbf16>, vector<16x32xbf16>, vector<312x32xf32> -> vector<312x32xf32>
    %37 = arith.addf %33, %36 : vector<312x32xf32>
    %c4 = arith.constant 4 : index
    %c0_25 = arith.constant 0 : index
    %c0_26 = arith.constant 0 : index
    %38 = vector.load %arg3[%c4, %c0_25, %c0_26] : memref<9x16x32xbf16, #tpu.memory_space<vmem>>, vector<1x16x32xbf16>
    %39 = vector.shape_cast %38 : vector<1x16x32xbf16> to vector<16x32xbf16>
    %cst_27 = arith.constant dense<0.000000e+00> : vector<312x32xf32>
    %40 = tpu.matmul %11, %39, %cst_27 {dimension_numbers = #tpu.dot_dimension_numbers<[1], [0], [0], [1], [0, 0, 1, 1], [], []>} : vector<312x16xbf16>, vector<16x32xbf16>, vector<312x32xf32> -> vector<312x32xf32>
    %41 = arith.addf %37, %40 : vector<312x32xf32>
    %c7 = arith.constant 7 : index
    %c0_28 = arith.constant 0 : index
    %c0_29 = arith.constant 0 : index
    %42 = vector.load %arg3[%c7, %c0_28, %c0_29] : memref<9x16x32xbf16, #tpu.memory_space<vmem>>, vector<1x16x32xbf16>
    %43 = vector.shape_cast %42 : vector<1x16x32xbf16> to vector<16x32xbf16>
    %cst_30 = arith.constant dense<0.000000e+00> : vector<312x32xf32>
    %44 = tpu.matmul %17, %43, %cst_30 {dimension_numbers = #tpu.dot_dimension_numbers<[1], [0], [0], [1], [0, 0, 1, 1], [], []>} : vector<312x16xbf16>, vector<16x32xbf16>, vector<312x32xf32> -> vector<312x32xf32>
    %45 = arith.addf %41, %44 : vector<312x32xf32>
    %46 = vector.extract_strided_slice %45 {offsets = [1, 0], sizes = [311, 32], strides = [1, 1]} : vector<312x32xf32> to vector<311x32xf32>
    %cst_31 = arith.constant 0.000000e+00 : f32
    %47 = vector.broadcast %cst_31 : f32 to vector<1x32xf32>
    %48 = tpu.concatenate %46, %47 in 0 : vector<311x32xf32>, vector<1x32xf32> -> vector<312x32xf32>
    %49 = arith.addf %32, %48 : vector<312x32xf32>
    %cst_32 = arith.constant 0.000000e+00 : f32
    %50 = vector.broadcast %cst_32 : f32 to vector<312x32xf32>
    %c2 = arith.constant 2 : index
    %c0_33 = arith.constant 0 : index
    %c0_34 = arith.constant 0 : index
    %51 = vector.load %arg3[%c2, %c0_33, %c0_34] : memref<9x16x32xbf16, #tpu.memory_space<vmem>>, vector<1x16x32xbf16>
    %52 = vector.shape_cast %51 : vector<1x16x32xbf16> to vector<16x32xbf16>
    %cst_35 = arith.constant dense<0.000000e+00> : vector<312x32xf32>
    %53 = tpu.matmul %5, %52, %cst_35 {dimension_numbers = #tpu.dot_dimension_numbers<[1], [0], [0], [1], [0, 0, 1, 1], [], []>} : vector<312x16xbf16>, vector<16x32xbf16>, vector<312x32xf32> -> vector<312x32xf32>
    %54 = arith.addf %50, %53 : vector<312x32xf32>
    %c5 = arith.constant 5 : index
    %c0_36 = arith.constant 0 : index
    %c0_37 = arith.constant 0 : index
    %55 = vector.load %arg3[%c5, %c0_36, %c0_37] : memref<9x16x32xbf16, #tpu.memory_space<vmem>>, vector<1x16x32xbf16>
    %56 = vector.shape_cast %55 : vector<1x16x32xbf16> to vector<16x32xbf16>
    %cst_38 = arith.constant dense<0.000000e+00> : vector<312x32xf32>
    %57 = tpu.matmul %11, %56, %cst_38 {dimension_numbers = #tpu.dot_dimension_numbers<[1], [0], [0], [1], [0, 0, 1, 1], [], []>} : vector<312x16xbf16>, vector<16x32xbf16>, vector<312x32xf32> -> vector<312x32xf32>
    %58 = arith.addf %54, %57 : vector<312x32xf32>
    %c8 = arith.constant 8 : index
    %c0_39 = arith.constant 0 : index
    %c0_40 = arith.constant 0 : index
    %59 = vector.load %arg3[%c8, %c0_39, %c0_40] : memref<9x16x32xbf16, #tpu.memory_space<vmem>>, vector<1x16x32xbf16>
    %60 = vector.shape_cast %59 : vector<1x16x32xbf16> to vector<16x32xbf16>
    %cst_41 = arith.constant dense<0.000000e+00> : vector<312x32xf32>
    %61 = tpu.matmul %17, %60, %cst_41 {dimension_numbers = #tpu.dot_dimension_numbers<[1], [0], [0], [1], [0, 0, 1, 1], [], []>} : vector<312x16xbf16>, vector<16x32xbf16>, vector<312x32xf32> -> vector<312x32xf32>
    %62 = arith.addf %58, %61 : vector<312x32xf32>
    %63 = vector.extract_strided_slice %62 {offsets = [2, 0], sizes = [310, 32], strides = [1, 1]} : vector<312x32xf32> to vector<310x32xf32>
    %cst_42 = arith.constant 0.000000e+00 : f32
    %64 = vector.broadcast %cst_42 : f32 to vector<2x32xf32>
    %65 = tpu.concatenate %63, %64 in 0 : vector<310x32xf32>, vector<2x32xf32> -> vector<312x32xf32>
    %66 = arith.addf %49, %65 : vector<312x32xf32>
    %67 = vector.shape_cast %66 : vector<312x32xf32> to vector<13x24x32xf32>
    %68 = vector.extract_strided_slice %67 {offsets = [0, 0, 0], sizes = [13, 21, 32], strides = [1, 1, 1]} : vector<13x24x32xf32> to vector<13x21x32xf32>
    %c0_43 = arith.constant 0 : index
    %c0_44 = arith.constant 0 : index
    %69 = vector.load %arg4[%c0_43, %c0_44] : memref<1x32xf32, #tpu.memory_space<vmem>>, vector<1x32xf32>
    %70 = vector.shape_cast %69 : vector<1x32xf32> to vector<1x1x32xf32>
    %71 = vector.broadcast %70 : vector<1x1x32xf32> to vector<13x21x32xf32>
    %72 = arith.addf %68, %71 : vector<13x21x32xf32>
    %cst_45 = arith.constant 0.000000e+00 : f32
    %73 = vector.broadcast %cst_45 : f32 to vector<13x21x32xf32>
    %74 = arith.maximumf %72, %73 : vector<13x21x32xf32>
    %75 = arith.truncf %74 : vector<13x21x32xf32> to vector<13x21x32xbf16>
    %c0_46 = arith.constant 0 : index
    %c0_47 = arith.constant 0 : index
    %c0_48 = arith.constant 0 : index
    %c0_49 = arith.constant 0 : index
    %76 = vector.load %arg5[%c0_46, %c0_47, %c0_48, %c0_49] : memref<1x13x21x32xbf16, #tpu.memory_space<vmem>>, vector<1x13x21x32xbf16>
    %77 = vector.shape_cast %76 : vector<1x13x21x32xbf16> to vector<13x21x32xbf16>
    %78 = vector.shape_cast %75 : vector<13x21x32xbf16> to vector<1x13x21x32xbf16>
    tpu.vector_store %arg5[%c0_46, %c0_47, %c0_48, %c0_49], %78 {strides = array<i32>} : memref<1x13x21x32xbf16, #tpu.memory_space<vmem>>, vector<1x13x21x32xbf16>,
    return
  }
  func.func @transform_0(%arg0: i32, %arg1: i32) -> (i32, i32, i32, i32) {
    %c0_i32 = arith.constant 0 : i32
    %c0_i32_0 = arith.constant 0 : i32
    %c0_i32_1 = arith.constant 0 : i32
    %c0_i32_2 = arith.constant 0 : i32
    return %arg0, %c0_i32, %c0_i32_0, %c0_i32_1 : i32, i32, i32, i32
  }
  func.func @transform_1(%arg0: i32, %arg1: i32) -> (i32, i32, i32) {
    %c0_i32 = arith.constant 0 : i32
    %c0_i32_0 = arith.constant 0 : i32
    %c0_i32_1 = arith.constant 0 : i32
    %c0_i32_2 = arith.constant 0 : i32
    return %c0_i32, %c0_i32_0, %c0_i32_1 : i32, i32, i32
  }
  func.func @transform_2(%arg0: i32, %arg1: i32) -> (i32, i32) {
    %c0_i32 = arith.constant 0 : i32
    %c0_i32_0 = arith.constant 0 : i32
    %c0_i32_1 = arith.constant 0 : i32
    return %c0_i32, %c0_i32_0 : i32, i32
  }
  func.func @transform_3(%arg0: i32, %arg1: i32) -> (i32, i32, i32, i32) {
    %c0_i32 = arith.constant 0 : i32
    %c0_i32_0 = arith.constant 0 : i32
    %c0_i32_1 = arith.constant 0 : i32
    return %arg0, %arg1, %c0_i32, %c0_i32_0 : i32, i32, i32, i32
  }
}

</mosaic_0001>

<llo_original>
// kernel: tpu_custom_call.1
$region0: #{tpu_custom_call.1}
  #allocation0 [shape = 'u32[]', space=smem, size = 0x4, offset = 0x4, fixed_abs, tag = 'smem constant byte address 0x4 - core index']
  #allocation1 [shape = 'u32[144,128]{1,0:T(1,128)}', space=vmem, size = 0x12000, scoped, tag = 'internal scratch']
  %s0 = inlined_call_operand.vmem [shape: bf16[1,41,24,16], index: 0, kind: input, shape index: {}]
  %s1 = inlined_call_operand.vmem [shape: bf16[9,16,32], index: 1, kind: input, shape index: {}]
  %s2 = inlined_call_operand.vmem [shape: f32[1,32], index: 2, kind: input, shape index: {}]
  %s3 = inlined_call_operand.vmem [shape: bf16[1,39,21,32], index: 3, kind: output, shape index: {}]
  %s4 = sld [smem:[#allocation0]]
  $region45: #{tpu_custom_call.1} parent=0
    _
  %s6 = ssub.s32 1, %s4
  %s7 = scalar_select 0, %s6, %s4
  loop: start=0, step=1, limit=5
  $region2: #{tpu_custom_call.1} parent=0 // loop_pre_header
    _
  $region3: #{tpu_custom_call.1} parent=0 // loop_header
    %s9 = sphi 0, %s13
    %p10 = scmp.ge.s32.totalorder %s9, 5
    %s16 = sphi 0, %s28
    %s17 = sphi 0, %s24
    %s18 = sphi 0, %s16
    %s19 = sphi 0, %s17
    %s20 = sphi 0, %s18
    %s21 = sphi 0, %s19
    %s31 = sphi 0, %s33
    %s34 = sphi 0, %s31
    %s35 = sphi 0, %s34
    %s51 = sphi 0, %s35
    %s55 = sphi 0, %s55
    %s57 = sphi 0, %s55
    %s58 = sphi 0, %s57
    %s72 = sphi 0, %s58
    %s76 = sphi 0, %s76
    %s78 = sphi 0, %s76
    %s79 = sphi 0, %s78
    %s93 = sphi 0, %s79
    %s101 = sphi 0, %s103
    %s104 = sphi 0, %s101
    %s105 = sphi 0, %s104
    %s121 = sphi 0, %s105
  $region4: #{tpu_custom_call.1} parent=0 // loop_header_branch
    %12 = sbr.rel (%p10) target = $region8
  $region5: #{tpu_custom_call.1} parent=0 // loop_body
    %s14 = ssub.s32 %s9, 1
    %s15 = ssub.s32 %s9, 2
    %s22 = sadd.s32 1, %s17
    %p23 = scmp.ge.s32.totalorder %s22, 3
    %s24 = scalar_select %p23, 0, %s22
    %s25 = sadd.s32 1, %s16
    %s26 = scalar_select %p23, %s25, %s16
    %p27 = scmp.ge.s32.totalorder %s26, 1
    %s28 = scalar_select %p27, 0, %s26
    %s29 = ssub.s32 %s16, %s28
    %p30 = scmp.eq.s32.totalorder %s29, 0
    %s32 = sadd.s32 %s31, 1
    %s33 = scalar_select %p30, %s31, %s32
    %p36 = pneg %p30
    %p37 = scmp.eq.s32.totalorder %s9, 2
    %p38 = por %p36, %p37
    %p39 = scmp.ne.s32.totalorder %s31, %s34
    %p40 = scmp.eq.s32.totalorder %s9, 0
    %p41 = por %p39, %p40
    %p42 = scmp.ne.s32.totalorder %s31, %s34
    %p43 = scmp.eq.s32.totalorder %s14, 2
    %p44 = por %p42, %p43
    %p45 = scmp.ne.s32.totalorder %s34, %s35
    %p46 = scmp.eq.s32.totalorder %s14, 0
    %p47 = por %p45, %p46
    %p48 = scmp.ne.s32.totalorder %s34, %s35
    %p49 = scmp.eq.s32.totalorder %s15, 2
    %p50 = por %p48, %p49
    %p52 = scmp.ne.s32.totalorder %s35, %s51
    %p53 = scmp.eq.s32.totalorder %s15, 0
    %p54 = por %p52, %p53
    %s56 = sadd.s32 %s55, 1
    %p59 = scmp.eq.s32.totalorder %s9, 2
    %p60 = scmp.ne.s32.totalorder %s55, %s57
    %p61 = scmp.eq.s32.totalorder %s9, 0
    %p62 = por %p60, %p61
    %p63 = scmp.ne.s32.totalorder %s55, %s57
    %p64 = scmp.eq.s32.totalorder %s14, 2
    %p65 = por %p63, %p64
    %p66 = scmp.ne.s32.totalorder %s57, %s58
    %p67 = scmp.eq.s32.totalorder %s14, 0
    %p68 = por %p66, %p67
    %p69 = scmp.ne.s32.totalorder %s57, %s58
    %p70 = scmp.eq.s32.totalorder %s15, 2
    %p71 = por %p69, %p70
    %p73 = scmp.ne.s32.totalorder %s58, %s72
    %p74 = scmp.eq.s32.totalorder %s15, 0
    %p75 = por %p73, %p74
    %s77 = sadd.s32 %s76, 1
    %p80 = scmp.eq.s32.totalorder %s9, 2
    %p81 = scmp.ne.s32.totalorder %s76, %s78
    %p82 = scmp.eq.s32.totalorder %s9, 0
    %p83 = por %p81, %p82
    %p84 = scmp.ne.s32.totalorder %s76, %s78
    %p85 = scmp.eq.s32.totalorder %s14, 2
    %p86 = por %p84, %p85
    %p87 = scmp.ne.s32.totalorder %s78, %s79
    %p88 = scmp.eq.s32.totalorder %s14, 0
    %p89 = por %p87, %p88
    %p90 = scmp.ne.s32.totalorder %s78, %s79
    %p91 = scmp.eq.s32.totalorder %s15, 2
    %p92 = por %p90, %p91
    %p94 = scmp.ne.s32.totalorder %s79, %s93
    %p95 = scmp.eq.s32.totalorder %s15, 0
    %p96 = por %p94, %p95
    %s97 = ssub.s32 %s16, %s28
    %s98 = ssub.s32 %s17, %s24
    %s99 = sor.u32 %s97, %s98
    %p100 = scmp.eq.s32.totalorder %s99, 0
    %s102 = sadd.s32 %s101, 1
    %s103 = scalar_select %p100, %s101, %s102
    %p106 = pneg %p100
    %p107 = scmp.eq.s32.totalorder %s9, 2
    %p108 = por %p106, %p107
    %p109 = scmp.ne.s32.totalorder %s101, %s104
    %p110 = scmp.eq.s32.totalorder %s9, 0
    %p111 = por %p109, %p110
    %p112 = scmp.ne.s32.totalorder %s101, %s104
    %p113 = scmp.eq.s32.totalorder %s14, 2
    %p114 = por %p112, %p113
    %p115 = scmp.ne.s32.totalorder %s104, %s105
    %p116 = scmp.eq.s32.totalorder %s14, 0
    %p117 = por %p115, %p116
    %p118 = scmp.ne.s32.totalorder %s104, %s105
    %p119 = scmp.eq.s32.totalorder %s15, 2
    %p120 = por %p118, %p119
    %p122 = scmp.ne.s32.totalorder %s105, %s121
    %p123 = scmp.eq.s32.totalorder %s15, 0
    %p124 = por %p122, %p123
    %p125 = scmp.le.s32.totalorder 1, %s9
    %p126 = scmp.lt.s32.totalorder %s9, 4
    %p127 = pnand %p125, %p126
    %p128 = pneg %p127
    // Predicated region
    $region9: #{tpu_custom_call.1} parent=5 // pred_check
      _
    $region10: #{tpu_custom_call.1} parent=5 // pred_check_branch
      %130 = sbr.rel (%p127) target = $region12
    $region11: #{tpu_custom_call.1} parent=5 // pred_region
      %s131 = ssub.s32 %s9, 1
      // Predicated region
      $region13: #{tpu_custom_call.1} parent=11 // pred_check
        %p132 = pneg %p47
      $region14: #{tpu_custom_call.1} parent=11 // pred_check_branch
        %134 = sbr.rel (%p132) target = $region16
      $region15: #{tpu_custom_call.1} parent=11 // pred_region
        %p135 = scmp.lt.s32.totalorder %s18, 0
        %s136 = scalar_select %p135, %s18, 0
        %s137 = smul.addr %s136, 123
        %s138 = smul.addr %s137, 4
        %s139 = scalar_lea.vmem %s0, %s138
      $region16: #{tpu_custom_call.1} parent=11 // pred_fallthru
        _
      // Predicated region
      $region17: #{tpu_custom_call.1} parent=11 // pred_check
        %p140 = pneg %p68
      $region18: #{tpu_custom_call.1} parent=11 // pred_check_branch
        %142 = sbr.rel (%p140) target = $region20
      $region19: #{tpu_custom_call.1} parent=11 // pred_region
        _
      $region20: #{tpu_custom_call.1} parent=11 // pred_fallthru
        _
      // Predicated region
      $region21: #{tpu_custom_call.1} parent=11 // pred_check
        %p143 = pneg %p89
      $region22: #{tpu_custom_call.1} parent=11 // pred_check_branch
        %145 = sbr.rel (%p143) target = $region24
      $region23: #{tpu_custom_call.1} parent=11 // pred_region
        _
      $region24: #{tpu_custom_call.1} parent=11 // pred_fallthru
        _
    $region12: #{tpu_custom_call.1} parent=5 // pred_fallthru
      _
    %p146 = scmp.lt.s32.totalorder %s9, 3
    // Predicated region
    $region25: #{tpu_custom_call.1} parent=5 // pred_check
      %p147 = pneg %p146
    $region26: #{tpu_custom_call.1} parent=5 // pred_check_branch
      %149 = sbr.rel (%p147) target = $region28
    $region27: #{tpu_custom_call.1} parent=5 // pred_region
      _
    $region28: #{tpu_custom_call.1} parent=5 // pred_fallthru
      _
    %p150 = scmp.le.s32.totalorder 1, %s9
    %p151 = scmp.lt.s32.totalorder %s9, 4
    %p152 = pnand %p150, %p151
    %p153 = pneg %p152
    // Predicated region
    $region29: #{tpu_custom_call.1} parent=5 // pred_check
      _
    $region30: #{tpu_custom_call.1} parent=5 // pred_check_branch
      %155 = sbr.rel (%p152) target = $region32
    $region31: #{tpu_custom_call.1} parent=5 // pred_region
      %s156 = ssub.s32 %s9, 1
      %p157 = scmp.lt.s32.totalorder %s18, 0
      %s158 = scalar_select %p157, %s18, 0
      %s159 = smul.addr %s158, 123
      %s160 = smul.addr %s159, 4
      %s161 = scalar_lea.vmem %s0, %s160
      %p162 = pneg %p47
      %p163 = pneg %p44
      %p164 = pneg %p68
      %p165 = pneg %p65
      %p166 = pneg %p89
      %p167 = pneg %p86
      %p168 = pneg %p117
      %p169 = pneg %p114
      %s170 = smul.u32 13, %s19
      %p171 = scmp.lt.s32.totalorder %s18, 0
      %s172 = scalar_select %p171, %s18, 0
      %p173 = scmp.lt.s32.totalorder %s170, 38
      %s174 = scalar_select %p173, %s170, 38
      %s175 = smul.addr %s174, 3
      %s176 = smul.addr %s172, 117
      %s177 = sadd.s32 %s175, %s176
      %s178 = smul.addr %s177, 4
      %s179 = scalar_lea.vmem %s3, %s178
      %p180 = scmp.lt.s32.totalorder %s18, 0
      %s181 = scalar_select %p180, %s18, 0
      %s182 = smul.addr %s181, 123
      %s183 = smul.addr %s182, 4
      %s184 = scalar_lea.vmem %s0, %s183
      %s185 = smul.u32 13, %s19
      %p186 = scmp.lt.s32.totalorder %s18, 0
      %s187 = scalar_select %p186, %s18, 0
      %p188 = scmp.lt.s32.totalorder %s185, 38
      %s189 = scalar_select %p188, %s185, 38
      %s190 = smul.addr %s189, 3
      %s191 = smul.addr %s187, 117
      %s192 = sadd.s32 %s190, %s191
      %s193 = smul.addr %s192, 4
      %s194 = scalar_lea.vmem %s3, %s193
      %s195 = smul.u32 13, %s19
      %s197 = smul.u32 %s19, 13
      %s198 = smul.u32 %s197, 3
      %s199 = smul.addr %s198, 4
      %s200 = scalar_lea.vmem %s184, %s199
      %v201 = vld [vmem:[%s200] sm:$0xf]
      %v202 = vld [vmem:[%s200 + $0x4] sm:$0xf]
      %v203 = vld [vmem:[%s200 + $0x8] sm:$0xf]
      %v204 = vld [vmem:[%s200 + $0xc] sm:$0xf]
      %v205 = vld [vmem:[%s200 + $0x10] sm:$0xf]
      %v206 = vld [vmem:[%s200 + $0x14] sm:$0xf]
      %v207 = vld [vmem:[%s200 + $0x18] sm:$0xf]
      %v208 = vld [vmem:[%s200 + $0x1c] sm:$0xf]
      %v209 = vld [vmem:[%s200 + $0x20] sm:$0xf]
      %v210 = vld [vmem:[%s200 + $0x24] sm:$0xf]
      %v211 = vld [vmem:[%s200 + $0x28] sm:$0xf]
      %v212 = vld [vmem:[%s200 + $0x2c] sm:$0xf]
      %v213 = vld [vmem:[%s200 + $0x30] sm:$0xf]
      %v214 = vld [vmem:[%s200 + $0x34] sm:$0xf]
      %v215 = vld [vmem:[%s200 + $0x38] sm:$0xf]
      %v216 = vld [vmem:[%s200 + $0x3c] sm:$0xf]
      %v217 = vld [vmem:[%s200 + $0x40] sm:$0xf]
      %v218 = vld [vmem:[%s200 + $0x44] sm:$0xf]
      %v219 = vld [vmem:[%s200 + $0x48] sm:$0xf]
      %v220 = vld [vmem:[%s200 + $0x4c] sm:$0xf]
      %v221 = vld [vmem:[%s200 + $0x50] sm:$0xf]
      %v222 = vld [vmem:[%s200 + $0x54] sm:$0xf]
      %v223 = vld [vmem:[%s200 + $0x58] sm:$0xf]
      %v224 = vld [vmem:[%s200 + $0x5c] sm:$0xf]
      %v225 = vld [vmem:[%s200 + $0x60] sm:$0xf]
      %v226 = vld [vmem:[%s200 + $0x64] sm:$0xf]
      %v227 = vld [vmem:[%s200 + $0x68] sm:$0xf]
      %v228 = vld [vmem:[%s200 + $0x6c] sm:$0xf]
      %v229 = vld [vmem:[%s200 + $0x70] sm:$0xf]
      %v230 = vld [vmem:[%s200 + $0x74] sm:$0xf]
      %v231 = vld [vmem:[%s200 + $0x78] sm:$0xf]
      %v232 = vld [vmem:[%s200 + $0x7c] sm:$0xf]
      %v233 = vld [vmem:[%s200 + $0x80] sm:$0xf]
      %v234 = vld [vmem:[%s200 + $0x84] sm:$0xf]
      %v235 = vld [vmem:[%s200 + $0x88] sm:$0xf]
      %v236 = vld [vmem:[%s200 + $0x8c] sm:$0xf]
      %v237 = vld [vmem:[%s200 + $0x90] sm:$0xf]
      %v238 = vld [vmem:[%s200 + $0x94] sm:$0xf]
      %v239 = vld [vmem:[%s200 + $0x98] sm:$0xf]
      %s240 = sadd.s32 %s197, 1
      %s241 = smul.u32 %s240, 3
      %s242 = smul.addr %s241, 4
      %s243 = scalar_lea.vmem %s184, %s242
      %v244 = vld [vmem:[%s243] sm:$0xf]
      %v245 = vld [vmem:[%s243 + $0x4] sm:$0xf]
      %v246 = vld [vmem:[%s243 + $0x8] sm:$0xf]
      %v247 = vld [vmem:[%s243 + $0xc] sm:$0xf]
      %v248 = vld [vmem:[%s243 + $0x10] sm:$0xf]
      %v249 = vld [vmem:[%s243 + $0x14] sm:$0xf]
      %v250 = vld [vmem:[%s243 + $0x18] sm:$0xf]
      %v251 = vld [vmem:[%s243 + $0x1c] sm:$0xf]
      %v252 = vld [vmem:[%s243 + $0x20] sm:$0xf]
      %v253 = vld [vmem:[%s243 + $0x24] sm:$0xf]
      %v254 = vld [vmem:[%s243 + $0x28] sm:$0xf]
      %v255 = vld [vmem:[%s243 + $0x2c] sm:$0xf]
      %v256 = vld [vmem:[%s243 + $0x30] sm:$0xf]
      %v257 = vld [vmem:[%s243 + $0x34] sm:$0xf]
      %v258 = vld [vmem:[%s243 + $0x38] sm:$0xf]
      %v259 = vld [vmem:[%s243 + $0x3c] sm:$0xf]
      %v260 = vld [vmem:[%s243 + $0x40] sm:$0xf]
      %v261 = vld [vmem:[%s243 + $0x44] sm:$0xf]
      %v262 = vld [vmem:[%s243 + $0x48] sm:$0xf]
      %v263 = vld [vmem:[%s243 + $0x4c] sm:$0xf]
      %v264 = vld [vmem:[%s243 + $0x50] sm:$0xf]
      %v265 = vld [vmem:[%s243 + $0x54] sm:$0xf]
      %v266 = vld [vmem:[%s243 + $0x58] sm:$0xf]
      %v267 = vld [vmem:[%s243 + $0x5c] sm:$0xf]
      %v268 = vld [vmem:[%s243 + $0x60] sm:$0xf]
      %v269 = vld [vmem:[%s243 + $0x64] sm:$0xf]
      %v270 = vld [vmem:[%s243 + $0x68] sm:$0xf]
      %v271 = vld [vmem:[%s243 + $0x6c] sm:$0xf]
      %v272 = vld [vmem:[%s243 + $0x70] sm:$0xf]
      %v273 = vld [vmem:[%s243 + $0x74] sm:$0xf]
      %v274 = vld [vmem:[%s243 + $0x78] sm:$0xf]
      %v275 = vld [vmem:[%s243 + $0x7c] sm:$0xf]
      %v276 = vld [vmem:[%s243 + $0x80] sm:$0xf]
      %v277 = vld [vmem:[%s243 + $0x84] sm:$0xf]
      %v278 = vld [vmem:[%s243 + $0x88] sm:$0xf]
      %v279 = vld [vmem:[%s243 + $0x8c] sm:$0xf]
      %v280 = vld [vmem:[%s243 + $0x90] sm:$0xf]
      %v281 = vld [vmem:[%s243 + $0x94] sm:$0xf]
      %v282 = vld [vmem:[%s243 + $0x98] sm:$0xf]
      %s283 = sadd.s32 %s197, 2
      %s284 = smul.u32 %s283, 3
      %s285 = smul.addr %s284, 4
      %s286 = scalar_lea.vmem %s184, %s285
      %v287 = vld [vmem:[%s286] sm:$0xf]
      %v288 = vld [vmem:[%s286 + $0x4] sm:$0xf]
      %v289 = vld [vmem:[%s286 + $0x8] sm:$0xf]
      %v290 = vld [vmem:[%s286 + $0xc] sm:$0xf]
      %v291 = vld [vmem:[%s286 + $0x10] sm:$0xf]
      %v292 = vld [vmem:[%s286 + $0x14] sm:$0xf]
      %v293 = vld [vmem:[%s286 + $0x18] sm:$0xf]
      %v294 = vld [vmem:[%s286 + $0x1c] sm:$0xf]
      %v295 = vld [vmem:[%s286 + $0x20] sm:$0xf]
      %v296 = vld [vmem:[%s286 + $0x24] sm:$0xf]
      %v297 = vld [vmem:[%s286 + $0x28] sm:$0xf]
      %v298 = vld [vmem:[%s286 + $0x2c] sm:$0xf]
      %v299 = vld [vmem:[%s286 + $0x30] sm:$0xf]
      %v300 = vld [vmem:[%s286 + $0x34] sm:$0xf]
      %v301 = vld [vmem:[%s286 + $0x38] sm:$0xf]
      %v302 = vld [vmem:[%s286 + $0x3c] sm:$0xf]
      %v303 = vld [vmem:[%s286 + $0x40] sm:$0xf]
      %v304 = vld [vmem:[%s286 + $0x44] sm:$0xf]
      %v305 = vld [vmem:[%s286 + $0x48] sm:$0xf]
      %v306 = vld [vmem:[%s286 + $0x4c] sm:$0xf]
      %v307 = vld [vmem:[%s286 + $0x50] sm:$0xf]
      %v308 = vld [vmem:[%s286 + $0x54] sm:$0xf]
      %v309 = vld [vmem:[%s286 + $0x58] sm:$0xf]
      %v310 = vld [vmem:[%s286 + $0x5c] sm:$0xf]
      %v311 = vld [vmem:[%s286 + $0x60] sm:$0xf]
      %v312 = vld [vmem:[%s286 + $0x64] sm:$0xf]
      %v313 = vld [vmem:[%s286 + $0x68] sm:$0xf]
      %v314 = vld [vmem:[%s286 + $0x6c] sm:$0xf]
      %v315 = vld [vmem:[%s286 + $0x70] sm:$0xf]
      %v316 = vld [vmem:[%s286 + $0x74] sm:$0xf]
      %v317 = vld [vmem:[%s286 + $0x78] sm:$0xf]
      %v318 = vld [vmem:[%s286 + $0x7c] sm:$0xf]
      %v319 = vld [vmem:[%s286 + $0x80] sm:$0xf]
      %v320 = vld [vmem:[%s286 + $0x84] sm:$0xf]
      %v321 = vld [vmem:[%s286 + $0x88] sm:$0xf]
      %v322 = vld [vmem:[%s286 + $0x8c] sm:$0xf]
      %v323 = vld [vmem:[%s286 + $0x90] sm:$0xf]
      %v324 = vld [vmem:[%s286 + $0x94] sm:$0xf]
      %v325 = vld [vmem:[%s286 + $0x98] sm:$0xf]
      %v326 = vld [vmem:[%s1] sm:$0xf]
      %v327 = vld [vmem:[%s1 + $0x4] sm:$0xf]
      %s328 = scalar_lea.vmem %s1, 24
      %v329 = vld [vmem:[%s328] sm:$0xf]
      %v330 = vld [vmem:[%s328 + $0x4] sm:$0xf]
      %v370 = vunpack.c.l.b16 %v244
      %v371 = vunpack.c.l.b16 %v245
      %v372 = vunpack.c.l.b16 %v246
      %v373 = vunpack.c.l.b16 %v247
      %v374 = vunpack.c.l.b16 %v248
      %v375 = vunpack.c.l.b16 %v249
      %v376 = vunpack.c.l.b16 %v250
      %v377 = vunpack.c.l.b16 %v251
      %v378 = vunpack.c.l.b16 %v252
      %v379 = vunpack.c.l.b16 %v253
      %v380 = vunpack.c.l.b16 %v254
      %v381 = vunpack.c.l.b16 %v255
      %v382 = vunpack.c.l.b16 %v256
      %v383 = vunpack.c.l.b16 %v257
      %v384 = vunpack.c.l.b16 %v258
      %v385 = vunpack.c.l.b16 %v259
      %v386 = vunpack.c.l.b16 %v260
      %v387 = vunpack.c.l.b16 %v261
      %v388 = vunpack.c.l.b16 %v262
      %v389 = vunpack.c.l.b16 %v263
      %v390 = vunpack.c.l.b16 %v264
      %v391 = vunpack.c.l.b16 %v265
      %v392 = vunpack.c.l.b16 %v266
      %v393 = vunpack.c.l.b16 %v267
      %v394 = vunpack.c.l.b16 %v268
      %v395 = vunpack.c.l.b16 %v269
      %v396 = vunpack.c.l.b16 %v270
      %v397 = vunpack.c.l.b16 %v271
      %v398 = vunpack.c.l.b16 %v272
      %v399 = vunpack.c.l.b16 %v273
      %v400 = vunpack.c.l.b16 %v274
      %v401 = vunpack.c.l.b16 %v275
      %v402 = vunpack.c.l.b16 %v276
      %v403 = vunpack.c.l.b16 %v277
      %v404 = vunpack.c.l.b16 %v278
      %v405 = vunpack.c.l.b16 %v279
      %v406 = vunpack.c.l.b16 %v280
      %v407 = vunpack.c.l.b16 %v281
      %v408 = vunpack.c.l.b16 %v282
      %v409 = vpack.c.b16 %v371, %v370
      %v410 = vpack.c.b16 %v373, %v372
      %v411 = vpack.c.b16 %v375, %v374
      %v412 = vpack.c.b16 %v377, %v376
      %v413 = vpack.c.b16 %v379, %v378
      %v414 = vpack.c.b16 %v381, %v380
      %v415 = vpack.c.b16 %v383, %v382
      %v416 = vpack.c.b16 %v385, %v384
      %v417 = vpack.c.b16 %v387, %v386
      %v418 = vpack.c.b16 %v389, %v388
      %v419 = vpack.c.b16 %v391, %v390
      %v420 = vpack.c.b16 %v393, %v392
      %v421 = vpack.c.b16 %v395, %v394
      %v422 = vpack.c.b16 %v397, %v396
      %v423 = vpack.c.b16 %v399, %v398
      %v424 = vpack.c.b16 %v401, %v400
      %v425 = vpack.c.b16 %v403, %v402
      %v426 = vpack.c.b16 %v405, %v404
      %v427 = vpack.c.b16 %v407, %v406
      %v428 = vpack.c.b16 %v408, %v408
      %v431 = vunpack.c.l.b16 %v329
      %v432 = vunpack.c.l.b16 %v330
      %v433 = vpack.c.b16 %v432, %v431
      %vm435 = vcmask 130048
      %v437 = vsel %vm435, %v409, 0
      %v440 = vsel %vm435, %v410, 0
      %v443 = vsel %vm435, %v411, 0
      %v446 = vsel %vm435, %v412, 0
      %v449 = vsel %vm435, %v413, 0
      %v452 = vsel %vm435, %v414, 0
      %v455 = vsel %vm435, %v415, 0
      %v458 = vsel %vm435, %v416, 0
      %v461 = vsel %vm435, %v417, 0
      %v464 = vsel %vm435, %v418, 0
      %v467 = vsel %vm435, %v419, 0
      %v470 = vsel %vm435, %v420, 0
      %v473 = vsel %vm435, %v421, 0
      %v476 = vsel %vm435, %v422, 0
      %v479 = vsel %vm435, %v423, 0
      %v482 = vsel %vm435, %v424, 0
      %v485 = vsel %vm435, %v425, 0
      %v488 = vsel %vm435, %v426, 0
      %v491 = vsel %vm435, %v427, 0
      %v494 = vsel %vm435, %v428, 0
      %496 = vmatprep.subr.bf16.mxu0 0
      %497 = vmatpush1.bf16.msra.mxu0 %v433
      %498 = vmatprep.subr.bf16.mxu0 0
      %499 = vmatpush1.bf16.msra.mxu0 0
      %500 = vmatprep.subr.bf16.mxu0 0
      %501 = vmatpush1.bf16.msra.mxu0 0
      %502 = vmatprep.subr.bf16.mxu0 0
      %503 = vmatpush1.bf16.msra.mxu0 0
      %504 = vmatprep.subr.bf16.mxu0 0
      %505 = vmatpush1.bf16.msra.mxu0 0
      %506 = vmatprep.subr.bf16.mxu0 0
      %507 = vmatpush1.bf16.msra.mxu0 0
      %508 = vmatprep.subr.bf16.mxu0 0
      %509 = vmatpush1.bf16.msra.mxu0 0
      %510 = vmatprep.subr.bf16.mxu0 0
      %511 = vmatpush1.bf16.msra.mxu0 0
      %512 = vmatprep.subr.bf16.mxu0 0
      %513 = vmatpush1.bf16.msra.mxu0 0
      %514 = vmatprep.subr.bf16.mxu0 0
      %515 = vmatpush1.bf16.msra.mxu0 0
      %516 = vmatprep.subr.bf16.mxu0 0
      %517 = vmatpush1.bf16.msra.mxu0 0
      %518 = vmatprep.subr.bf16.mxu0 0
      %519 = vmatpush1.bf16.msra.mxu0 0
      %520 = vmatprep.subr.bf16.mxu0 0
      %521 = vmatpush1.bf16.msra.mxu0 0
      %522 = vmatprep.subr.bf16.mxu0 0
      %523 = vmatpush1.bf16.msra.mxu0 0
      %524 = vmatprep.subr.bf16.mxu0 0
      %525 = vmatpush1.bf16.msra.mxu0 0
      %526 = vmatprep.subr.bf16.mxu0 0
      %527 = vmatpush1.bf16.msra.mxu0 0
      %528 = vmatprep.mubr.bf16.mxu0 0
      %529 = vmatmul.mubr.bf16.gmra.mrb[0].mxu0 %v437
      %v530 = vpop.f32.mrb[0].mxu0
      %v531 = vadd.f32 0.0, %v530
      %v532 = vpop.f32.mrb[0].mxu0
      %v533 = vpop.f32.mrb[0].mxu0
      %v534 = vadd.f32 0.0, %v533
      %v535 = vpop.f32.mrb[0].mxu0
      %536 = vmatprep.mubr.bf16.mxu0 0
      %537 = vmatmul.mubr.bf16.gmra.mrb[0].mxu0 %v440
      %v538 = vpop.f32.mrb[0].mxu0
      %v539 = vadd.f32 0.0, %v538
      %v540 = vpop.f32.mrb[0].mxu0
      %v541 = vpop.f32.mrb[0].mxu0
      %v542 = vadd.f32 0.0, %v541
      %v543 = vpop.f32.mrb[0].mxu0
      %544 = vmatprep.mubr.bf16.mxu0 0
      %545 = vmatmul.mubr.bf16.gmra.mrb[0].mxu0 %v443
      %v546 = vpop.f32.mrb[0].mxu0
      %v547 = vadd.f32 0.0, %v546
      %v548 = vpop.f32.mrb[0].mxu0
      %v549 = vpop.f32.mrb[0].mxu0
      %v550 = vadd.f32 0.0, %v549
      %v551 = vpop.f32.mrb[0].mxu0
      %552 = vmatprep.mubr.bf16.mxu0 0
      %553 = vmatmul.mubr.bf16.gmra.mrb[0].mxu0 %v446
      %v554 = vpop.f32.mrb[0].mxu0
      %v555 = vadd.f32 0.0, %v554
      %v556 = vpop.f32.mrb[0].mxu0
      %v557 = vpop.f32.mrb[0].mxu0
      %v558 = vadd.f32 0.0, %v557
      %v559 = vpop.f32.mrb[0].mxu0
      %560 = vmatprep.mubr.bf16.mxu0 0
      %561 = vmatmul.mubr.bf16.gmra.mrb[0].mxu0 %v449
      %v562 = vpop.f32.mrb[0].mxu0
      %v563 = vadd.f32 0.0, %v562
      %v564 = vpop.f32.mrb[0].mxu0
      %v565 = vpop.f32.mrb[0].mxu0
      %v566 = vadd.f32 0.0, %v565
      %v567 = vpop.f32.mrb[0].mxu0
      %568 = vmatprep.mubr.bf16.mxu0 0
      %569 = vmatmul.mubr.bf16.gmra.mrb[0].mxu0 %v452
      %v570 = vpop.f32.mrb[0].mxu0
      %v571 = vadd.f32 0.0, %v570
      %v572 = vpop.f32.mrb[0].mxu0
      %v573 = vpop.f32.mrb[0].mxu0
      %v574 = vadd.f32 0.0, %v573
      %v575 = vpop.f32.mrb[0].mxu0
      %576 = vmatprep.mubr.bf16.mxu0 0
      %577 = vmatmul.mubr.bf16.gmra.mrb[0].mxu0 %v455
      %v578 = vpop.f32.mrb[0].mxu0
      %v579 = vadd.f32 0.0, %v578
      %v580 = vpop.f32.mrb[0].mxu0
      %v581 = vpop.f32.mrb[0].mxu0
      %v582 = vadd.f32 0.0, %v581
      %v583 = vpop.f32.mrb[0].mxu0
      %584 = vmatprep.mubr.bf16.mxu0 0
      %585 = vmatmul.mubr.bf16.gmra.mrb[0].mxu0 %v458
      %v586 = vpop.f32.mrb[0].mxu0
      %v587 = vadd.f32 0.0, %v586
      %v588 = vpop.f32.mrb[0].mxu0
      %v589 = vpop.f32.mrb[0].mxu0
      %v590 = vadd.f32 0.0, %v589
      %v591 = vpop.f32.mrb[0].mxu0
      %592 = vmatprep.mubr.bf16.mxu0 0
      %593 = vmatmul.mubr.bf16.gmra.mrb[0].mxu0 %v461
      %v594 = vpop.f32.mrb[0].mxu0
      %v595 = vadd.f32 0.0, %v594
      %v596 = vpop.f32.mrb[0].mxu0
      %v597 = vpop.f32.mrb[0].mxu0
      %v598 = vadd.f32 0.0, %v597
      %v599 = vpop.f32.mrb[0].mxu0
      %600 = vmatprep.mubr.bf16.mxu0 0
      %601 = vmatmul.mubr.bf16.gmra.mrb[0].mxu0 %v464
      %v602 = vpop.f32.mrb[0].mxu0
      %v603 = vadd.f32 0.0, %v602
      %v604 = vpop.f32.mrb[0].mxu0
      %v605 = vpop.f32.mrb[0].mxu0
      %v606 = vadd.f32 0.0, %v605
      %v607 = vpop.f32.mrb[0].mxu0
      %608 = vmatprep.mubr.bf16.mxu0 0
      %609 = vmatmul.mubr.bf16.gmra.mrb[0].mxu0 %v467
      %v610 = vpop.f32.mrb[0].mxu0
      %v611 = vadd.f32 0.0, %v610
      %v612 = vpop.f32.mrb[0].mxu0
      %v613 = vpop.f32.mrb[0].mxu0
      %v614 = vadd.f32 0.0, %v613
      %v615 = vpop.f32.mrb[0].mxu0
      %616 = vmatprep.mubr.bf16.mxu0 0
      %617 = vmatmul.mubr.bf16.gmra.mrb[0].mxu0 %v470
      %v618 = vpop.f32.mrb[0].mxu0
      %v619 = vadd.f32 0.0, %v618
      %v620 = vpop.f32.mrb[0].mxu0
      %v621 = vpop.f32.mrb[0].mxu0
      %v622 = vadd.f32 0.0, %v621
      %v623 = vpop.f32.mrb[0].mxu0
      %624 = vmatprep.mubr.bf16.mxu0 0
      %625 = vmatmul.mubr.bf16.gmra.mrb[0].mxu0 %v473
      %v626 = vpop.f32.mrb[0].mxu0
      %v627 = vadd.f32 0.0, %v626
      %v628 = vpop.f32.mrb[0].mxu0
      %v629 = vpop.f32.mrb[0].mxu0
      %v630 = vadd.f32 0.0, %v629
      %v631 = vpop.f32.mrb[0].mxu0
      %632 = vmatprep.mubr.bf16.mxu0 0
      %633 = vmatmul.mubr.bf16.gmra.mrb[0].mxu0 %v476
      %v634 = vpop.f32.mrb[0].mxu0
      %v635 = vadd.f32 0.0, %v634
      %v636 = vpop.f32.mrb[0].mxu0
      %v637 = vpop.f32.mrb[0].mxu0
      %v638 = vadd.f32 0.0, %v637
      %v639 = vpop.f32.mrb[0].mxu0
      %640 = vmatprep.mubr.bf16.mxu0 0
      %641 = vmatmul.mubr.bf16.gmra.mrb[0].mxu0 %v479
      %v642 = vpop.f32.mrb[0].mxu0
      %v643 = vadd.f32 0.0, %v642
      %v644 = vpop.f32.mrb[0].mxu0
      %v645 = vpop.f32.mrb[0].mxu0
      %v646 = vadd.f32 0.0, %v645
      %v647 = vpop.f32.mrb[0].mxu0
      %648 = vmatprep.mubr.bf16.mxu0 0
      %649 = vmatmul.mubr.bf16.gmra.mrb[0].mxu0 %v482
      %v650 = vpop.f32.mrb[0].mxu0
      %v651 = vadd.f32 0.0, %v650
      %v652 = vpop.f32.mrb[0].mxu0
      %v653 = vpop.f32.mrb[0].mxu0
      %v654 = vadd.f32 0.0, %v653
      %v655 = vpop.f32.mrb[0].mxu0
      %656 = vmatprep.mubr.bf16.mxu0 0
      %657 = vmatmul.mubr.bf16.gmra.mrb[0].mxu0 %v485
      %v658 = vpop.f32.mrb[0].mxu0
      %v659 = vadd.f32 0.0, %v658
      %v660 = vpop.f32.mrb[0].mxu0
      %v661 = vpop.f32.mrb[0].mxu0
      %v662 = vadd.f32 0.0, %v661
      %v663 = vpop.f32.mrb[0].mxu0
      %664 = vmatprep.mubr.bf16.mxu0 0
      %665 = vmatmul.mubr.bf16.gmra.mrb[0].mxu0 %v488
      %v666 = vpop.f32.mrb[0].mxu0
      %v667 = vadd.f32 0.0, %v666
      %v668 = vpop.f32.mrb[0].mxu0
      %v669 = vpop.f32.mrb[0].mxu0
      %v670 = vadd.f32 0.0, %v669
      %v671 = vpop.f32.mrb[0].mxu0
      %672 = vmatprep.mubr.bf16.mxu0 0
      %673 = vmatmul.mubr.bf16.gmra.mrb[0].mxu0 %v491
      %v674 = vpop.f32.mrb[0].mxu0
      %v675 = vadd.f32 0.0, %v674
      %v676 = vpop.f32.mrb[0].mxu0
      %v677 = vpop.f32.mrb[0].mxu0
      %v678 = vadd.f32 0.0, %v677
      %v679 = vpop.f32.mrb[0].mxu0
      %680 = vmatprep.mubr.bf16.mxu0 0
      %681 = vmatmul.mubr.bf16.gmra.mrb[0].mxu0 %v494
      %v682 = vpop.f32.mrb[0].mxu0
      %v683 = vadd.f32 0.0, %v682
      %v684 = vpop.f32.mrb[0].mxu0
      %v685 = vpop.f32.mrb[0].mxu0
      %v686 = vpop.f32.mrb[0].mxu0
      %687 = vdwg.mxu0
      %v727 = vunpack.c.l.b16 %v201
      %v728 = vunpack.c.l.b16 %v202
      %v729 = vunpack.c.l.b16 %v203
      %v730 = vunpack.c.l.b16 %v204
      %v731 = vunpack.c.l.b16 %v205
      %v732 = vunpack.c.l.b16 %v206
      %v733 = vunpack.c.l.b16 %v207
      %v734 = vunpack.c.l.b16 %v208
      %v735 = vunpack.c.l.b16 %v209
      %v736 = vunpack.c.l.b16 %v210
      %v737 = vunpack.c.l.b16 %v211
      %v738 = vunpack.c.l.b16 %v212
      %v739 = vunpack.c.l.b16 %v213
      %v740 = vunpack.c.l.b16 %v214
      %v741 = vunpack.c.l.b16 %v215
      %v742 = vunpack.c.l.b16 %v216
      %v743 = vunpack.c.l.b16 %v217
      %v744 = vunpack.c.l.b16 %v218
      %v745 = vunpack.c.l.b16 %v219
      %v746 = vunpack.c.l.b16 %v220
      %v747 = vunpack.c.l.b16 %v221
      %v748 = vunpack.c.l.b16 %v222
      %v749 = vunpack.c.l.b16 %v223
      %v750 = vunpack.c.l.b16 %v224
      %v751 = vunpack.c.l.b16 %v225
      %v752 = vunpack.c.l.b16 %v226
      %v753 = vunpack.c.l.b16 %v227
      %v754 = vunpack.c.l.b16 %v228
      %v755 = vunpack.c.l.b16 %v229
      %v756 = vunpack.c.l.b16 %v230
      %v757 = vunpack.c.l.b16 %v231
      %v758 = vunpack.c.l.b16 %v232
      %v759 = vunpack.c.l.b16 %v233
      %v760 = vunpack.c.l.b16 %v234
      %v761 = vunpack.c.l.b16 %v235
      %v762 = vunpack.c.l.b16 %v236
      %v763 = vunpack.c.l.b16 %v237
      %v764 = vunpack.c.l.b16 %v238
      %v765 = vunpack.c.l.b16 %v239
      %v766 = vpack.c.b16 %v728, %v727
      %v767 = vpack.c.b16 %v730, %v729
      %v768 = vpack.c.b16 %v732, %v731
      %v769 = vpack.c.b16 %v734, %v733
      %v770 = vpack.c.b16 %v736, %v735
      %v771 = vpack.c.b16 %v738, %v737
      %v772 = vpack.c.b16 %v740, %v739
      %v773 = vpack.c.b16 %v742, %v741
      %v774 = vpack.c.b16 %v744, %v743
      %v775 = vpack.c.b16 %v746, %v745
      %v776 = vpack.c.b16 %v748, %v747
      %v777 = vpack.c.b16 %v750, %v749
      %v778 = vpack.c.b16 %v752, %v751
      %v779 = vpack.c.b16 %v754, %v753
      %v780 = vpack.c.b16 %v756, %v755
      %v781 = vpack.c.b16 %v758, %v757
      %v782 = vpack.c.b16 %v760, %v759
      %v783 = vpack.c.b16 %v762, %v761
      %v784 = vpack.c.b16 %v764, %v763
      %v785 = vpack.c.b16 %v765, %v765
      %v788 = vunpack.c.l.b16 %v326
      %v789 = vunpack.c.l.b16 %v327
      %v790 = vpack.c.b16 %v789, %v788
      %v793 = vsel %vm435, %v766, 0
      %v796 = vsel %vm435, %v767, 0
      %v799 = vsel %vm435, %v768, 0
      %v802 = vsel %vm435, %v769, 0
      %v805 = vsel %vm435, %v770, 0
      %v808 = vsel %vm435, %v771, 0
      %v811 = vsel %vm435, %v772, 0
      %v814 = vsel %vm435, %v773, 0
      %v817 = vsel %vm435, %v774, 0
      %v820 = vsel %vm435, %v775, 0
      %v823 = vsel %vm435, %v776, 0
      %v826 = vsel %vm435, %v777, 0
      %v829 = vsel %vm435, %v778, 0
      %v832 = vsel %vm435, %v779, 0
      %v835 = vsel %vm435, %v780, 0
      %v838 = vsel %vm435, %v781, 0
      %v841 = vsel %vm435, %v782, 0
      %v844 = vsel %vm435, %v783, 0
      %v847 = vsel %vm435, %v784, 0
      %v850 = vsel %vm435, %v785, 0
      %852 = vmatprep.subr.bf16.mxu0 0
      %853 = vmatpush1.bf16.msra.mxu0 %v790
      %854 = vmatprep.subr.bf16.mxu0 0
      %855 = vmatpush1.bf16.msra.mxu0 0
      %856 = vmatprep.subr.bf16.mxu0 0
      %857 = vmatpush1.bf16.msra.mxu0 0
      %858 = vmatprep.subr.bf16.mxu0 0
      %859 = vmatpush1.bf16.msra.mxu0 0
      %860 = vmatprep.subr.bf16.mxu0 0
      %861 = vmatpush1.bf16.msra.mxu0 0
      %862 = vmatprep.subr.bf16.mxu0 0
      %863 = vmatpush1.bf16.msra.mxu0 0
      %864 = vmatprep.subr.bf16.mxu0 0
      %865 = vmatpush1.bf16.msra.mxu0 0
      %866 = vmatprep.subr.bf16.mxu0 0
      %867 = vmatpush1.bf16.msra.mxu0 0
      %868 = vmatprep.subr.bf16.mxu0 0
      %869 = vmatpush1.bf16.msra.mxu0 0
      %870 = vmatprep.subr.bf16.mxu0 0
      %871 = vmatpush1.bf16.msra.mxu0 0
      %872 = vmatprep.subr.bf16.mxu0 0
      %873 = vmatpush1.bf16.msra.mxu0 0
      %874 = vmatprep.subr.bf16.mxu0 0
      %875 = vmatpush1.bf16.msra.mxu0 0
      %876 = vmatprep.subr.bf16.mxu0 0
      %877 = vmatpush1.bf16.msra.mxu0 0
      %878 = vmatprep.subr.bf16.mxu0 0
      %879 = vmatpush1.bf16.msra.mxu0 0
      %880 = vmatprep.subr.bf16.mxu0 0
      %881 = vmatpush1.bf16.msra.mxu0 0
      %882 = vmatprep.subr.bf16.mxu0 0
      %883 = vmatpush1.bf16.msra.mxu0 0
      %884 = vmatprep.mubr.bf16.mxu0 0
      %885 = vmatmul.mubr.bf16.gmra.mrb[0].mxu0 %v793
      %v886 = vpop.f32.mrb[0].mxu0
      %v887 = vadd.f32 %v531, %v886
      %v888 = vpop.f32.mrb[0].mxu0
      %v889 = vpop.f32.mrb[0].mxu0
      %v890 = vadd.f32 %v534, %v889
      %v891 = vpop.f32.mrb[0].mxu0
      %892 = vmatprep.mubr.bf16.mxu0 0
      %893 = vmatmul.mubr.bf16.gmra.mrb[0].mxu0 %v796
      %v894 = vpop.f32.mrb[0].mxu0
      %v895 = vadd.f32 %v539, %v894
      %v896 = vpop.f32.mrb[0].mxu0
      %v897 = vpop.f32.mrb[0].mxu0
      %v898 = vadd.f32 %v542, %v897
      %v899 = vpop.f32.mrb[0].mxu0
      %900 = vmatprep.mubr.bf16.mxu0 0
      %901 = vmatmul.mubr.bf16.gmra.mrb[0].mxu0 %v799
      %v902 = vpop.f32.mrb[0].mxu0
      %v903 = vadd.f32 %v547, %v902
      %v904 = vpop.f32.mrb[0].mxu0
      %v905 = vpop.f32.mrb[0].mxu0
      %v906 = vadd.f32 %v550, %v905
      %v907 = vpop.f32.mrb[0].mxu0
      %908 = vmatprep.mubr.bf16.mxu0 0
      %909 = vmatmul.mubr.bf16.gmra.mrb[0].mxu0 %v802
      %v910 = vpop.f32.mrb[0].mxu0
      %v911 = vadd.f32 %v555, %v910
      %v912 = vpop.f32.mrb[0].mxu0
      %v913 = vpop.f32.mrb[0].mxu0
      %v914 = vadd.f32 %v558, %v913
      %v915 = vpop.f32.mrb[0].mxu0
      %916 = vmatprep.mubr.bf16.mxu0 0
      %917 = vmatmul.mubr.bf16.gmra.mrb[0].mxu0 %v805
      %v918 = vpop.f32.mrb[0].mxu0
      %v919 = vadd.f32 %v563, %v918
      %v920 = vpop.f32.mrb[0].mxu0
      %v921 = vpop.f32.mrb[0].mxu0
      %v922 = vadd.f32 %v566, %v921
      %v923 = vpop.f32.mrb[0].mxu0
      %924 = vmatprep.mubr.bf16.mxu0 0
      %925 = vmatmul.mubr.bf16.gmra.mrb[0].mxu0 %v808
      %v926 = vpop.f32.mrb[0].mxu0
      %v927 = vadd.f32 %v571, %v926
      %v928 = vpop.f32.mrb[0].mxu0
      %v929 = vpop.f32.mrb[0].mxu0
      %v930 = vadd.f32 %v574, %v929
      %v931 = vpop.f32.mrb[0].mxu0
      %932 = vmatprep.mubr.bf16.mxu0 0
      %933 = vmatmul.mubr.bf16.gmra.mrb[0].mxu0 %v811
      %v934 = vpop.f32.mrb[0].mxu0
      %v935 = vadd.f32 %v579, %v934
      %v936 = vpop.f32.mrb[0].mxu0
      %v937 = vpop.f32.mrb[0].mxu0
      %v938 = vadd.f32 %v582, %v937
      %v939 = vpop.f32.mrb[0].mxu0
      %940 = vmatprep.mubr.bf16.mxu0 0
      %941 = vmatmul.mubr.bf16.gmra.mrb[0].mxu0 %v814
      %v942 = vpop.f32.mrb[0].mxu0
      %v943 = vadd.f32 %v587, %v942
      %v944 = vpop.f32.mrb[0].mxu0
      %v945 = vpop.f32.mrb[0].mxu0
      %v946 = vadd.f32 %v590, %v945
      %v947 = vpop.f32.mrb[0].mxu0
      %948 = vmatprep.mubr.bf16.mxu0 0
      %949 = vmatmul.mubr.bf16.gmra.mrb[0].mxu0 %v817
      %v950 = vpop.f32.mrb[0].mxu0
      %v951 = vadd.f32 %v595, %v950
      %v952 = vpop.f32.mrb[0].mxu0
      %v953 = vpop.f32.mrb[0].mxu0
      %v954 = vadd.f32 %v598, %v953
      %v955 = vpop.f32.mrb[0].mxu0
      %956 = vmatprep.mubr.bf16.mxu0 0
      %957 = vmatmul.mubr.bf16.gmra.mrb[0].mxu0 %v820
      %v958 = vpop.f32.mrb[0].mxu0
      %v959 = vadd.f32 %v603, %v958
      %v960 = vpop.f32.mrb[0].mxu0
      %v961 = vpop.f32.mrb[0].mxu0
      %v962 = vadd.f32 %v606, %v961
      %v963 = vpop.f32.mrb[0].mxu0
      %964 = vmatprep.mubr.bf16.mxu0 0
      %965 = vmatmul.mubr.bf16.gmra.mrb[0].mxu0 %v823
      %v966 = vpop.f32.mrb[0].mxu0
      %v967 = vadd.f32 %v611, %v966
      %v968 = vpop.f32.mrb[0].mxu0
      %v969 = vpop.f32.mrb[0].mxu0
      %v970 = vadd.f32 %v614, %v969
      %v971 = vpop.f32.mrb[0].mxu0
      %972 = vmatprep.mubr.bf16.mxu0 0
      %973 = vmatmul.mubr.bf16.gmra.mrb[0].mxu0 %v826
      %v974 = vpop.f32.mrb[0].mxu0
      %v975 = vadd.f32 %v619, %v974
      %v976 = vpop.f32.mrb[0].mxu0
      %v977 = vpop.f32.mrb[0].mxu0
      %v978 = vadd.f32 %v622, %v977
      %v979 = vpop.f32.mrb[0].mxu0
      %980 = vmatprep.mubr.bf16.mxu0 0
      %981 = vmatmul.mubr.bf16.gmra.mrb[0].mxu0 %v829
      %v982 = vpop.f32.mrb[0].mxu0
      %v983 = vadd.f32 %v627, %v982
      %v984 = vpop.f32.mrb[0].mxu0
      %v985 = vpop.f32.mrb[0].mxu0
      %v986 = vadd.f32 %v630, %v985
      %v987 = vpop.f32.mrb[0].mxu0
      %988 = vmatprep.mubr.bf16.mxu0 0
      %989 = vmatmul.mubr.bf16.gmra.mrb[0].mxu0 %v832
      %v990 = vpop.f32.mrb[0].mxu0
      %v991 = vadd.f32 %v635, %v990
      %v992 = vpop.f32.mrb[0].mxu0
      %v993 = vpop.f32.mrb[0].mxu0
      %v994 = vadd.f32 %v638, %v993
      %v995 = vpop.f32.mrb[0].mxu0
      %996 = vmatprep.mubr.bf16.mxu0 0
      %997 = vmatmul.mubr.bf16.gmra.mrb[0].mxu0 %v835
      %v998 = vpop.f32.mrb[0].mxu0
      %v999 = vadd.f32 %v643, %v998
      %v1000 = vpop.f32.mrb[0].mxu0
      %v1001 = vpop.f32.mrb[0].mxu0
      %v1002 = vadd.f32 %v646, %v1001
      %v1003 = vpop.f32.mrb[0].mxu0
      %1004 = vmatprep.mubr.bf16.mxu0 0
      %1005 = vmatmul.mubr.bf16.gmra.mrb[0].mxu0 %v838
      %v1006 = vpop.f32.mrb[0].mxu0
      %v1007 = vadd.f32 %v651, %v1006
      %v1008 = vpop.f32.mrb[0].mxu0
      %v1009 = vpop.f32.mrb[0].mxu0
      %v1010 = vadd.f32 %v654, %v1009
      %v1011 = vpop.f32.mrb[0].mxu0
      %1012 = vmatprep.mubr.bf16.mxu0 0
      %1013 = vmatmul.mubr.bf16.gmra.mrb[0].mxu0 %v841
      %v1014 = vpop.f32.mrb[0].mxu0
      %v1015 = vadd.f32 %v659, %v1014
      %v1016 = vpop.f32.mrb[0].mxu0
      %v1017 = vpop.f32.mrb[0].mxu0
      %v1018 = vadd.f32 %v662, %v1017
      %v1019 = vpop.f32.mrb[0].mxu0
      %1020 = vmatprep.mubr.bf16.mxu0 0
      %1021 = vmatmul.mubr.bf16.gmra.mrb[0].mxu0 %v844
      %v1022 = vpop.f32.mrb[0].mxu0
      %v1023 = vadd.f32 %v667, %v1022
      %v1024 = vpop.f32.mrb[0].mxu0
      %v1025 = vpop.f32.mrb[0].mxu0
      %v1026 = vadd.f32 %v670, %v1025
      %v1027 = vpop.f32.mrb[0].mxu0
      %1028 = vmatprep.mubr.bf16.mxu0 0
      %1029 = vmatmul.mubr.bf16.gmra.mrb[0].mxu0 %v847
      %v1030 = vpop.f32.mrb[0].mxu0
      %v1031 = vadd.f32 %v675, %v1030
      %v1032 = vpop.f32.mrb[0].mxu0
      %v1033 = vpop.f32.mrb[0].mxu0
      %v1034 = vadd.f32 %v678, %v1033
      %v1035 = vpop.f32.mrb[0].mxu0
      %1036 = vmatprep.mubr.bf16.mxu0 0
      %1037 = vmatmul.mubr.bf16.gmra.mrb[0].mxu0 %v850
      %v1038 = vpop.f32.mrb[0].mxu0
      %v1039 = vadd.f32 %v683, %v1038
      %v1040 = vpop.f32.mrb[0].mxu0
      %v1041 = vpop.f32.mrb[0].mxu0
      %v1042 = vpop.f32.mrb[0].mxu0
      %1043 = vdwg.mxu0
      %s1044 = scalar_lea.vmem %s1, 48
      %v1045 = vld [vmem:[%s1044] sm:$0xf]
      %v1046 = vld [vmem:[%s1044 + $0x4] sm:$0xf]
      %v1086 = vunpack.c.l.b16 %v287
      %v1087 = vunpack.c.l.b16 %v288
      %v1088 = vunpack.c.l.b16 %v289
      %v1089 = vunpack.c.l.b16 %v290
      %v1090 = vunpack.c.l.b16 %v291
      %v1091 = vunpack.c.l.b16 %v292
      %v1092 = vunpack.c.l.b16 %v293
      %v1093 = vunpack.c.l.b16 %v294
      %v1094 = vunpack.c.l.b16 %v295
      %v1095 = vunpack.c.l.b16 %v296
      %v1096 = vunpack.c.l.b16 %v297
      %v1097 = vunpack.c.l.b16 %v298
      %v1098 = vunpack.c.l.b16 %v299
      %v1099 = vunpack.c.l.b16 %v300
      %v1100 = vunpack.c.l.b16 %v301
      %v1101 = vunpack.c.l.b16 %v302
      %v1102 = vunpack.c.l.b16 %v303
      %v1103 = vunpack.c.l.b16 %v304
      %v1104 = vunpack.c.l.b16 %v305
      %v1105 = vunpack.c.l.b16 %v306
      %v1106 = vunpack.c.l.b16 %v307
      %v1107 = vunpack.c.l.b16 %v308
      %v1108 = vunpack.c.l.b16 %v309
      %v1109 = vunpack.c.l.b16 %v310
      %v1110 = vunpack.c.l.b16 %v311
      %v1111 = vunpack.c.l.b16 %v312
      %v1112 = vunpack.c.l.b16 %v313
      %v1113 = vunpack.c.l.b16 %v314
      %v1114 = vunpack.c.l.b16 %v315
      %v1115 = vunpack.c.l.b16 %v316
      %v1116 = vunpack.c.l.b16 %v317
      %v1117 = vunpack.c.l.b16 %v318
      %v1118 = vunpack.c.l.b16 %v319
      %v1119 = vunpack.c.l.b16 %v320
      %v1120 = vunpack.c.l.b16 %v321
      %v1121 = vunpack.c.l.b16 %v322
      %v1122 = vunpack.c.l.b16 %v323
      %v1123 = vunpack.c.l.b16 %v324
      %v1124 = vunpack.c.l.b16 %v325
      %v1125 = vpack.c.b16 %v1087, %v1086
      %v1126 = vpack.c.b16 %v1089, %v1088
      %v1127 = vpack.c.b16 %v1091, %v1090
      %v1128 = vpack.c.b16 %v1093, %v1092
      %v1129 = vpack.c.b16 %v1095, %v1094
      %v1130 = vpack.c.b16 %v1097, %v1096
      %v1131 = vpack.c.b16 %v1099, %v1098
      %v1132 = vpack.c.b16 %v1101, %v1100
      %v1133 = vpack.c.b16 %v1103, %v1102
      %v1134 = vpack.c.b16 %v1105, %v1104
      %v1135 = vpack.c.b16 %v1107, %v1106
      %v1136 = vpack.c.b16 %v1109, %v1108
      %v1137 = vpack.c.b16 %v1111, %v1110
      %v1138 = vpack.c.b16 %v1113, %v1112
      %v1139 = vpack.c.b16 %v1115, %v1114
      %v1140 = vpack.c.b16 %v1117, %v1116
      %v1141 = vpack.c.b16 %v1119, %v1118
      %v1142 = vpack.c.b16 %v1121, %v1120
      %v1143 = vpack.c.b16 %v1123, %v1122
      %v1144 = vpack.c.b16 %v1124, %v1124
      %v1147 = vunpack.c.l.b16 %v1045
      %v1148 = vunpack.c.l.b16 %v1046
      %v1149 = vpack.c.b16 %v1148, %v1147
      %v1152 = vsel %vm435, %v1125, 0
      %v1155 = vsel %vm435, %v1126, 0
      %v1158 = vsel %vm435, %v1127, 0
      %v1161 = vsel %vm435, %v1128, 0
      %v1164 = vsel %vm435, %v1129, 0
      %v1167 = vsel %vm435, %v1130, 0
      %v1170 = vsel %vm435, %v1131, 0
      %v1173 = vsel %vm435, %v1132, 0
      %v1176 = vsel %vm435, %v1133, 0
      %v1179 = vsel %vm435, %v1134, 0
      %v1182 = vsel %vm435, %v1135, 0
      %v1185 = vsel %vm435, %v1136, 0
      %v1188 = vsel %vm435, %v1137, 0
      %v1191 = vsel %vm435, %v1138, 0
      %v1194 = vsel %vm435, %v1139, 0
      %v1197 = vsel %vm435, %v1140, 0
      %v1200 = vsel %vm435, %v1141, 0
      %v1203 = vsel %vm435, %v1142, 0
      %v1206 = vsel %vm435, %v1143, 0
      %v1209 = vsel %vm435, %v1144, 0
      %1211 = vmatprep.subr.bf16.mxu0 0
      %1212 = vmatpush1.bf16.msra.mxu0 %v1149
      %1213 = vmatprep.subr.bf16.mxu0 0
      %1214 = vmatpush1.bf16.msra.mxu0 0
      %1215 = vmatprep.subr.bf16.mxu0 0
      %1216 = vmatpush1.bf16.msra.mxu0 0
      %1217 = vmatprep.subr.bf16.mxu0 0
      %1218 = vmatpush1.bf16.msra.mxu0 0
      %1219 = vmatprep.subr.bf16.mxu0 0
      %1220 = vmatpush1.bf16.msra.mxu0 0
      %1221 = vmatprep.subr.bf16.mxu0 0
      %1222 = vmatpush1.bf16.msra.mxu0 0
      %1223 = vmatprep.subr.bf16.mxu0 0
      %1224 = vmatpush1.bf16.msra.mxu0 0
      %1225 = vmatprep.subr.bf16.mxu0 0
      %1226 = vmatpush1.bf16.msra.mxu0 0
      %1227 = vmatprep.subr.bf16.mxu0 0
      %1228 = vmatpush1.bf16.msra.mxu0 0
      %1229 = vmatprep.subr.bf16.mxu0 0
      %1230 = vmatpush1.bf16.msra.mxu0 0
      %1231 = vmatprep.subr.bf16.mxu0 0
      %1232 = vmatpush1.bf16.msra.mxu0 0
      %1233 = vmatprep.subr.bf16.mxu0 0
      %1234 = vmatpush1.bf16.msra.mxu0 0
      %1235 = vmatprep.subr.bf16.mxu0 0
      %1236 = vmatpush1.bf16.msra.mxu0 0
      %1237 = vmatprep.subr.bf16.mxu0 0
      %1238 = vmatpush1.bf16.msra.mxu0 0
      %1239 = vmatprep.subr.bf16.mxu0 0
      %1240 = vmatpush1.bf16.msra.mxu0 0
      %1241 = vmatprep.subr.bf16.mxu0 0
      %1242 = vmatpush1.bf16.msra.mxu0 0
      %1243 = vmatprep.mubr.bf16.mxu0 0
      %1244 = vmatmul.mubr.bf16.gmra.mrb[0].mxu0 %v1152
      %v1245 = vpop.f32.mrb[0].mxu0
      %v1246 = vadd.f32 0.0, %v1245
      %v1247 = vpop.f32.mrb[0].mxu0
      %v1248 = vpop.f32.mrb[0].mxu0
      %v1249 = vadd.f32 0.0, %v1248
      %v1250 = vpop.f32.mrb[0].mxu0
      %1251 = vmatprep.mubr.bf16.mxu0 0
      %1252 = vmatmul.mubr.bf16.gmra.mrb[0].mxu0 %v1155
      %v1253 = vpop.f32.mrb[0].mxu0
      %v1254 = vadd.f32 0.0, %v1253
      %v1255 = vpop.f32.mrb[0].mxu0
      %v1256 = vpop.f32.mrb[0].mxu0
      %v1257 = vadd.f32 0.0, %v1256
      %v1258 = vpop.f32.mrb[0].mxu0
      %1259 = vmatprep.mubr.bf16.mxu0 0
      %1260 = vmatmul.mubr.bf16.gmra.mrb[0].mxu0 %v1158
      %v1261 = vpop.f32.mrb[0].mxu0
      %v1262 = vadd.f32 0.0, %v1261
      %v1263 = vpop.f32.mrb[0].mxu0
      %v1264 = vpop.f32.mrb[0].mxu0
      %v1265 = vadd.f32 0.0, %v1264
      %v1266 = vpop.f32.mrb[0].mxu0
      %1267 = vmatprep.mubr.bf16.mxu0 0
      %1268 = vmatmul.mubr.bf16.gmra.mrb[0].mxu0 %v1161
      %v1269 = vpop.f32.mrb[0].mxu0
      %v1270 = vadd.f32 0.0, %v1269
      %v1271 = vpop.f32.mrb[0].mxu0
      %v1272 = vpop.f32.mrb[0].mxu0
      %v1273 = vadd.f32 0.0, %v1272
      %v1274 = vpop.f32.mrb[0].mxu0
      %1275 = vmatprep.mubr.bf16.mxu0 0
      %1276 = vmatmul.mubr.bf16.gmra.mrb[0].mxu0 %v1164
      %v1277 = vpop.f32.mrb[0].mxu0
      %v1278 = vadd.f32 0.0, %v1277
      %v1279 = vpop.f32.mrb[0].mxu0
      %v1280 = vpop.f32.mrb[0].mxu0
      %v1281 = vadd.f32 0.0, %v1280
      %v1282 = vpop.f32.mrb[0].mxu0
      %1283 = vmatprep.mubr.bf16.mxu0 0
      %1284 = vmatmul.mubr.bf16.gmra.mrb[0].mxu0 %v1167
      %v1285 = vpop.f32.mrb[0].mxu0
      %v1286 = vadd.f32 0.0, %v1285
      %v1287 = vpop.f32.mrb[0].mxu0
      %v1288 = vpop.f32.mrb[0].mxu0
      %v1289 = vadd.f32 0.0, %v1288
      %v1290 = vpop.f32.mrb[0].mxu0
      %1291 = vmatprep.mubr.bf16.mxu0 0
      %1292 = vmatmul.mubr.bf16.gmra.mrb[0].mxu0 %v1170
      %v1293 = vpop.f32.mrb[0].mxu0
      %v1294 = vadd.f32 0.0, %v1293
      %v1295 = vpop.f32.mrb[0].mxu0
      %v1296 = vpop.f32.mrb[0].mxu0
      %v1297 = vadd.f32 0.0, %v1296
      %v1298 = vpop.f32.mrb[0].mxu0
      %1299 = vmatprep.mubr.bf16.mxu0 0
      %1300 = vmatmul.mubr.bf16.gmra.mrb[0].mxu0 %v1173
      %v1301 = vpop.f32.mrb[0].mxu0
      %v1302 = vadd.f32 0.0, %v1301
      %v1303 = vpop.f32.mrb[0].mxu0
      %v1304 = vpop.f32.mrb[0].mxu0
      %v1305 = vadd.f32 0.0, %v1304
      %v1306 = vpop.f32.mrb[0].mxu0
      %1307 = vmatprep.mubr.bf16.mxu0 0
      %1308 = vmatmul.mubr.bf16.gmra.mrb[0].mxu0 %v1176
      %v1309 = vpop.f32.mrb[0].mxu0
      %v1310 = vadd.f32 0.0, %v1309
      %v1311 = vpop.f32.mrb[0].mxu0
      %v1312 = vpop.f32.mrb[0].mxu0
      %v1313 = vadd.f32 0.0, %v1312
      %v1314 = vpop.f32.mrb[0].mxu0
      %1315 = vmatprep.mubr.bf16.mxu0 0
      %1316 = vmatmul.mubr.bf16.gmra.mrb[0].mxu0 %v1179
      %v1317 = vpop.f32.mrb[0].mxu0
      %v1318 = vadd.f32 0.0, %v1317
      %v1319 = vpop.f32.mrb[0].mxu0
      %v1320 = vpop.f32.mrb[0].mxu0
      %v1321 = vadd.f32 0.0, %v1320
      %v1322 = vpop.f32.mrb[0].mxu0
      %1323 = vmatprep.mubr.bf16.mxu0 0
      %1324 = vmatmul.mubr.bf16.gmra.mrb[0].mxu0 %v1182
      %v1325 = vpop.f32.mrb[0].mxu0
      %v1326 = vadd.f32 0.0, %v1325
      %v1327 = vpop.f32.mrb[0].mxu0
      %v1328 = vpop.f32.mrb[0].mxu0
      %v1329 = vadd.f32 0.0, %v1328
      %v1330 = vpop.f32.mrb[0].mxu0
      %1331 = vmatprep.mubr.bf16.mxu0 0
      %1332 = vmatmul.mubr.bf16.gmra.mrb[0].mxu0 %v1185
      %v1333 = vpop.f32.mrb[0].mxu0
      %v1334 = vadd.f32 0.0, %v1333
      %v1335 = vpop.f32.mrb[0].mxu0
      %v1336 = vpop.f32.mrb[0].mxu0
      %v1337 = vadd.f32 0.0, %v1336
      %v1338 = vpop.f32.mrb[0].mxu0
      %1339 = vmatprep.mubr.bf16.mxu0 0
      %1340 = vmatmul.mubr.bf16.gmra.mrb[0].mxu0 %v1188
      %v1341 = vpop.f32.mrb[0].mxu0
      %v1342 = vadd.f32 0.0, %v1341
      %v1343 = vpop.f32.mrb[0].mxu0
      %v1344 = vpop.f32.mrb[0].mxu0
      %v1345 = vadd.f32 0.0, %v1344
      %v1346 = vpop.f32.mrb[0].mxu0
      %1347 = vmatprep.mubr.bf16.mxu0 0
      %1348 = vmatmul.mubr.bf16.gmra.mrb[0].mxu0 %v1191
      %v1349 = vpop.f32.mrb[0].mxu0
      %v1350 = vadd.f32 0.0, %v1349
      %v1351 = vpop.f32.mrb[0].mxu0
      %v1352 = vpop.f32.mrb[0].mxu0
      %v1353 = vadd.f32 0.0, %v1352
      %v1354 = vpop.f32.mrb[0].mxu0
      %1355 = vmatprep.mubr.bf16.mxu0 0
      %1356 = vmatmul.mubr.bf16.gmra.mrb[0].mxu0 %v1194
      %v1357 = vpop.f32.mrb[0].mxu0
      %v1358 = vadd.f32 0.0, %v1357
      %v1359 = vpop.f32.mrb[0].mxu0
      %v1360 = vpop.f32.mrb[0].mxu0
      %v1361 = vadd.f32 0.0, %v1360
      %v1362 = vpop.f32.mrb[0].mxu0
      %1363 = vmatprep.mubr.bf16.mxu0 0
      %1364 = vmatmul.mubr.bf16.gmra.mrb[0].mxu0 %v1197
      %v1365 = vpop.f32.mrb[0].mxu0
      %v1366 = vadd.f32 0.0, %v1365
      %v1367 = vpop.f32.mrb[0].mxu0
      %v1368 = vpop.f32.mrb[0].mxu0
      %v1369 = vadd.f32 0.0, %v1368
      %v1370 = vpop.f32.mrb[0].mxu0
      %1371 = vmatprep.mubr.bf16.mxu0 0
      %1372 = vmatmul.mubr.bf16.gmra.mrb[0].mxu0 %v1200
      %v1373 = vpop.f32.mrb[0].mxu0
      %v1374 = vadd.f32 0.0, %v1373
      %v1375 = vpop.f32.mrb[0].mxu0
      %v1376 = vpop.f32.mrb[0].mxu0
      %v1377 = vadd.f32 0.0, %v1376
      %v1378 = vpop.f32.mrb[0].mxu0
      %1379 = vmatprep.mubr.bf16.mxu0 0
      %1380 = vmatmul.mubr.bf16.gmra.mrb[0].mxu0 %v1203
      %v1381 = vpop.f32.mrb[0].mxu0
      %v1382 = vadd.f32 0.0, %v1381
      %v1383 = vpop.f32.mrb[0].mxu0
      %v1384 = vpop.f32.mrb[0].mxu0
      %v1385 = vadd.f32 0.0, %v1384
      %v1386 = vpop.f32.mrb[0].mxu0
      %1387 = vmatprep.mubr.bf16.mxu0 0
      %1388 = vmatmul.mubr.bf16.gmra.mrb[0].mxu0 %v1206
      %v1389 = vpop.f32.mrb[0].mxu0
      %v1390 = vadd.f32 0.0, %v1389
      %v1391 = vpop.f32.mrb[0].mxu0
      %v1392 = vpop.f32.mrb[0].mxu0
      %v1393 = vadd.f32 0.0, %v1392
      %v1394 = vpop.f32.mrb[0].mxu0
      %1395 = vmatprep.mubr.bf16.mxu0 0
      %1396 = vmatmul.mubr.bf16.gmra.mrb[0].mxu0 %v1209
      %v1397 = vpop.f32.mrb[0].mxu0
      %v1398 = vadd.f32 0.0, %v1397
      %v1399 = vpop.f32.mrb[0].mxu0
      %v1400 = vpop.f32.mrb[0].mxu0
      %v1401 = vpop.f32.mrb[0].mxu0
      %1402 = vdwg.mxu0
      %v1403 = vadd.f32 %v887, %v1246
      %v1404 = vadd.f32 %v890, %v1249
      %v1405 = vadd.f32 %v895, %v1254
      %v1406 = vadd.f32 %v898, %v1257
      %v1407 = vadd.f32 %v903, %v1262
      %v1408 = vadd.f32 %v906, %v1265
      %v1409 = vadd.f32 %v911, %v1270
      %v1410 = vadd.f32 %v914, %v1273
      %v1411 = vadd.f32 %v919, %v1278
      %v1412 = vadd.f32 %v922, %v1281
      %v1413 = vadd.f32 %v927, %v1286
      %v1414 = vadd.f32 %v930, %v1289
      %v1415 = vadd.f32 %v935, %v1294
      %v1416 = vadd.f32 %v938, %v1297
      %v1417 = vadd.f32 %v943, %v1302
      %v1418 = vadd.f32 %v946, %v1305
      %v1419 = vadd.f32 %v951, %v1310
      %v1420 = vadd.f32 %v954, %v1313
      %v1421 = vadd.f32 %v959, %v1318
      %v1422 = vadd.f32 %v962, %v1321
      %v1423 = vadd.f32 %v967, %v1326
      %v1424 = vadd.f32 %v970, %v1329
      %v1425 = vadd.f32 %v975, %v1334
      %v1426 = vadd.f32 %v978, %v1337
      %v1427 = vadd.f32 %v983, %v1342
      %v1428 = vadd.f32 %v986, %v1345
      %v1429 = vadd.f32 %v991, %v1350
      %v1430 = vadd.f32 %v994, %v1353
      %v1431 = vadd.f32 %v999, %v1358
      %v1432 = vadd.f32 %v1002, %v1361
      %v1433 = vadd.f32 %v1007, %v1366
      %v1434 = vadd.f32 %v1010, %v1369
      %v1435 = vadd.f32 %v1015, %v1374
      %v1436 = vadd.f32 %v1018, %v1377
      %v1437 = vadd.f32 %v1023, %v1382
      %v1438 = vadd.f32 %v1026, %v1385
      %v1439 = vadd.f32 %v1031, %v1390
      %v1440 = vadd.f32 %v1034, %v1393
      %v1441 = vadd.f32 %v1039, %v1398
      %v1442 = vadd.f32 %v1403, 0.0
      %v1443 = vadd.f32 %v1404, 0.0
      %v1444 = vadd.f32 %v1405, 0.0
      %v1445 = vadd.f32 %v1406, 0.0
      %v1446 = vadd.f32 %v1407, 0.0
      %v1447 = vadd.f32 %v1408, 0.0
      %v1448 = vadd.f32 %v1409, 0.0
      %v1449 = vadd.f32 %v1410, 0.0
      %v1450 = vadd.f32 %v1411, 0.0
      %v1451 = vadd.f32 %v1412, 0.0
      %v1452 = vadd.f32 %v1413, 0.0
      %v1453 = vadd.f32 %v1414, 0.0
      %v1454 = vadd.f32 %v1415, 0.0
      %v1455 = vadd.f32 %v1416, 0.0
      %v1456 = vadd.f32 %v1417, 0.0
      %v1457 = vadd.f32 %v1418, 0.0
      %v1458 = vadd.f32 %v1419, 0.0
      %v1459 = vadd.f32 %v1420, 0.0
      %v1460 = vadd.f32 %v1421, 0.0
      %v1461 = vadd.f32 %v1422, 0.0
      %v1462 = vadd.f32 %v1423, 0.0
      %v1463 = vadd.f32 %v1424, 0.0
      %v1464 = vadd.f32 %v1425, 0.0
      %v1465 = vadd.f32 %v1426, 0.0
      %v1466 = vadd.f32 %v1427, 0.0
      %v1467 = vadd.f32 %v1428, 0.0
      %v1468 = vadd.f32 %v1429, 0.0
      %v1469 = vadd.f32 %v1430, 0.0
      %v1470 = vadd.f32 %v1431, 0.0
      %v1471 = vadd.f32 %v1432, 0.0
      %v1472 = vadd.f32 %v1433, 0.0
      %v1473 = vadd.f32 %v1434, 0.0
      %v1474 = vadd.f32 %v1435, 0.0
      %v1475 = vadd.f32 %v1436, 0.0
      %v1476 = vadd.f32 %v1437, 0.0
      %v1477 = vadd.f32 %v1438, 0.0
      %v1478 = vadd.f32 %v1439, 0.0
      %v1479 = vadd.f32 %v1440, 0.0
      %v1480 = vadd.f32 %v1441, 0.0
      %s1481 = scalar_lea.vmem %s1, 8
      %v1482 = vld [vmem:[%s1481] sm:$0xf]
      %v1483 = vld [vmem:[%s1481 + $0x4] sm:$0xf]
      %s1484 = scalar_lea.vmem %s1, 32
      %v1485 = vld [vmem:[%s1484] sm:$0xf]
      %v1486 = vld [vmem:[%s1484 + $0x4] sm:$0xf]
      %v1489 = vunpack.c.l.b16 %v1485
      %v1490 = vunpack.c.l.b16 %v1486
      %v1491 = vpack.c.b16 %v1490, %v1489
      %1493 = vmatprep.subr.bf16.mxu0 0
      %1494 = vmatpush1.bf16.msra.mxu0 %v1491
      %1495 = vmatprep.subr.bf16.mxu0 0
      %1496 = vmatpush1.bf16.msra.mxu0 0
      %1497 = vmatprep.subr.bf16.mxu0 0
      %1498 = vmatpush1.bf16.msra.mxu0 0
      %1499 = vmatprep.subr.bf16.mxu0 0
      %1500 = vmatpush1.bf16.msra.mxu0 0
      %1501 = vmatprep.subr.bf16.mxu0 0
      %1502 = vmatpush1.bf16.msra.mxu0 0
      %1503 = vmatprep.subr.bf16.mxu0 0
      %1504 = vmatpush1.bf16.msra.mxu0 0
      %1505 = vmatprep.subr.bf16.mxu0 0
      %1506 = vmatpush1.bf16.msra.mxu0 0
      %1507 = vmatprep.subr.bf16.mxu0 0
      %1508 = vmatpush1.bf16.msra.mxu0 0
      %1509 = vmatprep.subr.bf16.mxu0 0
      %1510 = vmatpush1.bf16.msra.mxu0 0
      %1511 = vmatprep.subr.bf16.mxu0 0
      %1512 = vmatpush1.bf16.msra.mxu0 0
      %1513 = vmatprep.subr.bf16.mxu0 0
      %1514 = vmatpush1.bf16.msra.mxu0 0
      %1515 = vmatprep.subr.bf16.mxu0 0
      %1516 = vmatpush1.bf16.msra.mxu0 0
      %1517 = vmatprep.subr.bf16.mxu0 0
      %1518 = vmatpush1.bf16.msra.mxu0 0
      %1519 = vmatprep.subr.bf16.mxu0 0
      %1520 = vmatpush1.bf16.msra.mxu0 0
      %1521 = vmatprep.subr.bf16.mxu0 0
      %1522 = vmatpush1.bf16.msra.mxu0 0
      %1523 = vmatprep.subr.bf16.mxu0 0
      %1524 = vmatpush1.bf16.msra.mxu0 0
      %1525 = vmatprep.mubr.bf16.mxu0 0
      %1526 = vmatmul.mubr.bf16.gmra.mrb[0].mxu0 %v437
      %v1527 = vpop.f32.mrb[0].mxu0
      %v1528 = vadd.f32 0.0, %v1527
      %v1529 = vpop.f32.mrb[0].mxu0
      %v1530 = vpop.f32.mrb[0].mxu0
      %v1531 = vadd.f32 0.0, %v1530
      %v1532 = vpop.f32.mrb[0].mxu0
      %1533 = vmatprep.mubr.bf16.mxu0 0
      %1534 = vmatmul.mubr.bf16.gmra.mrb[0].mxu0 %v440
      %v1535 = vpop.f32.mrb[0].mxu0
      %v1536 = vadd.f32 0.0, %v1535
      %v1537 = vpop.f32.mrb[0].mxu0
      %v1538 = vpop.f32.mrb[0].mxu0
      %v1539 = vadd.f32 0.0, %v1538
      %v1540 = vpop.f32.mrb[0].mxu0
      %1541 = vmatprep.mubr.bf16.mxu0 0
      %1542 = vmatmul.mubr.bf16.gmra.mrb[0].mxu0 %v443
      %v1543 = vpop.f32.mrb[0].mxu0
      %v1544 = vadd.f32 0.0, %v1543
      %v1545 = vpop.f32.mrb[0].mxu0
      %v1546 = vpop.f32.mrb[0].mxu0
      %v1547 = vadd.f32 0.0, %v1546
      %v1548 = vpop.f32.mrb[0].mxu0
      %1549 = vmatprep.mubr.bf16.mxu0 0
      %1550 = vmatmul.mubr.bf16.gmra.mrb[0].mxu0 %v446
      %v1551 = vpop.f32.mrb[0].mxu0
      %v1552 = vadd.f32 0.0, %v1551
      %v1553 = vpop.f32.mrb[0].mxu0
      %v1554 = vpop.f32.mrb[0].mxu0
      %v1555 = vadd.f32 0.0, %v1554
      %v1556 = vpop.f32.mrb[0].mxu0
      %1557 = vmatprep.mubr.bf16.mxu0 0
      %1558 = vmatmul.mubr.bf16.gmra.mrb[0].mxu0 %v449
      %v1559 = vpop.f32.mrb[0].mxu0
      %v1560 = vadd.f32 0.0, %v1559
      %v1561 = vpop.f32.mrb[0].mxu0
      %v1562 = vpop.f32.mrb[0].mxu0
      %v1563 = vadd.f32 0.0, %v1562
      %v1564 = vpop.f32.mrb[0].mxu0
      %1565 = vmatprep.mubr.bf16.mxu0 0
      %1566 = vmatmul.mubr.bf16.gmra.mrb[0].mxu0 %v452
      %v1567 = vpop.f32.mrb[0].mxu0
      %v1568 = vadd.f32 0.0, %v1567
      %v1569 = vpop.f32.mrb[0].mxu0
      %v1570 = vpop.f32.mrb[0].mxu0
      %v1571 = vadd.f32 0.0, %v1570
      %v1572 = vpop.f32.mrb[0].mxu0
      %1573 = vmatprep.mubr.bf16.mxu0 0
      %1574 = vmatmul.mubr.bf16.gmra.mrb[0].mxu0 %v455
      %v1575 = vpop.f32.mrb[0].mxu0
      %v1576 = vadd.f32 0.0, %v1575
      %v1577 = vpop.f32.mrb[0].mxu0
      %v1578 = vpop.f32.mrb[0].mxu0
      %v1579 = vadd.f32 0.0, %v1578
      %v1580 = vpop.f32.mrb[0].mxu0
      %1581 = vmatprep.mubr.bf16.mxu0 0
      %1582 = vmatmul.mubr.bf16.gmra.mrb[0].mxu0 %v458
      %v1583 = vpop.f32.mrb[0].mxu0
      %v1584 = vadd.f32 0.0, %v1583
      %v1585 = vpop.f32.mrb[0].mxu0
      %v1586 = vpop.f32.mrb[0].mxu0
      %v1587 = vadd.f32 0.0, %v1586
      %v1588 = vpop.f32.mrb[0].mxu0
      %1589 = vmatprep.mubr.bf16.mxu0 0
      %1590 = vmatmul.mubr.bf16.gmra.mrb[0].mxu0 %v461
      %v1591 = vpop.f32.mrb[0].mxu0
      %v1592 = vadd.f32 0.0, %v1591
      %v1593 = vpop.f32.mrb[0].mxu0
      %v1594 = vpop.f32.mrb[0].mxu0
      %v1595 = vadd.f32 0.0, %v1594
      %v1596 = vpop.f32.mrb[0].mxu0
      %1597 = vmatprep.mubr.bf16.mxu0 0
      %1598 = vmatmul.mubr.bf16.gmra.mrb[0].mxu0 %v464
      %v1599 = vpop.f32.mrb[0].mxu0
      %v1600 = vadd.f32 0.0, %v1599
      %v1601 = vpop.f32.mrb[0].mxu0
      %v1602 = vpop.f32.mrb[0].mxu0
      %v1603 = vadd.f32 0.0, %v1602
      %v1604 = vpop.f32.mrb[0].mxu0
      %1605 = vmatprep.mubr.bf16.mxu0 0
      %1606 = vmatmul.mubr.bf16.gmra.mrb[0].mxu0 %v467
      %v1607 = vpop.f32.mrb[0].mxu0
      %v1608 = vadd.f32 0.0, %v1607
      %v1609 = vpop.f32.mrb[0].mxu0
      %v1610 = vpop.f32.mrb[0].mxu0
      %v1611 = vadd.f32 0.0, %v1610
      %v1612 = vpop.f32.mrb[0].mxu0
      %1613 = vmatprep.mubr.bf16.mxu0 0
      %1614 = vmatmul.mubr.bf16.gmra.mrb[0].mxu0 %v470
      %v1615 = vpop.f32.mrb[0].mxu0
      %v1616 = vadd.f32 0.0, %v1615
      %v1617 = vpop.f32.mrb[0].mxu0
      %v1618 = vpop.f32.mrb[0].mxu0
      %v1619 = vadd.f32 0.0, %v1618
      %v1620 = vpop.f32.mrb[0].mxu0
      %1621 = vmatprep.mubr.bf16.mxu0 0
      %1622 = vmatmul.mubr.bf16.gmra.mrb[0].mxu0 %v473
      %v1623 = vpop.f32.mrb[0].mxu0
      %v1624 = vadd.f32 0.0, %v1623
      %v1625 = vpop.f32.mrb[0].mxu0
      %v1626 = vpop.f32.mrb[0].mxu0
      %v1627 = vadd.f32 0.0, %v1626
      %v1628 = vpop.f32.mrb[0].mxu0
      %1629 = vmatprep.mubr.bf16.mxu0 0
      %1630 = vmatmul.mubr.bf16.gmra.mrb[0].mxu0 %v476
      %v1631 = vpop.f32.mrb[0].mxu0
      %v1632 = vadd.f32 0.0, %v1631
      %v1633 = vpop.f32.mrb[0].mxu0
      %v1634 = vpop.f32.mrb[0].mxu0
      %v1635 = vadd.f32 0.0, %v1634
      %v1636 = vpop.f32.mrb[0].mxu0
      %1637 = vmatprep.mubr.bf16.mxu0 0
      %1638 = vmatmul.mubr.bf16.gmra.mrb[0].mxu0 %v479
      %v1639 = vpop.f32.mrb[0].mxu0
      %v1640 = vadd.f32 0.0, %v1639
      %v1641 = vpop.f32.mrb[0].mxu0
      %v1642 = vpop.f32.mrb[0].mxu0
      %v1643 = vadd.f32 0.0, %v1642
      %v1644 = vpop.f32.mrb[0].mxu0
      %1645 = vmatprep.mubr.bf16.mxu0 0
      %1646 = vmatmul.mubr.bf16.gmra.mrb[0].mxu0 %v482
      %v1647 = vpop.f32.mrb[0].mxu0
      %v1648 = vadd.f32 0.0, %v1647
      %v1649 = vpop.f32.mrb[0].mxu0
      %v1650 = vpop.f32.mrb[0].mxu0
      %v1651 = vadd.f32 0.0, %v1650
      %v1652 = vpop.f32.mrb[0].mxu0
      %1653 = vmatprep.mubr.bf16.mxu0 0
      %1654 = vmatmul.mubr.bf16.gmra.mrb[0].mxu0 %v485
      %v1655 = vpop.f32.mrb[0].mxu0
      %v1656 = vadd.f32 0.0, %v1655
      %v1657 = vpop.f32.mrb[0].mxu0
      %v1658 = vpop.f32.mrb[0].mxu0
      %v1659 = vadd.f32 0.0, %v1658
      %v1660 = vpop.f32.mrb[0].mxu0
      %1661 = vmatprep.mubr.bf16.mxu0 0
      %1662 = vmatmul.mubr.bf16.gmra.mrb[0].mxu0 %v488
      %v1663 = vpop.f32.mrb[0].mxu0
      %v1664 = vadd.f32 0.0, %v1663
      %v1665 = vpop.f32.mrb[0].mxu0
      %v1666 = vpop.f32.mrb[0].mxu0
      %v1667 = vadd.f32 0.0, %v1666
      %v1668 = vpop.f32.mrb[0].mxu0
      %1669 = vmatprep.mubr.bf16.mxu0 0
      %1670 = vmatmul.mubr.bf16.gmra.mrb[0].mxu0 %v491
      %v1671 = vpop.f32.mrb[0].mxu0
      %v1672 = vadd.f32 0.0, %v1671
      %v1673 = vpop.f32.mrb[0].mxu0
      %v1674 = vpop.f32.mrb[0].mxu0
      %v1675 = vadd.f32 0.0, %v1674
      %v1676 = vpop.f32.mrb[0].mxu0
      %1677 = vmatprep.mubr.bf16.mxu0 0
      %1678 = vmatmul.mubr.bf16.gmra.mrb[0].mxu0 %v494
      %v1679 = vpop.f32.mrb[0].mxu0
      %v1680 = vadd.f32 0.0, %v1679
      %v1681 = vpop.f32.mrb[0].mxu0
      %v1682 = vpop.f32.mrb[0].mxu0
      %v1683 = vpop.f32.mrb[0].mxu0
      %1684 = vdwg.mxu0
      %v1687 = vunpack.c.l.b16 %v1482
      %v1688 = vunpack.c.l.b16 %v1483
      %v1689 = vpack.c.b16 %v1688, %v1687
      %1691 = vmatprep.subr.bf16.mxu0 0
      %1692 = vmatpush1.bf16.msra.mxu0 %v1689
      %1693 = vmatprep.subr.bf16.mxu0 0
      %1694 = vmatpush1.bf16.msra.mxu0 0
      %1695 = vmatprep.subr.bf16.mxu0 0
      %1696 = vmatpush1.bf16.msra.mxu0 0
      %1697 = vmatprep.subr.bf16.mxu0 0
      %1698 = vmatpush1.bf16.msra.mxu0 0
      %1699 = vmatprep.subr.bf16.mxu0 0
      %1700 = vmatpush1.bf16.msra.mxu0 0
      %1701 = vmatprep.subr.bf16.mxu0 0
      %1702 = vmatpush1.bf16.msra.mxu0 0
      %1703 = vmatprep.subr.bf16.mxu0 0
      %1704 = vmatpush1.bf16.msra.mxu0 0
      %1705 = vmatprep.subr.bf16.mxu0 0
      %1706 = vmatpush1.bf16.msra.mxu0 0
      %1707 = vmatprep.subr.bf16.mxu0 0
      %1708 = vmatpush1.bf16.msra.mxu0 0
      %1709 = vmatprep.subr.bf16.mxu0 0
      %1710 = vmatpush1.bf16.msra.mxu0 0
      %1711 = vmatprep.subr.bf16.mxu0 0
      %1712 = vmatpush1.bf16.msra.mxu0 0
      %1713 = vmatprep.subr.bf16.mxu0 0
      %1714 = vmatpush1.bf16.msra.mxu0 0
      %1715 = vmatprep.subr.bf16.mxu0 0
      %1716 = vmatpush1.bf16.msra.mxu0 0
      %1717 = vmatprep.subr.bf16.mxu0 0
      %1718 = vmatpush1.bf16.msra.mxu0 0
      %1719 = vmatprep.subr.bf16.mxu0 0
      %1720 = vmatpush1.bf16.msra.mxu0 0
      %1721 = vmatprep.subr.bf16.mxu0 0
      %1722 = vmatpush1.bf16.msra.mxu0 0
      %1723 = vmatprep.mubr.bf16.mxu0 0
      %1724 = vmatmul.mubr.bf16.gmra.mrb[0].mxu0 %v793
      %v1725 = vpop.f32.mrb[0].mxu0
      %v1726 = vadd.f32 %v1528, %v1725
      %v1727 = vpop.f32.mrb[0].mxu0
      %v1728 = vpop.f32.mrb[0].mxu0
      %v1729 = vadd.f32 %v1531, %v1728
      %v1730 = vpop.f32.mrb[0].mxu0
      %1731 = vmatprep.mubr.bf16.mxu0 0
      %1732 = vmatmul.mubr.bf16.gmra.mrb[0].mxu0 %v796
      %v1733 = vpop.f32.mrb[0].mxu0
      %v1734 = vadd.f32 %v1536, %v1733
      %v1735 = vpop.f32.mrb[0].mxu0
      %v1736 = vpop.f32.mrb[0].mxu0
      %v1737 = vadd.f32 %v1539, %v1736
      %v1738 = vpop.f32.mrb[0].mxu0
      %1739 = vmatprep.mubr.bf16.mxu0 0
      %1740 = vmatmul.mubr.bf16.gmra.mrb[0].mxu0 %v799
      %v1741 = vpop.f32.mrb[0].mxu0
      %v1742 = vadd.f32 %v1544, %v1741
      %v1743 = vpop.f32.mrb[0].mxu0
      %v1744 = vpop.f32.mrb[0].mxu0
      %v1745 = vadd.f32 %v1547, %v1744
      %v1746 = vpop.f32.mrb[0].mxu0
      %1747 = vmatprep.mubr.bf16.mxu0 0
      %1748 = vmatmul.mubr.bf16.gmra.mrb[0].mxu0 %v802
      %v1749 = vpop.f32.mrb[0].mxu0
      %v1750 = vadd.f32 %v1552, %v1749
      %v1751 = vpop.f32.mrb[0].mxu0
      %v1752 = vpop.f32.mrb[0].mxu0
      %v1753 = vadd.f32 %v1555, %v1752
      %v1754 = vpop.f32.mrb[0].mxu0
      %1755 = vmatprep.mubr.bf16.mxu0 0
      %1756 = vmatmul.mubr.bf16.gmra.mrb[0].mxu0 %v805
      %v1757 = vpop.f32.mrb[0].mxu0
      %v1758 = vadd.f32 %v1560, %v1757
      %v1759 = vpop.f32.mrb[0].mxu0
      %v1760 = vpop.f32.mrb[0].mxu0
      %v1761 = vadd.f32 %v1563, %v1760
      %v1762 = vpop.f32.mrb[0].mxu0
      %1763 = vmatprep.mubr.bf16.mxu0 0
      %1764 = vmatmul.mubr.bf16.gmra.mrb[0].mxu0 %v808
      %v1765 = vpop.f32.mrb[0].mxu0
      %v1766 = vadd.f32 %v1568, %v1765
      %v1767 = vpop.f32.mrb[0].mxu0
      %v1768 = vpop.f32.mrb[0].mxu0
      %v1769 = vadd.f32 %v1571, %v1768
      %v1770 = vpop.f32.mrb[0].mxu0
      %1771 = vmatprep.mubr.bf16.mxu0 0
      %1772 = vmatmul.mubr.bf16.gmra.mrb[0].mxu0 %v811
      %v1773 = vpop.f32.mrb[0].mxu0
      %v1774 = vadd.f32 %v1576, %v1773
      %v1775 = vpop.f32.mrb[0].mxu0
      %v1776 = vpop.f32.mrb[0].mxu0
      %v1777 = vadd.f32 %v1579, %v1776
      %v1778 = vpop.f32.mrb[0].mxu0
      %1779 = vmatprep.mubr.bf16.mxu0 0
      %1780 = vmatmul.mubr.bf16.gmra.mrb[0].mxu0 %v814
      %v1781 = vpop.f32.mrb[0].mxu0
      %v1782 = vadd.f32 %v1584, %v1781
      %v1783 = vpop.f32.mrb[0].mxu0
      %v1784 = vpop.f32.mrb[0].mxu0
      %v1785 = vadd.f32 %v1587, %v1784
      %v1786 = vpop.f32.mrb[0].mxu0
      %1787 = vmatprep.mubr.bf16.mxu0 0
      %1788 = vmatmul.mubr.bf16.gmra.mrb[0].mxu0 %v817
      %v1789 = vpop.f32.mrb[0].mxu0
      %v1790 = vadd.f32 %v1592, %v1789
      %v1791 = vpop.f32.mrb[0].mxu0
      %v1792 = vpop.f32.mrb[0].mxu0
      %v1793 = vadd.f32 %v1595, %v1792
      %v1794 = vpop.f32.mrb[0].mxu0
      %1795 = vmatprep.mubr.bf16.mxu0 0
      %1796 = vmatmul.mubr.bf16.gmra.mrb[0].mxu0 %v820
      %v1797 = vpop.f32.mrb[0].mxu0
      %v1798 = vadd.f32 %v1600, %v1797
      %v1799 = vpop.f32.mrb[0].mxu0
      %v1800 = vpop.f32.mrb[0].mxu0
      %v1801 = vadd.f32 %v1603, %v1800
      %v1802 = vpop.f32.mrb[0].mxu0
      %1803 = vmatprep.mubr.bf16.mxu0 0
      %1804 = vmatmul.mubr.bf16.gmra.mrb[0].mxu0 %v823
      %v1805 = vpop.f32.mrb[0].mxu0
      %v1806 = vadd.f32 %v1608, %v1805
      %v1807 = vpop.f32.mrb[0].mxu0
      %v1808 = vpop.f32.mrb[0].mxu0
      %v1809 = vadd.f32 %v1611, %v1808
      %v1810 = vpop.f32.mrb[0].mxu0
      %1811 = vmatprep.mubr.bf16.mxu0 0
      %1812 = vmatmul.mubr.bf16.gmra.mrb[0].mxu0 %v826
      %v1813 = vpop.f32.mrb[0].mxu0
      %v1814 = vadd.f32 %v1616, %v1813
      %v1815 = vpop.f32.mrb[0].mxu0
      %v1816 = vpop.f32.mrb[0].mxu0
      %v1817 = vadd.f32 %v1619, %v1816
      %v1818 = vpop.f32.mrb[0].mxu0
      %1819 = vmatprep.mubr.bf16.mxu0 0
      %1820 = vmatmul.mubr.bf16.gmra.mrb[0].mxu0 %v829
      %v1821 = vpop.f32.mrb[0].mxu0
      %v1822 = vadd.f32 %v1624, %v1821
      %v1823 = vpop.f32.mrb[0].mxu0
      %v1824 = vpop.f32.mrb[0].mxu0
      %v1825 = vadd.f32 %v1627, %v1824
      %v1826 = vpop.f32.mrb[0].mxu0
      %1827 = vmatprep.mubr.bf16.mxu0 0
      %1828 = vmatmul.mubr.bf16.gmra.mrb[0].mxu0 %v832
      %v1829 = vpop.f32.mrb[0].mxu0
      %v1830 = vadd.f32 %v1632, %v1829
      %v1831 = vpop.f32.mrb[0].mxu0
      %v1832 = vpop.f32.mrb[0].mxu0
      %v1833 = vadd.f32 %v1635, %v1832
      %v1834 = vpop.f32.mrb[0].mxu0
      %1835 = vmatprep.mubr.bf16.mxu0 0
      %1836 = vmatmul.mubr.bf16.gmra.mrb[0].mxu0 %v835
      %v1837 = vpop.f32.mrb[0].mxu0
      %v1838 = vadd.f32 %v1640, %v1837
      %v1839 = vpop.f32.mrb[0].mxu0
      %v1840 = vpop.f32.mrb[0].mxu0
      %v1841 = vadd.f32 %v1643, %v1840
      %v1842 = vpop.f32.mrb[0].mxu0
      %1843 = vmatprep.mubr.bf16.mxu0 0
      %1844 = vmatmul.mubr.bf16.gmra.mrb[0].mxu0 %v838
      %v1845 = vpop.f32.mrb[0].mxu0
      %v1846 = vadd.f32 %v1648, %v1845
      %v1847 = vpop.f32.mrb[0].mxu0
      %v1848 = vpop.f32.mrb[0].mxu0
      %v1849 = vadd.f32 %v1651, %v1848
      %v1850 = vpop.f32.mrb[0].mxu0
      %1851 = vmatprep.mubr.bf16.mxu0 0
      %1852 = vmatmul.mubr.bf16.gmra.mrb[0].mxu0 %v841
      %v1853 = vpop.f32.mrb[0].mxu0
      %v1854 = vadd.f32 %v1656, %v1853
      %v1855 = vpop.f32.mrb[0].mxu0
      %v1856 = vpop.f32.mrb[0].mxu0
      %v1857 = vadd.f32 %v1659, %v1856
      %v1858 = vpop.f32.mrb[0].mxu0
      %1859 = vmatprep.mubr.bf16.mxu0 0
      %1860 = vmatmul.mubr.bf16.gmra.mrb[0].mxu0 %v844
      %v1861 = vpop.f32.mrb[0].mxu0
      %v1862 = vadd.f32 %v1664, %v1861
      %v1863 = vpop.f32.mrb[0].mxu0
      %v1864 = vpop.f32.mrb[0].mxu0
      %v1865 = vadd.f32 %v1667, %v1864
      %v1866 = vpop.f32.mrb[0].mxu0
      %1867 = vmatprep.mubr.bf16.mxu0 0
      %1868 = vmatmul.mubr.bf16.gmra.mrb[0].mxu0 %v847
      %v1869 = vpop.f32.mrb[0].mxu0
      %v1870 = vadd.f32 %v1672, %v1869
      %v1871 = vpop.f32.mrb[0].mxu0
      %v1872 = vpop.f32.mrb[0].mxu0
      %v1873 = vadd.f32 %v1675, %v1872
      %v1874 = vpop.f32.mrb[0].mxu0
      %1875 = vmatprep.mubr.bf16.mxu0 0
      %1876 = vmatmul.mubr.bf16.gmra.mrb[0].mxu0 %v850
      %v1877 = vpop.f32.mrb[0].mxu0
      %v1878 = vadd.f32 %v1680, %v1877
      %v1879 = vpop.f32.mrb[0].mxu0
      %v1880 = vpop.f32.mrb[0].mxu0
      %v1881 = vpop.f32.mrb[0].mxu0
      %1882 = vdwg.mxu0
      %s1883 = scalar_lea.vmem %s1, 56
      %v1884 = vld [vmem:[%s1883] sm:$0xf]
      %v1885 = vld [vmem:[%s1883 + $0x4] sm:$0xf]
      %v1888 = vunpack.c.l.b16 %v1884
      %v1889 = vunpack.c.l.b16 %v1885
      %v1890 = vpack.c.b16 %v1889, %v1888
      %1892 = vmatprep.subr.bf16.mxu0 0
      %1893 = vmatpush1.bf16.msra.mxu0 %v1890
      %1894 = vmatprep.subr.bf16.mxu0 0
      %1895 = vmatpush1.bf16.msra.mxu0 0
      %1896 = vmatprep.subr.bf16.mxu0 0
      %1897 = vmatpush1.bf16.msra.mxu0 0
      %1898 = vmatprep.subr.bf16.mxu0 0
      %1899 = vmatpush1.bf16.msra.mxu0 0
      %1900 = vmatprep.subr.bf16.mxu0 0
      %1901 = vmatpush1.bf16.msra.mxu0 0
      %1902 = vmatprep.subr.bf16.mxu0 0
      %1903 = vmatpush1.bf16.msra.mxu0 0
      %1904 = vmatprep.subr.bf16.mxu0 0
      %1905 = vmatpush1.bf16.msra.mxu0 0
      %1906 = vmatprep.subr.bf16.mxu0 0
      %1907 = vmatpush1.bf16.msra.mxu0 0
      %1908 = vmatprep.subr.bf16.mxu0 0
      %1909 = vmatpush1.bf16.msra.mxu0 0
      %1910 = vmatprep.subr.bf16.mxu0 0
      %1911 = vmatpush1.bf16.msra.mxu0 0
      %1912 = vmatprep.subr.bf16.mxu0 0
      %1913 = vmatpush1.bf16.msra.mxu0 0
      %1914 = vmatprep.subr.bf16.mxu0 0
      %1915 = vmatpush1.bf16.msra.mxu0 0
      %1916 = vmatprep.subr.bf16.mxu0 0
      %1917 = vmatpush1.bf16.msra.mxu0 0
      %1918 = vmatprep.subr.bf16.mxu0 0
      %1919 = vmatpush1.bf16.msra.mxu0 0
      %1920 = vmatprep.subr.bf16.mxu0 0
      %1921 = vmatpush1.bf16.msra.mxu0 0
      %1922 = vmatprep.subr.bf16.mxu0 0
      %1923 = vmatpush1.bf16.msra.mxu0 0
      %1924 = vmatprep.mubr.bf16.mxu0 0
      %1925 = vmatmul.mubr.bf16.gmra.mrb[0].mxu0 %v1152
      %v1926 = vpop.f32.mrb[0].mxu0
      %v1927 = vadd.f32 0.0, %v1926
      %v1928 = vpop.f32.mrb[0].mxu0
      %v1929 = vpop.f32.mrb[0].mxu0
      %v1930 = vadd.f32 0.0, %v1929
      %v1931 = vpop.f32.mrb[0].mxu0
      %1932 = vmatprep.mubr.bf16.mxu0 0
      %1933 = vmatmul.mubr.bf16.gmra.mrb[0].mxu0 %v1155
      %v1934 = vpop.f32.mrb[0].mxu0
      %v1935 = vadd.f32 0.0, %v1934
      %v1936 = vpop.f32.mrb[0].mxu0
      %v1937 = vpop.f32.mrb[0].mxu0
      %v1938 = vadd.f32 0.0, %v1937
      %v1939 = vpop.f32.mrb[0].mxu0
      %1940 = vmatprep.mubr.bf16.mxu0 0
      %1941 = vmatmul.mubr.bf16.gmra.mrb[0].mxu0 %v1158
      %v1942 = vpop.f32.mrb[0].mxu0
      %v1943 = vadd.f32 0.0, %v1942
      %v1944 = vpop.f32.mrb[0].mxu0
      %v1945 = vpop.f32.mrb[0].mxu0
      %v1946 = vadd.f32 0.0, %v1945
      %v1947 = vpop.f32.mrb[0].mxu0
      %1948 = vmatprep.mubr.bf16.mxu0 0
      %1949 = vmatmul.mubr.bf16.gmra.mrb[0].mxu0 %v1161
      %v1950 = vpop.f32.mrb[0].mxu0
      %v1951 = vadd.f32 0.0, %v1950
      %v1952 = vpop.f32.mrb[0].mxu0
      %v1953 = vpop.f32.mrb[0].mxu0
      %v1954 = vadd.f32 0.0, %v1953
      %v1955 = vpop.f32.mrb[0].mxu0
      %1956 = vmatprep.mubr.bf16.mxu0 0
      %1957 = vmatmul.mubr.bf16.gmra.mrb[0].mxu0 %v1164
      %v1958 = vpop.f32.mrb[0].mxu0
      %v1959 = vadd.f32 0.0, %v1958
      %v1960 = vpop.f32.mrb[0].mxu0
      %v1961 = vpop.f32.mrb[0].mxu0
      %v1962 = vadd.f32 0.0, %v1961
      %v1963 = vpop.f32.mrb[0].mxu0
      %1964 = vmatprep.mubr.bf16.mxu0 0
      %1965 = vmatmul.mubr.bf16.gmra.mrb[0].mxu0 %v1167
      %v1966 = vpop.f32.mrb[0].mxu0
      %v1967 = vadd.f32 0.0, %v1966
      %v1968 = vpop.f32.mrb[0].mxu0
      %v1969 = vpop.f32.mrb[0].mxu0
      %v1970 = vadd.f32 0.0, %v1969
      %v1971 = vpop.f32.mrb[0].mxu0
      %1972 = vmatprep.mubr.bf16.mxu0 0
      %1973 = vmatmul.mubr.bf16.gmra.mrb[0].mxu0 %v1170
      %v1974 = vpop.f32.mrb[0].mxu0
      %v1975 = vadd.f32 0.0, %v1974
      %v1976 = vpop.f32.mrb[0].mxu0
      %v1977 = vpop.f32.mrb[0].mxu0
      %v1978 = vadd.f32 0.0, %v1977
      %v1979 = vpop.f32.mrb[0].mxu0
      %1980 = vmatprep.mubr.bf16.mxu0 0
      %1981 = vmatmul.mubr.bf16.gmra.mrb[0].mxu0 %v1173
      %v1982 = vpop.f32.mrb[0].mxu0
      %v1983 = vadd.f32 0.0, %v1982
      %v1984 = vpop.f32.mrb[0].mxu0
      %v1985 = vpop.f32.mrb[0].mxu0
      %v1986 = vadd.f32 0.0, %v1985
      %v1987 = vpop.f32.mrb[0].mxu0
      %1988 = vmatprep.mubr.bf16.mxu0 0
      %1989 = vmatmul.mubr.bf16.gmra.mrb[0].mxu0 %v1176
      %v1990 = vpop.f32.mrb[0].mxu0
      %v1991 = vadd.f32 0.0, %v1990
      %v1992 = vpop.f32.mrb[0].mxu0
      %v1993 = vpop.f32.mrb[0].mxu0
      %v1994 = vadd.f32 0.0, %v1993
      %v1995 = vpop.f32.mrb[0].mxu0
      %1996 = vmatprep.mubr.bf16.mxu0 0
      %1997 = vmatmul.mubr.bf16.gmra.mrb[0].mxu0 %v1179
      %v1998 = vpop.f32.mrb[0].mxu0
      %v1999 = vadd.f32 0.0, %v1998
      %v2000 = vpop.f32.mrb[0].mxu0
      %v2001 = vpop.f32.mrb[0].mxu0
      %v2002 = vadd.f32 0.0, %v2001
      %v2003 = vpop.f32.mrb[0].mxu0
      %2004 = vmatprep.mubr.bf16.mxu0 0
      %2005 = vmatmul.mubr.bf16.gmra.mrb[0].mxu0 %v1182
      %v2006 = vpop.f32.mrb[0].mxu0
      %v2007 = vadd.f32 0.0, %v2006
      %v2008 = vpop.f32.mrb[0].mxu0
      %v2009 = vpop.f32.mrb[0].mxu0
      %v2010 = vadd.f32 0.0, %v2009
      %v2011 = vpop.f32.mrb[0].mxu0
      %2012 = vmatprep.mubr.bf16.mxu0 0
      %2013 = vmatmul.mubr.bf16.gmra.mrb[0].mxu0 %v1185
      %v2014 = vpop.f32.mrb[0].mxu0
      %v2015 = vadd.f32 0.0, %v2014
      %v2016 = vpop.f32.mrb[0].mxu0
      %v2017 = vpop.f32.mrb[0].mxu0
      %v2018 = vadd.f32 0.0, %v2017
      %v2019 = vpop.f32.mrb[0].mxu0
      %2020 = vmatprep.mubr.bf16.mxu0 0
      %2021 = vmatmul.mubr.bf16.gmra.mrb[0].mxu0 %v1188
      %v2022 = vpop.f32.mrb[0].mxu0
      %v2023 = vadd.f32 0.0, %v2022
      %v2024 = vpop.f32.mrb[0].mxu0
      %v2025 = vpop.f32.mrb[0].mxu0
      %v2026 = vadd.f32 0.0, %v2025
      %v2027 = vpop.f32.mrb[0].mxu0
      %2028 = vmatprep.mubr.bf16.mxu0 0
      %2029 = vmatmul.mubr.bf16.gmra.mrb[0].mxu0 %v1191
      %v2030 = vpop.f32.mrb[0].mxu0
      %v2031 = vadd.f32 0.0, %v2030
      %v2032 = vpop.f32.mrb[0].mxu0
      %v2033 = vpop.f32.mrb[0].mxu0
      %v2034 = vadd.f32 0.0, %v2033
      %v2035 = vpop.f32.mrb[0].mxu0
      %2036 = vmatprep.mubr.bf16.mxu0 0
      %2037 = vmatmul.mubr.bf16.gmra.mrb[0].mxu0 %v1194
      %v2038 = vpop.f32.mrb[0].mxu0
      %v2039 = vadd.f32 0.0, %v2038
      %v2040 = vpop.f32.mrb[0].mxu0
      %v2041 = vpop.f32.mrb[0].mxu0
      %v2042 = vadd.f32 0.0, %v2041
      %v2043 = vpop.f32.mrb[0].mxu0
      %2044 = vmatprep.mubr.bf16.mxu0 0
      %2045 = vmatmul.mubr.bf16.gmra.mrb[0].mxu0 %v1197
      %v2046 = vpop.f32.mrb[0].mxu0
      %v2047 = vadd.f32 0.0, %v2046
      %v2048 = vpop.f32.mrb[0].mxu0
      %v2049 = vpop.f32.mrb[0].mxu0
      %v2050 = vadd.f32 0.0, %v2049
      %v2051 = vpop.f32.mrb[0].mxu0
      %2052 = vmatprep.mubr.bf16.mxu0 0
      %2053 = vmatmul.mubr.bf16.gmra.mrb[0].mxu0 %v1200
      %v2054 = vpop.f32.mrb[0].mxu0
      %v2055 = vadd.f32 0.0, %v2054
      %v2056 = vpop.f32.mrb[0].mxu0
      %v2057 = vpop.f32.mrb[0].mxu0
      %v2058 = vadd.f32 0.0, %v2057
      %v2059 = vpop.f32.mrb[0].mxu0
      %2060 = vmatprep.mubr.bf16.mxu0 0
      %2061 = vmatmul.mubr.bf16.gmra.mrb[0].mxu0 %v1203
      %v2062 = vpop.f32.mrb[0].mxu0
      %v2063 = vadd.f32 0.0, %v2062
      %v2064 = vpop.f32.mrb[0].mxu0
      %v2065 = vpop.f32.mrb[0].mxu0
      %v2066 = vadd.f32 0.0, %v2065
      %v2067 = vpop.f32.mrb[0].mxu0
      %2068 = vmatprep.mubr.bf16.mxu0 0
      %2069 = vmatmul.mubr.bf16.gmra.mrb[0].mxu0 %v1206
      %v2070 = vpop.f32.mrb[0].mxu0
      %v2071 = vadd.f32 0.0, %v2070
      %v2072 = vpop.f32.mrb[0].mxu0
      %v2073 = vpop.f32.mrb[0].mxu0
      %v2074 = vadd.f32 0.0, %v2073
      %v2075 = vpop.f32.mrb[0].mxu0
      %2076 = vmatprep.mubr.bf16.mxu0 0
      %2077 = vmatmul.mubr.bf16.gmra.mrb[0].mxu0 %v1209
      %v2078 = vpop.f32.mrb[0].mxu0
      %v2079 = vadd.f32 0.0, %v2078
      %v2080 = vpop.f32.mrb[0].mxu0
      %v2081 = vpop.f32.mrb[0].mxu0
      %v2082 = vpop.f32.mrb[0].mxu0
      %2083 = vdwg.mxu0
      %v2084 = vadd.f32 %v1726, %v1927
      %v2085 = vadd.f32 %v1729, %v1930
      %v2086 = vadd.f32 %v1734, %v1935
      %v2087 = vadd.f32 %v1737, %v1938
      %v2088 = vadd.f32 %v1742, %v1943
      %v2089 = vadd.f32 %v1745, %v1946
      %v2090 = vadd.f32 %v1750, %v1951
      %v2091 = vadd.f32 %v1753, %v1954
      %v2092 = vadd.f32 %v1758, %v1959
      %v2093 = vadd.f32 %v1761, %v1962
      %v2094 = vadd.f32 %v1766, %v1967
      %v2095 = vadd.f32 %v1769, %v1970
      %v2096 = vadd.f32 %v1774, %v1975
      %v2097 = vadd.f32 %v1777, %v1978
      %v2098 = vadd.f32 %v1782, %v1983
      %v2099 = vadd.f32 %v1785, %v1986
      %v2100 = vadd.f32 %v1790, %v1991
      %v2101 = vadd.f32 %v1793, %v1994
      %v2102 = vadd.f32 %v1798, %v1999
      %v2103 = vadd.f32 %v1801, %v2002
      %v2104 = vadd.f32 %v1806, %v2007
      %v2105 = vadd.f32 %v1809, %v2010
      %v2106 = vadd.f32 %v1814, %v2015
      %v2107 = vadd.f32 %v1817, %v2018
      %v2108 = vadd.f32 %v1822, %v2023
      %v2109 = vadd.f32 %v1825, %v2026
      %v2110 = vadd.f32 %v1830, %v2031
      %v2111 = vadd.f32 %v1833, %v2034
      %v2112 = vadd.f32 %v1838, %v2039
      %v2113 = vadd.f32 %v1841, %v2042
      %v2114 = vadd.f32 %v1846, %v2047
      %v2115 = vadd.f32 %v1849, %v2050
      %v2116 = vadd.f32 %v1854, %v2055
      %v2117 = vadd.f32 %v1857, %v2058
      %v2118 = vadd.f32 %v1862, %v2063
      %v2119 = vadd.f32 %v1865, %v2066
      %v2120 = vadd.f32 %v1870, %v2071
      %v2121 = vadd.f32 %v1873, %v2074
      %v2122 = vadd.f32 %v1878, %v2079
      %vm2162 = vcmask 1046528
      %v2163 = vrot.slane %v2084, 1
      %v2164 = vrot.slane %v2085, 1
      %v2165 = vsel %vm2162, %v2163, %v2164
      %v2166 = vrot.slane %v2086, 1
      %v2167 = vsel %vm2162, %v2164, %v2166
      %v2168 = vrot.slane %v2087, 1
      %v2169 = vsel %vm2162, %v2166, %v2168
      %v2170 = vrot.slane %v2088, 1
      %v2171 = vsel %vm2162, %v2168, %v2170
      %v2172 = vrot.slane %v2089, 1
      %v2173 = vsel %vm2162, %v2170, %v2172
      %v2174 = vrot.slane %v2090, 1
      %v2175 = vsel %vm2162, %v2172, %v2174
      %v2176 = vrot.slane %v2091, 1
      %v2177 = vsel %vm2162, %v2174, %v2176
      %v2178 = vrot.slane %v2092, 1
      %v2179 = vsel %vm2162, %v2176, %v2178
      %v2180 = vrot.slane %v2093, 1
      %v2181 = vsel %vm2162, %v2178, %v2180
      %v2182 = vrot.slane %v2094, 1
      %v2183 = vsel %vm2162, %v2180, %v2182
      %v2184 = vrot.slane %v2095, 1
      %v2185 = vsel %vm2162, %v2182, %v2184
      %v2186 = vrot.slane %v2096, 1
      %v2187 = vsel %vm2162, %v2184, %v2186
      %v2188 = vrot.slane %v2097, 1
      %v2189 = vsel %vm2162, %v2186, %v2188
      %v2190 = vrot.slane %v2098, 1
      %v2191 = vsel %vm2162, %v2188, %v2190
      %v2192 = vrot.slane %v2099, 1
      %v2193 = vsel %vm2162, %v2190, %v2192
      %v2194 = vrot.slane %v2100, 1
      %v2195 = vsel %vm2162, %v2192, %v2194
      %v2196 = vrot.slane %v2101, 1
      %v2197 = vsel %vm2162, %v2194, %v2196
      %v2198 = vrot.slane %v2102, 1
      %v2199 = vsel %vm2162, %v2196, %v2198
      %v2200 = vrot.slane %v2103, 1
      %v2201 = vsel %vm2162, %v2198, %v2200
      %v2202 = vrot.slane %v2104, 1
      %v2203 = vsel %vm2162, %v2200, %v2202
      %v2204 = vrot.slane %v2105, 1
      %v2205 = vsel %vm2162, %v2202, %v2204
      %v2206 = vrot.slane %v2106, 1
      %v2207 = vsel %vm2162, %v2204, %v2206
      %v2208 = vrot.slane %v2107, 1
      %v2209 = vsel %vm2162, %v2206, %v2208
      %v2210 = vrot.slane %v2108, 1
      %v2211 = vsel %vm2162, %v2208, %v2210
      %v2212 = vrot.slane %v2109, 1
      %v2213 = vsel %vm2162, %v2210, %v2212
      %v2214 = vrot.slane %v2110, 1
      %v2215 = vsel %vm2162, %v2212, %v2214
      %v2216 = vrot.slane %v2111, 1
      %v2217 = vsel %vm2162, %v2214, %v2216
      %v2218 = vrot.slane %v2112, 1
      %v2219 = vsel %vm2162, %v2216, %v2218
      %v2220 = vrot.slane %v2113, 1
      %v2221 = vsel %vm2162, %v2218, %v2220
      %v2222 = vrot.slane %v2114, 1
      %v2223 = vsel %vm2162, %v2220, %v2222
      %v2224 = vrot.slane %v2115, 1
      %v2225 = vsel %vm2162, %v2222, %v2224
      %v2226 = vrot.slane %v2116, 1
      %v2227 = vsel %vm2162, %v2224, %v2226
      %v2228 = vrot.slane %v2117, 1
      %v2229 = vsel %vm2162, %v2226, %v2228
      %v2230 = vrot.slane %v2118, 1
      %v2231 = vsel %vm2162, %v2228, %v2230
      %v2232 = vrot.slane %v2119, 1
      %v2233 = vsel %vm2162, %v2230, %v2232
      %v2234 = vrot.slane %v2120, 1
      %v2235 = vsel %vm2162, %v2232, %v2234
      %v2236 = vrot.slane %v2121, 1
      %v2237 = vsel %vm2162, %v2234, %v2236
      %v2238 = vrot.slane %v2122, 1
      %v2239 = vsel %vm2162, %v2236, %v2238
      %v2279 = vsel %vm2162, %v2238, 0.0
      %v2280 = vadd.f32 %v1442, %v2165
      %v2281 = vadd.f32 %v1443, %v2167
      %v2282 = vadd.f32 %v1444, %v2169
      %v2283 = vadd.f32 %v1445, %v2171
      %v2284 = vadd.f32 %v1446, %v2173
      %v2285 = vadd.f32 %v1447, %v2175
      %v2286 = vadd.f32 %v1448, %v2177
      %v2287 = vadd.f32 %v1449, %v2179
      %v2288 = vadd.f32 %v1450, %v2181
      %v2289 = vadd.f32 %v1451, %v2183
      %v2290 = vadd.f32 %v1452, %v2185
      %v2291 = vadd.f32 %v1453, %v2187
      %v2292 = vadd.f32 %v1454, %v2189
      %v2293 = vadd.f32 %v1455, %v2191
      %v2294 = vadd.f32 %v1456, %v2193
      %v2295 = vadd.f32 %v1457, %v2195
      %v2296 = vadd.f32 %v1458, %v2197
      %v2297 = vadd.f32 %v1459, %v2199
      %v2298 = vadd.f32 %v1460, %v2201
      %v2299 = vadd.f32 %v1461, %v2203
      %v2300 = vadd.f32 %v1462, %v2205
      %v2301 = vadd.f32 %v1463, %v2207
      %v2302 = vadd.f32 %v1464, %v2209
      %v2303 = vadd.f32 %v1465, %v2211
      %v2304 = vadd.f32 %v1466, %v2213
      %v2305 = vadd.f32 %v1467, %v2215
      %v2306 = vadd.f32 %v1468, %v2217
      %v2307 = vadd.f32 %v1469, %v2219
      %v2308 = vadd.f32 %v1470, %v2221
      %v2309 = vadd.f32 %v1471, %v2223
      %v2310 = vadd.f32 %v1472, %v2225
      %v2311 = vadd.f32 %v1473, %v2227
      %v2312 = vadd.f32 %v1474, %v2229
      %v2313 = vadd.f32 %v1475, %v2231
      %v2314 = vadd.f32 %v1476, %v2233
      %v2315 = vadd.f32 %v1477, %v2235
      %v2316 = vadd.f32 %v1478, %v2237
      %v2317 = vadd.f32 %v1479, %v2239
      %v2318 = vadd.f32 %v1480, %v2279
      %s2319 = scalar_lea.vmem %s1, 16
      %v2320 = vld [vmem:[%s2319] sm:$0xf]
      %v2321 = vld [vmem:[%s2319 + $0x4] sm:$0xf]
      %s2322 = scalar_lea.vmem %s1, 40
      %v2323 = vld [vmem:[%s2322] sm:$0xf]
      %v2324 = vld [vmem:[%s2322 + $0x4] sm:$0xf]
      %v2327 = vunpack.c.l.b16 %v2323
      %v2328 = vunpack.c.l.b16 %v2324
      %v2329 = vpack.c.b16 %v2328, %v2327
      %2331 = vmatprep.subr.bf16.mxu0 0
      %2332 = vmatpush1.bf16.msra.mxu0 %v2329
      %2333 = vmatprep.subr.bf16.mxu0 0
      %2334 = vmatpush1.bf16.msra.mxu0 0
      %2335 = vmatprep.subr.bf16.mxu0 0
      %2336 = vmatpush1.bf16.msra.mxu0 0
      %2337 = vmatprep.subr.bf16.mxu0 0
      %2338 = vmatpush1.bf16.msra.mxu0 0
      %2339 = vmatprep.subr.bf16.mxu0 0
      %2340 = vmatpush1.bf16.msra.mxu0 0
      %2341 = vmatprep.subr.bf16.mxu0 0
      %2342 = vmatpush1.bf16.msra.mxu0 0
      %2343 = vmatprep.subr.bf16.mxu0 0
      %2344 = vmatpush1.bf16.msra.mxu0 0
      %2345 = vmatprep.subr.bf16.mxu0 0
      %2346 = vmatpush1.bf16.msra.mxu0 0
      %2347 = vmatprep.subr.bf16.mxu0 0
      %2348 = vmatpush1.bf16.msra.mxu0 0
      %2349 = vmatprep.subr.bf16.mxu0 0
      %2350 = vmatpush1.bf16.msra.mxu0 0
      %2351 = vmatprep.subr.bf16.mxu0 0
      %2352 = vmatpush1.bf16.msra.mxu0 0
      %2353 = vmatprep.subr.bf16.mxu0 0
      %2354 = vmatpush1.bf16.msra.mxu0 0
      %2355 = vmatprep.subr.bf16.mxu0 0
      %2356 = vmatpush1.bf16.msra.mxu0 0
      %2357 = vmatprep.subr.bf16.mxu0 0
      %2358 = vmatpush1.bf16.msra.mxu0 0
      %2359 = vmatprep.subr.bf16.mxu0 0
      %2360 = vmatpush1.bf16.msra.mxu0 0
      %2361 = vmatprep.subr.bf16.mxu0 0
      %2362 = vmatpush1.bf16.msra.mxu0 0
      %2363 = vmatprep.mubr.bf16.mxu0 0
      %2364 = vmatmul.mubr.bf16.gmra.mrb[0].mxu0 %v437
      %v2365 = vpop.f32.mrb[0].mxu0
      %v2366 = vadd.f32 0.0, %v2365
      %v2367 = vpop.f32.mrb[0].mxu0
      %v2368 = vpop.f32.mrb[0].mxu0
      %v2369 = vadd.f32 0.0, %v2368
      %v2370 = vpop.f32.mrb[0].mxu0
      %2371 = vmatprep.mubr.bf16.mxu0 0
      %2372 = vmatmul.mubr.bf16.gmra.mrb[0].mxu0 %v440
      %v2373 = vpop.f32.mrb[0].mxu0
      %v2374 = vadd.f32 0.0, %v2373
      %v2375 = vpop.f32.mrb[0].mxu0
      %v2376 = vpop.f32.mrb[0].mxu0
      %v2377 = vadd.f32 0.0, %v2376
      %v2378 = vpop.f32.mrb[0].mxu0
      %2379 = vmatprep.mubr.bf16.mxu0 0
      %2380 = vmatmul.mubr.bf16.gmra.mrb[0].mxu0 %v443
      %v2381 = vpop.f32.mrb[0].mxu0
      %v2382 = vadd.f32 0.0, %v2381
      %v2383 = vpop.f32.mrb[0].mxu0
      %v2384 = vpop.f32.mrb[0].mxu0
      %v2385 = vadd.f32 0.0, %v2384
      %v2386 = vpop.f32.mrb[0].mxu0
      %2387 = vmatprep.mubr.bf16.mxu0 0
      %2388 = vmatmul.mubr.bf16.gmra.mrb[0].mxu0 %v446
      %v2389 = vpop.f32.mrb[0].mxu0
      %v2390 = vadd.f32 0.0, %v2389
      %v2391 = vpop.f32.mrb[0].mxu0
      %v2392 = vpop.f32.mrb[0].mxu0
      %v2393 = vadd.f32 0.0, %v2392
      %v2394 = vpop.f32.mrb[0].mxu0
      %2395 = vmatprep.mubr.bf16.mxu0 0
      %2396 = vmatmul.mubr.bf16.gmra.mrb[0].mxu0 %v449
      %v2397 = vpop.f32.mrb[0].mxu0
      %v2398 = vadd.f32 0.0, %v2397
      %v2399 = vpop.f32.mrb[0].mxu0
      %v2400 = vpop.f32.mrb[0].mxu0
      %v2401 = vadd.f32 0.0, %v2400
      %v2402 = vpop.f32.mrb[0].mxu0
      %2403 = vmatprep.mubr.bf16.mxu0 0
      %2404 = vmatmul.mubr.bf16.gmra.mrb[0].mxu0 %v452
      %v2405 = vpop.f32.mrb[0].mxu0
      %v2406 = vadd.f32 0.0, %v2405
      %v2407 = vpop.f32.mrb[0].mxu0
      %v2408 = vpop.f32.mrb[0].mxu0
      %v2409 = vadd.f32 0.0, %v2408
      %v2410 = vpop.f32.mrb[0].mxu0
      %2411 = vmatprep.mubr.bf16.mxu0 0
      %2412 = vmatmul.mubr.bf16.gmra.mrb[0].mxu0 %v455
      %v2413 = vpop.f32.mrb[0].mxu0
      %v2414 = vadd.f32 0.0, %v2413
      %v2415 = vpop.f32.mrb[0].mxu0
      %v2416 = vpop.f32.mrb[0].mxu0
      %v2417 = vadd.f32 0.0, %v2416
      %v2418 = vpop.f32.mrb[0].mxu0
      %2419 = vmatprep.mubr.bf16.mxu0 0
      %2420 = vmatmul.mubr.bf16.gmra.mrb[0].mxu0 %v458
      %v2421 = vpop.f32.mrb[0].mxu0
      %v2422 = vadd.f32 0.0, %v2421
      %v2423 = vpop.f32.mrb[0].mxu0
      %v2424 = vpop.f32.mrb[0].mxu0
      %v2425 = vadd.f32 0.0, %v2424
      %v2426 = vpop.f32.mrb[0].mxu0
      %2427 = vmatprep.mubr.bf16.mxu0 0
      %2428 = vmatmul.mubr.bf16.gmra.mrb[0].mxu0 %v461
      %v2429 = vpop.f32.mrb[0].mxu0
      %v2430 = vadd.f32 0.0, %v2429
      %v2431 = vpop.f32.mrb[0].mxu0
      %v2432 = vpop.f32.mrb[0].mxu0
      %v2433 = vadd.f32 0.0, %v2432
      %v2434 = vpop.f32.mrb[0].mxu0
      %2435 = vmatprep.mubr.bf16.mxu0 0
      %2436 = vmatmul.mubr.bf16.gmra.mrb[0].mxu0 %v464
      %v2437 = vpop.f32.mrb[0].mxu0
      %v2438 = vadd.f32 0.0, %v2437
      %v2439 = vpop.f32.mrb[0].mxu0
      %v2440 = vpop.f32.mrb[0].mxu0
      %v2441 = vadd.f32 0.0, %v2440
      %v2442 = vpop.f32.mrb[0].mxu0
      %2443 = vmatprep.mubr.bf16.mxu0 0
      %2444 = vmatmul.mubr.bf16.gmra.mrb[0].mxu0 %v467
      %v2445 = vpop.f32.mrb[0].mxu0
      %v2446 = vadd.f32 0.0, %v2445
      %v2447 = vpop.f32.mrb[0].mxu0
      %v2448 = vpop.f32.mrb[0].mxu0
      %v2449 = vadd.f32 0.0, %v2448
      %v2450 = vpop.f32.mrb[0].mxu0
      %2451 = vmatprep.mubr.bf16.mxu0 0
      %2452 = vmatmul.mubr.bf16.gmra.mrb[0].mxu0 %v470
      %v2453 = vpop.f32.mrb[0].mxu0
      %v2454 = vadd.f32 0.0, %v2453
      %v2455 = vpop.f32.mrb[0].mxu0
      %v2456 = vpop.f32.mrb[0].mxu0
      %v2457 = vadd.f32 0.0, %v2456
      %v2458 = vpop.f32.mrb[0].mxu0
      %2459 = vmatprep.mubr.bf16.mxu0 0
      %2460 = vmatmul.mubr.bf16.gmra.mrb[0].mxu0 %v473
      %v2461 = vpop.f32.mrb[0].mxu0
      %v2462 = vadd.f32 0.0, %v2461
      %v2463 = vpop.f32.mrb[0].mxu0
      %v2464 = vpop.f32.mrb[0].mxu0
      %v2465 = vadd.f32 0.0, %v2464
      %v2466 = vpop.f32.mrb[0].mxu0
      %2467 = vmatprep.mubr.bf16.mxu0 0
      %2468 = vmatmul.mubr.bf16.gmra.mrb[0].mxu0 %v476
      %v2469 = vpop.f32.mrb[0].mxu0
      %v2470 = vadd.f32 0.0, %v2469
      %v2471 = vpop.f32.mrb[0].mxu0
      %v2472 = vpop.f32.mrb[0].mxu0
      %v2473 = vadd.f32 0.0, %v2472
      %v2474 = vpop.f32.mrb[0].mxu0
      %2475 = vmatprep.mubr.bf16.mxu0 0
      %2476 = vmatmul.mubr.bf16.gmra.mrb[0].mxu0 %v479
      %v2477 = vpop.f32.mrb[0].mxu0
      %v2478 = vadd.f32 0.0, %v2477
      %v2479 = vpop.f32.mrb[0].mxu0
      %v2480 = vpop.f32.mrb[0].mxu0
      %v2481 = vadd.f32 0.0, %v2480
      %v2482 = vpop.f32.mrb[0].mxu0
      %2483 = vmatprep.mubr.bf16.mxu0 0
      %2484 = vmatmul.mubr.bf16.gmra.mrb[0].mxu0 %v482
      %v2485 = vpop.f32.mrb[0].mxu0
      %v2486 = vadd.f32 0.0, %v2485
      %v2487 = vpop.f32.mrb[0].mxu0
      %v2488 = vpop.f32.mrb[0].mxu0
      %v2489 = vadd.f32 0.0, %v2488
      %v2490 = vpop.f32.mrb[0].mxu0
      %2491 = vmatprep.mubr.bf16.mxu0 0
      %2492 = vmatmul.mubr.bf16.gmra.mrb[0].mxu0 %v485
      %v2493 = vpop.f32.mrb[0].mxu0
      %v2494 = vadd.f32 0.0, %v2493
      %v2495 = vpop.f32.mrb[0].mxu0
      %v2496 = vpop.f32.mrb[0].mxu0
      %v2497 = vadd.f32 0.0, %v2496
      %v2498 = vpop.f32.mrb[0].mxu0
      %2499 = vmatprep.mubr.bf16.mxu0 0
      %2500 = vmatmul.mubr.bf16.gmra.mrb[0].mxu0 %v488
      %v2501 = vpop.f32.mrb[0].mxu0
      %v2502 = vadd.f32 0.0, %v2501
      %v2503 = vpop.f32.mrb[0].mxu0
      %v2504 = vpop.f32.mrb[0].mxu0
      %v2505 = vadd.f32 0.0, %v2504
      %v2506 = vpop.f32.mrb[0].mxu0
      %2507 = vmatprep.mubr.bf16.mxu0 0
      %2508 = vmatmul.mubr.bf16.gmra.mrb[0].mxu0 %v491
      %v2509 = vpop.f32.mrb[0].mxu0
      %v2510 = vadd.f32 0.0, %v2509
      %v2511 = vpop.f32.mrb[0].mxu0
      %v2512 = vpop.f32.mrb[0].mxu0
      %v2513 = vadd.f32 0.0, %v2512
      %v2514 = vpop.f32.mrb[0].mxu0
      %2515 = vmatprep.mubr.bf16.mxu0 0
      %2516 = vmatmul.mubr.bf16.gmra.mrb[0].mxu0 %v494
      %v2517 = vpop.f32.mrb[0].mxu0
      %v2518 = vadd.f32 0.0, %v2517
      %v2519 = vpop.f32.mrb[0].mxu0
      %v2520 = vpop.f32.mrb[0].mxu0
      %v2521 = vpop.f32.mrb[0].mxu0
      %2522 = vdwg.mxu0
      %v2525 = vunpack.c.l.b16 %v2320
      %v2526 = vunpack.c.l.b16 %v2321
      %v2527 = vpack.c.b16 %v2526, %v2525
      %2529 = vmatprep.subr.bf16.mxu0 0
      %2530 = vmatpush1.bf16.msra.mxu0 %v2527
      %2531 = vmatprep.subr.bf16.mxu0 0
      %2532 = vmatpush1.bf16.msra.mxu0 0
      %2533 = vmatprep.subr.bf16.mxu0 0
      %2534 = vmatpush1.bf16.msra.mxu0 0
      %2535 = vmatprep.subr.bf16.mxu0 0
      %2536 = vmatpush1.bf16.msra.mxu0 0
      %2537 = vmatprep.subr.bf16.mxu0 0
      %2538 = vmatpush1.bf16.msra.mxu0 0
      %2539 = vmatprep.subr.bf16.mxu0 0
      %2540 = vmatpush1.bf16.msra.mxu0 0
      %2541 = vmatprep.subr.bf16.mxu0 0
      %2542 = vmatpush1.bf16.msra.mxu0 0
      %2543 = vmatprep.subr.bf16.mxu0 0
      %2544 = vmatpush1.bf16.msra.mxu0 0
      %2545 = vmatprep.subr.bf16.mxu0 0
      %2546 = vmatpush1.bf16.msra.mxu0 0
      %2547 = vmatprep.subr.bf16.mxu0 0
      %2548 = vmatpush1.bf16.msra.mxu0 0
      %2549 = vmatprep.subr.bf16.mxu0 0
      %2550 = vmatpush1.bf16.msra.mxu0 0
      %2551 = vmatprep.subr.bf16.mxu0 0
      %2552 = vmatpush1.bf16.msra.mxu0 0
      %2553 = vmatprep.subr.bf16.mxu0 0
      %2554 = vmatpush1.bf16.msra.mxu0 0
      %2555 = vmatprep.subr.bf16.mxu0 0
      %2556 = vmatpush1.bf16.msra.mxu0 0
      %2557 = vmatprep.subr.bf16.mxu0 0
      %2558 = vmatpush1.bf16.msra.mxu0 0
      %2559 = vmatprep.subr.bf16.mxu0 0
      %2560 = vmatpush1.bf16.msra.mxu0 0
      %2561 = vmatprep.mubr.bf16.mxu0 0
      %2562 = vmatmul.mubr.bf16.gmra.mrb[0].mxu0 %v793
      %v2563 = vpop.f32.mrb[0].mxu0
      %v2564 = vadd.f32 %v2366, %v2563
      %v2565 = vpop.f32.mrb[0].mxu0
      %v2566 = vpop.f32.mrb[0].mxu0
      %v2567 = vadd.f32 %v2369, %v2566
      %v2568 = vpop.f32.mrb[0].mxu0
      %2569 = vmatprep.mubr.bf16.mxu0 0
      %2570 = vmatmul.mubr.bf16.gmra.mrb[0].mxu0 %v796
      %v2571 = vpop.f32.mrb[0].mxu0
      %v2572 = vadd.f32 %v2374, %v2571
      %v2573 = vpop.f32.mrb[0].mxu0
      %v2574 = vpop.f32.mrb[0].mxu0
      %v2575 = vadd.f32 %v2377, %v2574
      %v2576 = vpop.f32.mrb[0].mxu0
      %2577 = vmatprep.mubr.bf16.mxu0 0
      %2578 = vmatmul.mubr.bf16.gmra.mrb[0].mxu0 %v799
      %v2579 = vpop.f32.mrb[0].mxu0
      %v2580 = vadd.f32 %v2382, %v2579
      %v2581 = vpop.f32.mrb[0].mxu0
      %v2582 = vpop.f32.mrb[0].mxu0
      %v2583 = vadd.f32 %v2385, %v2582
      %v2584 = vpop.f32.mrb[0].mxu0
      %2585 = vmatprep.mubr.bf16.mxu0 0
      %2586 = vmatmul.mubr.bf16.gmra.mrb[0].mxu0 %v802
      %v2587 = vpop.f32.mrb[0].mxu0
      %v2588 = vadd.f32 %v2390, %v2587
      %v2589 = vpop.f32.mrb[0].mxu0
      %v2590 = vpop.f32.mrb[0].mxu0
      %v2591 = vadd.f32 %v2393, %v2590
      %v2592 = vpop.f32.mrb[0].mxu0
      %2593 = vmatprep.mubr.bf16.mxu0 0
      %2594 = vmatmul.mubr.bf16.gmra.mrb[0].mxu0 %v805
      %v2595 = vpop.f32.mrb[0].mxu0
      %v2596 = vadd.f32 %v2398, %v2595
      %v2597 = vpop.f32.mrb[0].mxu0
      %v2598 = vpop.f32.mrb[0].mxu0
      %v2599 = vadd.f32 %v2401, %v2598
      %v2600 = vpop.f32.mrb[0].mxu0
      %2601 = vmatprep.mubr.bf16.mxu0 0
      %2602 = vmatmul.mubr.bf16.gmra.mrb[0].mxu0 %v808
      %v2603 = vpop.f32.mrb[0].mxu0
      %v2604 = vadd.f32 %v2406, %v2603
      %v2605 = vpop.f32.mrb[0].mxu0
      %v2606 = vpop.f32.mrb[0].mxu0
      %v2607 = vadd.f32 %v2409, %v2606
      %v2608 = vpop.f32.mrb[0].mxu0
      %2609 = vmatprep.mubr.bf16.mxu0 0
      %2610 = vmatmul.mubr.bf16.gmra.mrb[0].mxu0 %v811
      %v2611 = vpop.f32.mrb[0].mxu0
      %v2612 = vadd.f32 %v2414, %v2611
      %v2613 = vpop.f32.mrb[0].mxu0
      %v2614 = vpop.f32.mrb[0].mxu0
      %v2615 = vadd.f32 %v2417, %v2614
      %v2616 = vpop.f32.mrb[0].mxu0
      %2617 = vmatprep.mubr.bf16.mxu0 0
      %2618 = vmatmul.mubr.bf16.gmra.mrb[0].mxu0 %v814
      %v2619 = vpop.f32.mrb[0].mxu0
      %v2620 = vadd.f32 %v2422, %v2619
      %v2621 = vpop.f32.mrb[0].mxu0
      %v2622 = vpop.f32.mrb[0].mxu0
      %v2623 = vadd.f32 %v2425, %v2622
      %v2624 = vpop.f32.mrb[0].mxu0
      %2625 = vmatprep.mubr.bf16.mxu0 0
      %2626 = vmatmul.mubr.bf16.gmra.mrb[0].mxu0 %v817
      %v2627 = vpop.f32.mrb[0].mxu0
      %v2628 = vadd.f32 %v2430, %v2627
      %v2629 = vpop.f32.mrb[0].mxu0
      %v2630 = vpop.f32.mrb[0].mxu0
      %v2631 = vadd.f32 %v2433, %v2630
      %v2632 = vpop.f32.mrb[0].mxu0
      %2633 = vmatprep.mubr.bf16.mxu0 0
      %2634 = vmatmul.mubr.bf16.gmra.mrb[0].mxu0 %v820
      %v2635 = vpop.f32.mrb[0].mxu0
      %v2636 = vadd.f32 %v2438, %v2635
      %v2637 = vpop.f32.mrb[0].mxu0
      %v2638 = vpop.f32.mrb[0].mxu0
      %v2639 = vadd.f32 %v2441, %v2638
      %v2640 = vpop.f32.mrb[0].mxu0
      %2641 = vmatprep.mubr.bf16.mxu0 0
      %2642 = vmatmul.mubr.bf16.gmra.mrb[0].mxu0 %v823
      %v2643 = vpop.f32.mrb[0].mxu0
      %v2644 = vadd.f32 %v2446, %v2643
      %v2645 = vpop.f32.mrb[0].mxu0
      %v2646 = vpop.f32.mrb[0].mxu0
      %v2647 = vadd.f32 %v2449, %v2646
      %v2648 = vpop.f32.mrb[0].mxu0
      %2649 = vmatprep.mubr.bf16.mxu0 0
      %2650 = vmatmul.mubr.bf16.gmra.mrb[0].mxu0 %v826
      %v2651 = vpop.f32.mrb[0].mxu0
      %v2652 = vadd.f32 %v2454, %v2651
      %v2653 = vpop.f32.mrb[0].mxu0
      %v2654 = vpop.f32.mrb[0].mxu0
      %v2655 = vadd.f32 %v2457, %v2654
      %v2656 = vpop.f32.mrb[0].mxu0
      %2657 = vmatprep.mubr.bf16.mxu0 0
      %2658 = vmatmul.mubr.bf16.gmra.mrb[0].mxu0 %v829
      %v2659 = vpop.f32.mrb[0].mxu0
      %v2660 = vadd.f32 %v2462, %v2659
      %v2661 = vpop.f32.mrb[0].mxu0
      %v2662 = vpop.f32.mrb[0].mxu0
      %v2663 = vadd.f32 %v2465, %v2662
      %v2664 = vpop.f32.mrb[0].mxu0
      %2665 = vmatprep.mubr.bf16.mxu0 0
      %2666 = vmatmul.mubr.bf16.gmra.mrb[0].mxu0 %v832
      %v2667 = vpop.f32.mrb[0].mxu0
      %v2668 = vadd.f32 %v2470, %v2667
      %v2669 = vpop.f32.mrb[0].mxu0
      %v2670 = vpop.f32.mrb[0].mxu0
      %v2671 = vadd.f32 %v2473, %v2670
      %v2672 = vpop.f32.mrb[0].mxu0
      %2673 = vmatprep.mubr.bf16.mxu0 0
      %2674 = vmatmul.mubr.bf16.gmra.mrb[0].mxu0 %v835
      %v2675 = vpop.f32.mrb[0].mxu0
      %v2676 = vadd.f32 %v2478, %v2675
      %v2677 = vpop.f32.mrb[0].mxu0
      %v2678 = vpop.f32.mrb[0].mxu0
      %v2679 = vadd.f32 %v2481, %v2678
      %v2680 = vpop.f32.mrb[0].mxu0
      %2681 = vmatprep.mubr.bf16.mxu0 0
      %2682 = vmatmul.mubr.bf16.gmra.mrb[0].mxu0 %v838
      %v2683 = vpop.f32.mrb[0].mxu0
      %v2684 = vadd.f32 %v2486, %v2683
      %v2685 = vpop.f32.mrb[0].mxu0
      %v2686 = vpop.f32.mrb[0].mxu0
      %v2687 = vadd.f32 %v2489, %v2686
      %v2688 = vpop.f32.mrb[0].mxu0
      %2689 = vmatprep.mubr.bf16.mxu0 0
      %2690 = vmatmul.mubr.bf16.gmra.mrb[0].mxu0 %v841
      %v2691 = vpop.f32.mrb[0].mxu0
      %v2692 = vadd.f32 %v2494, %v2691
      %v2693 = vpop.f32.mrb[0].mxu0
      %v2694 = vpop.f32.mrb[0].mxu0
      %v2695 = vadd.f32 %v2497, %v2694
      %v2696 = vpop.f32.mrb[0].mxu0
      %2697 = vmatprep.mubr.bf16.mxu0 0
      %2698 = vmatmul.mubr.bf16.gmra.mrb[0].mxu0 %v844
      %v2699 = vpop.f32.mrb[0].mxu0
      %v2700 = vadd.f32 %v2502, %v2699
      %v2701 = vpop.f32.mrb[0].mxu0
      %v2702 = vpop.f32.mrb[0].mxu0
      %v2703 = vadd.f32 %v2505, %v2702
      %v2704 = vpop.f32.mrb[0].mxu0
      %2705 = vmatprep.mubr.bf16.mxu0 0
      %2706 = vmatmul.mubr.bf16.gmra.mrb[0].mxu0 %v847
      %v2707 = vpop.f32.mrb[0].mxu0
      %v2708 = vadd.f32 %v2510, %v2707
      %v2709 = vpop.f32.mrb[0].mxu0
      %v2710 = vpop.f32.mrb[0].mxu0
      %v2711 = vadd.f32 %v2513, %v2710
      %v2712 = vpop.f32.mrb[0].mxu0
      %2713 = vmatprep.mubr.bf16.mxu0 0
      %2714 = vmatmul.mubr.bf16.gmra.mrb[0].mxu0 %v850
      %v2715 = vpop.f32.mrb[0].mxu0
      %v2716 = vadd.f32 %v2518, %v2715
      %v2717 = vpop.f32.mrb[0].mxu0
      %v2718 = vpop.f32.mrb[0].mxu0
      %v2719 = vpop.f32.mrb[0].mxu0
      %2720 = vdwg.mxu0
      %s2721 = scalar_lea.vmem %s1, 64
      %v2722 = vld [vmem:[%s2721] sm:$0xf]
      %v2723 = vld [vmem:[%s2721 + $0x4] sm:$0xf]
      %v2726 = vunpack.c.l.b16 %v2722
      %v2727 = vunpack.c.l.b16 %v2723
      %v2728 = vpack.c.b16 %v2727, %v2726
      %2730 = vmatprep.subr.bf16.mxu0 0
      %2731 = vmatpush1.bf16.msra.mxu0 %v2728
      %2732 = vmatprep.subr.bf16.mxu0 0
      %2733 = vmatpush1.bf16.msra.mxu0 0
      %2734 = vmatprep.subr.bf16.mxu0 0
      %2735 = vmatpush1.bf16.msra.mxu0 0
      %2736 = vmatprep.subr.bf16.mxu0 0
      %2737 = vmatpush1.bf16.msra.mxu0 0
      %2738 = vmatprep.subr.bf16.mxu0 0
      %2739 = vmatpush1.bf16.msra.mxu0 0
      %2740 = vmatprep.subr.bf16.mxu0 0
      %2741 = vmatpush1.bf16.msra.mxu0 0
      %2742 = vmatprep.subr.bf16.mxu0 0
      %2743 = vmatpush1.bf16.msra.mxu0 0
      %2744 = vmatprep.subr.bf16.mxu0 0
      %2745 = vmatpush1.bf16.msra.mxu0 0
      %2746 = vmatprep.subr.bf16.mxu0 0
      %2747 = vmatpush1.bf16.msra.mxu0 0
      %2748 = vmatprep.subr.bf16.mxu0 0
      %2749 = vmatpush1.bf16.msra.mxu0 0
      %2750 = vmatprep.subr.bf16.mxu0 0
      %2751 = vmatpush1.bf16.msra.mxu0 0
      %2752 = vmatprep.subr.bf16.mxu0 0
      %2753 = vmatpush1.bf16.msra.mxu0 0
      %2754 = vmatprep.subr.bf16.mxu0 0
      %2755 = vmatpush1.bf16.msra.mxu0 0
      %2756 = vmatprep.subr.bf16.mxu0 0
      %2757 = vmatpush1.bf16.msra.mxu0 0
      %2758 = vmatprep.subr.bf16.mxu0 0
      %2759 = vmatpush1.bf16.msra.mxu0 0
      %2760 = vmatprep.subr.bf16.mxu0 0
      %2761 = vmatpush1.bf16.msra.mxu0 0
      %2762 = vmatprep.mubr.bf16.mxu0 0
      %2763 = vmatmul.mubr.bf16.gmra.mrb[0].mxu0 %v1152
      %v2764 = vpop.f32.mrb[0].mxu0
      %v2765 = vadd.f32 0.0, %v2764
      %v2766 = vpop.f32.mrb[0].mxu0
      %v2767 = vpop.f32.mrb[0].mxu0
      %v2768 = vadd.f32 0.0, %v2767
      %v2769 = vpop.f32.mrb[0].mxu0
      %2770 = vmatprep.mubr.bf16.mxu0 0
      %2771 = vmatmul.mubr.bf16.gmra.mrb[0].mxu0 %v1155
      %v2772 = vpop.f32.mrb[0].mxu0
      %v2773 = vadd.f32 0.0, %v2772
      %v2774 = vpop.f32.mrb[0].mxu0
      %v2775 = vpop.f32.mrb[0].mxu0
      %v2776 = vadd.f32 0.0, %v2775
      %v2777 = vpop.f32.mrb[0].mxu0
      %2778 = vmatprep.mubr.bf16.mxu0 0
      %2779 = vmatmul.mubr.bf16.gmra.mrb[0].mxu0 %v1158
      %v2780 = vpop.f32.mrb[0].mxu0
      %v2781 = vadd.f32 0.0, %v2780
      %v2782 = vpop.f32.mrb[0].mxu0
      %v2783 = vpop.f32.mrb[0].mxu0
      %v2784 = vadd.f32 0.0, %v2783
      %v2785 = vpop.f32.mrb[0].mxu0
      %2786 = vmatprep.mubr.bf16.mxu0 0
      %2787 = vmatmul.mubr.bf16.gmra.mrb[0].mxu0 %v1161
      %v2788 = vpop.f32.mrb[0].mxu0
      %v2789 = vadd.f32 0.0, %v2788
      %v2790 = vpop.f32.mrb[0].mxu0
      %v2791 = vpop.f32.mrb[0].mxu0
      %v2792 = vadd.f32 0.0, %v2791
      %v2793 = vpop.f32.mrb[0].mxu0
      %2794 = vmatprep.mubr.bf16.mxu0 0
      %2795 = vmatmul.mubr.bf16.gmra.mrb[0].mxu0 %v1164
      %v2796 = vpop.f32.mrb[0].mxu0
      %v2797 = vadd.f32 0.0, %v2796
      %v2798 = vpop.f32.mrb[0].mxu0
      %v2799 = vpop.f32.mrb[0].mxu0
      %v2800 = vadd.f32 0.0, %v2799
      %v2801 = vpop.f32.mrb[0].mxu0
      %2802 = vmatprep.mubr.bf16.mxu0 0
      %2803 = vmatmul.mubr.bf16.gmra.mrb[0].mxu0 %v1167
      %v2804 = vpop.f32.mrb[0].mxu0
      %v2805 = vadd.f32 0.0, %v2804
      %v2806 = vpop.f32.mrb[0].mxu0
      %v2807 = vpop.f32.mrb[0].mxu0
      %v2808 = vadd.f32 0.0, %v2807
      %v2809 = vpop.f32.mrb[0].mxu0
      %2810 = vmatprep.mubr.bf16.mxu0 0
      %2811 = vmatmul.mubr.bf16.gmra.mrb[0].mxu0 %v1170
      %v2812 = vpop.f32.mrb[0].mxu0
      %v2813 = vadd.f32 0.0, %v2812
      %v2814 = vpop.f32.mrb[0].mxu0
      %v2815 = vpop.f32.mrb[0].mxu0
      %v2816 = vadd.f32 0.0, %v2815
      %v2817 = vpop.f32.mrb[0].mxu0
      %2818 = vmatprep.mubr.bf16.mxu0 0
      %2819 = vmatmul.mubr.bf16.gmra.mrb[0].mxu0 %v1173
      %v2820 = vpop.f32.mrb[0].mxu0
      %v2821 = vadd.f32 0.0, %v2820
      %v2822 = vpop.f32.mrb[0].mxu0
      %v2823 = vpop.f32.mrb[0].mxu0
      %v2824 = vadd.f32 0.0, %v2823
      %v2825 = vpop.f32.mrb[0].mxu0
      %2826 = vmatprep.mubr.bf16.mxu0 0
      %2827 = vmatmul.mubr.bf16.gmra.mrb[0].mxu0 %v1176
      %v2828 = vpop.f32.mrb[0].mxu0
      %v2829 = vadd.f32 0.0, %v2828
      %v2830 = vpop.f32.mrb[0].mxu0
      %v2831 = vpop.f32.mrb[0].mxu0
      %v2832 = vadd.f32 0.0, %v2831
      %v2833 = vpop.f32.mrb[0].mxu0
      %2834 = vmatprep.mubr.bf16.mxu0 0
      %2835 = vmatmul.mubr.bf16.gmra.mrb[0].mxu0 %v1179
      %v2836 = vpop.f32.mrb[0].mxu0
      %v2837 = vadd.f32 0.0, %v2836
      %v2838 = vpop.f32.mrb[0].mxu0
      %v2839 = vpop.f32.mrb[0].mxu0
      %v2840 = vadd.f32 0.0, %v2839
      %v2841 = vpop.f32.mrb[0].mxu0
      %2842 = vmatprep.mubr.bf16.mxu0 0
      %2843 = vmatmul.mubr.bf16.gmra.mrb[0].mxu0 %v1182
      %v2844 = vpop.f32.mrb[0].mxu0
      %v2845 = vadd.f32 0.0, %v2844
      %v2846 = vpop.f32.mrb[0].mxu0
      %v2847 = vpop.f32.mrb[0].mxu0
      %v2848 = vadd.f32 0.0, %v2847
      %v2849 = vpop.f32.mrb[0].mxu0
      %2850 = vmatprep.mubr.bf16.mxu0 0
      %2851 = vmatmul.mubr.bf16.gmra.mrb[0].mxu0 %v1185
      %v2852 = vpop.f32.mrb[0].mxu0
      %v2853 = vadd.f32 0.0, %v2852
      %v2854 = vpop.f32.mrb[0].mxu0
      %v2855 = vpop.f32.mrb[0].mxu0
      %v2856 = vadd.f32 0.0, %v2855
      %v2857 = vpop.f32.mrb[0].mxu0
      %2858 = vmatprep.mubr.bf16.mxu0 0
      %2859 = vmatmul.mubr.bf16.gmra.mrb[0].mxu0 %v1188
      %v2860 = vpop.f32.mrb[0].mxu0
      %v2861 = vadd.f32 0.0, %v2860
      %v2862 = vpop.f32.mrb[0].mxu0
      %v2863 = vpop.f32.mrb[0].mxu0
      %v2864 = vadd.f32 0.0, %v2863
      %v2865 = vpop.f32.mrb[0].mxu0
      %2866 = vmatprep.mubr.bf16.mxu0 0
      %2867 = vmatmul.mubr.bf16.gmra.mrb[0].mxu0 %v1191
      %v2868 = vpop.f32.mrb[0].mxu0
      %v2869 = vadd.f32 0.0, %v2868
      %v2870 = vpop.f32.mrb[0].mxu0
      %v2871 = vpop.f32.mrb[0].mxu0
      %v2872 = vadd.f32 0.0, %v2871
      %v2873 = vpop.f32.mrb[0].mxu0
      %2874 = vmatprep.mubr.bf16.mxu0 0
      %2875 = vmatmul.mubr.bf16.gmra.mrb[0].mxu0 %v1194
      %v2876 = vpop.f32.mrb[0].mxu0
      %v2877 = vadd.f32 0.0, %v2876
      %v2878 = vpop.f32.mrb[0].mxu0
      %v2879 = vpop.f32.mrb[0].mxu0
      %v2880 = vadd.f32 0.0, %v2879
      %v2881 = vpop.f32.mrb[0].mxu0
      %2882 = vmatprep.mubr.bf16.mxu0 0
      %2883 = vmatmul.mubr.bf16.gmra.mrb[0].mxu0 %v1197
      %v2884 = vpop.f32.mrb[0].mxu0
      %v2885 = vadd.f32 0.0, %v2884
      %v2886 = vpop.f32.mrb[0].mxu0
      %v2887 = vpop.f32.mrb[0].mxu0
      %v2888 = vadd.f32 0.0, %v2887
      %v2889 = vpop.f32.mrb[0].mxu0
      %2890 = vmatprep.mubr.bf16.mxu0 0
      %2891 = vmatmul.mubr.bf16.gmra.mrb[0].mxu0 %v1200
      %v2892 = vpop.f32.mrb[0].mxu0
      %v2893 = vadd.f32 0.0, %v2892
      %v2894 = vpop.f32.mrb[0].mxu0
      %v2895 = vpop.f32.mrb[0].mxu0
      %v2896 = vadd.f32 0.0, %v2895
      %v2897 = vpop.f32.mrb[0].mxu0
      %2898 = vmatprep.mubr.bf16.mxu0 0
      %2899 = vmatmul.mubr.bf16.gmra.mrb[0].mxu0 %v1203
      %v2900 = vpop.f32.mrb[0].mxu0
      %v2901 = vadd.f32 0.0, %v2900
      %v2902 = vpop.f32.mrb[0].mxu0
      %v2903 = vpop.f32.mrb[0].mxu0
      %v2904 = vadd.f32 0.0, %v2903
      %v2905 = vpop.f32.mrb[0].mxu0
      %2906 = vmatprep.mubr.bf16.mxu0 0
      %2907 = vmatmul.mubr.bf16.gmra.mrb[0].mxu0 %v1206
      %v2908 = vpop.f32.mrb[0].mxu0
      %v2909 = vadd.f32 0.0, %v2908
      %v2910 = vpop.f32.mrb[0].mxu0
      %v2911 = vpop.f32.mrb[0].mxu0
      %v2912 = vadd.f32 0.0, %v2911
      %v2913 = vpop.f32.mrb[0].mxu0
      %2914 = vmatprep.mubr.bf16.mxu0 0
      %2915 = vmatmul.mubr.bf16.gmra.mrb[0].mxu0 %v1209
      %v2916 = vpop.f32.mrb[0].mxu0
      %v2917 = vadd.f32 0.0, %v2916
      %v2918 = vpop.f32.mrb[0].mxu0
      %v2919 = vpop.f32.mrb[0].mxu0
      %v2920 = vpop.f32.mrb[0].mxu0
      %2921 = vdwg.mxu0
      %v2922 = vadd.f32 %v2564, %v2765
      %v2923 = vadd.f32 %v2567, %v2768
      %v2924 = vadd.f32 %v2572, %v2773
      %v2925 = vadd.f32 %v2575, %v2776
      %v2926 = vadd.f32 %v2580, %v2781
      %v2927 = vadd.f32 %v2583, %v2784
      %v2928 = vadd.f32 %v2588, %v2789
      %v2929 = vadd.f32 %v2591, %v2792
      %v2930 = vadd.f32 %v2596, %v2797
      %v2931 = vadd.f32 %v2599, %v2800
      %v2932 = vadd.f32 %v2604, %v2805
      %v2933 = vadd.f32 %v2607, %v2808
      %v2934 = vadd.f32 %v2612, %v2813
      %v2935 = vadd.f32 %v2615, %v2816
      %v2936 = vadd.f32 %v2620, %v2821
      %v2937 = vadd.f32 %v2623, %v2824
      %v2938 = vadd.f32 %v2628, %v2829
      %v2939 = vadd.f32 %v2631, %v2832
      %v2940 = vadd.f32 %v2636, %v2837
      %v2941 = vadd.f32 %v2639, %v2840
      %v2942 = vadd.f32 %v2644, %v2845
      %v2943 = vadd.f32 %v2647, %v2848
      %v2944 = vadd.f32 %v2652, %v2853
      %v2945 = vadd.f32 %v2655, %v2856
      %v2946 = vadd.f32 %v2660, %v2861
      %v2947 = vadd.f32 %v2663, %v2864
      %v2948 = vadd.f32 %v2668, %v2869
      %v2949 = vadd.f32 %v2671, %v2872
      %v2950 = vadd.f32 %v2676, %v2877
      %v2951 = vadd.f32 %v2679, %v2880
      %v2952 = vadd.f32 %v2684, %v2885
      %v2953 = vadd.f32 %v2687, %v2888
      %v2954 = vadd.f32 %v2692, %v2893
      %v2955 = vadd.f32 %v2695, %v2896
      %v2956 = vadd.f32 %v2700, %v2901
      %v2957 = vadd.f32 %v2703, %v2904
      %v2958 = vadd.f32 %v2708, %v2909
      %v2959 = vadd.f32 %v2711, %v2912
      %v2960 = vadd.f32 %v2716, %v2917
      %vm3000 = vcmask 1045504
      %v3001 = vrot.slane %v2922, 2
      %v3002 = vrot.slane %v2923, 2
      %v3003 = vsel %vm3000, %v3001, %v3002
      %v3004 = vrot.slane %v2924, 2
      %v3005 = vsel %vm3000, %v3002, %v3004
      %v3006 = vrot.slane %v2925, 2
      %v3007 = vsel %vm3000, %v3004, %v3006
      %v3008 = vrot.slane %v2926, 2
      %v3009 = vsel %vm3000, %v3006, %v3008
      %v3010 = vrot.slane %v2927, 2
      %v3011 = vsel %vm3000, %v3008, %v3010
      %v3012 = vrot.slane %v2928, 2
      %v3013 = vsel %vm3000, %v3010, %v3012
      %v3014 = vrot.slane %v2929, 2
      %v3015 = vsel %vm3000, %v3012, %v3014
      %v3016 = vrot.slane %v2930, 2
      %v3017 = vsel %vm3000, %v3014, %v3016
      %v3018 = vrot.slane %v2931, 2
      %v3019 = vsel %vm3000, %v3016, %v3018
      %v3020 = vrot.slane %v2932, 2
      %v3021 = vsel %vm3000, %v3018, %v3020
      %v3022 = vrot.slane %v2933, 2
      %v3023 = vsel %vm3000, %v3020, %v3022
      %v3024 = vrot.slane %v2934, 2
      %v3025 = vsel %vm3000, %v3022, %v3024
      %v3026 = vrot.slane %v2935, 2
      %v3027 = vsel %vm3000, %v3024, %v3026
      %v3028 = vrot.slane %v2936, 2
      %v3029 = vsel %vm3000, %v3026, %v3028
      %v3030 = vrot.slane %v2937, 2
      %v3031 = vsel %vm3000, %v3028, %v3030
      %v3032 = vrot.slane %v2938, 2
      %v3033 = vsel %vm3000, %v3030, %v3032
      %v3034 = vrot.slane %v2939, 2
      %v3035 = vsel %vm3000, %v3032, %v3034
      %v3036 = vrot.slane %v2940, 2
      %v3037 = vsel %vm3000, %v3034, %v3036
      %v3038 = vrot.slane %v2941, 2
      %v3039 = vsel %vm3000, %v3036, %v3038
      %v3040 = vrot.slane %v2942, 2
      %v3041 = vsel %vm3000, %v3038, %v3040
      %v3042 = vrot.slane %v2943, 2
      %v3043 = vsel %vm3000, %v3040, %v3042
      %v3044 = vrot.slane %v2944, 2
      %v3045 = vsel %vm3000, %v3042, %v3044
      %v3046 = vrot.slane %v2945, 2
      %v3047 = vsel %vm3000, %v3044, %v3046
      %v3048 = vrot.slane %v2946, 2
      %v3049 = vsel %vm3000, %v3046, %v3048
      %v3050 = vrot.slane %v2947, 2
      %v3051 = vsel %vm3000, %v3048, %v3050
      %v3052 = vrot.slane %v2948, 2
      %v3053 = vsel %vm3000, %v3050, %v3052
      %v3054 = vrot.slane %v2949, 2
      %v3055 = vsel %vm3000, %v3052, %v3054
      %v3056 = vrot.slane %v2950, 2
      %v3057 = vsel %vm3000, %v3054, %v3056
      %v3058 = vrot.slane %v2951, 2
      %v3059 = vsel %vm3000, %v3056, %v3058
      %v3060 = vrot.slane %v2952, 2
      %v3061 = vsel %vm3000, %v3058, %v3060
      %v3062 = vrot.slane %v2953, 2
      %v3063 = vsel %vm3000, %v3060, %v3062
      %v3064 = vrot.slane %v2954, 2
      %v3065 = vsel %vm3000, %v3062, %v3064
      %v3066 = vrot.slane %v2955, 2
      %v3067 = vsel %vm3000, %v3064, %v3066
      %v3068 = vrot.slane %v2956, 2
      %v3069 = vsel %vm3000, %v3066, %v3068
      %v3070 = vrot.slane %v2957, 2
      %v3071 = vsel %vm3000, %v3068, %v3070
      %v3072 = vrot.slane %v2958, 2
      %v3073 = vsel %vm3000, %v3070, %v3072
      %v3074 = vrot.slane %v2959, 2
      %v3075 = vsel %vm3000, %v3072, %v3074
      %v3076 = vrot.slane %v2960, 2
      %v3077 = vsel %vm3000, %v3074, %v3076
      %v3117 = vsel %vm3000, %v3076, 0.0
      %v3118 = vadd.f32 %v2280, %v3003
      %v3119 = vadd.f32 %v2281, %v3005
      %v3120 = vadd.f32 %v2282, %v3007
      %v3121 = vadd.f32 %v2283, %v3009
      %v3122 = vadd.f32 %v2284, %v3011
      %v3123 = vadd.f32 %v2285, %v3013
      %v3124 = vadd.f32 %v2286, %v3015
      %v3125 = vadd.f32 %v2287, %v3017
      %v3126 = vadd.f32 %v2288, %v3019
      %v3127 = vadd.f32 %v2289, %v3021
      %v3128 = vadd.f32 %v2290, %v3023
      %v3129 = vadd.f32 %v2291, %v3025
      %v3130 = vadd.f32 %v2292, %v3027
      %v3131 = vadd.f32 %v2293, %v3029
      %v3132 = vadd.f32 %v2294, %v3031
      %v3133 = vadd.f32 %v2295, %v3033
      %v3134 = vadd.f32 %v2296, %v3035
      %v3135 = vadd.f32 %v2297, %v3037
      %v3136 = vadd.f32 %v2298, %v3039
      %v3137 = vadd.f32 %v2299, %v3041
      %v3138 = vadd.f32 %v2300, %v3043
      %v3139 = vadd.f32 %v2301, %v3045
      %v3140 = vadd.f32 %v2302, %v3047
      %v3141 = vadd.f32 %v2303, %v3049
      %v3142 = vadd.f32 %v2304, %v3051
      %v3143 = vadd.f32 %v2305, %v3053
      %v3144 = vadd.f32 %v2306, %v3055
      %v3145 = vadd.f32 %v2307, %v3057
      %v3146 = vadd.f32 %v2308, %v3059
      %v3147 = vadd.f32 %v2309, %v3061
      %v3148 = vadd.f32 %v2310, %v3063
      %v3149 = vadd.f32 %v2311, %v3065
      %v3150 = vadd.f32 %v2312, %v3067
      %v3151 = vadd.f32 %v2313, %v3069
      %v3152 = vadd.f32 %v2314, %v3071
      %v3153 = vadd.f32 %v2315, %v3073
      %v3154 = vadd.f32 %v2316, %v3075
      %v3155 = vadd.f32 %v2317, %v3077
      %v3156 = vadd.f32 %v2318, %v3117
      %v3157 = vld [vmem:[%s2] sm:$0x1]
      %v3159 = vlaneseq
      %v3160 = vshrl.u32 %v3159, 7
      %v3161 = vsub.s32 0, %v3160
      %v3162 = vrot.slane %v3157, %v3161
      %v3164 = vadd.f32 %v3118, %v3162
      %v3165 = vadd.f32 %v3119, %v3162
      %v3166 = vadd.f32 %v3120, %v3162
      %v3167 = vadd.f32 %v3121, %v3162
      %v3168 = vadd.f32 %v3122, %v3162
      %v3169 = vadd.f32 %v3123, %v3162
      %v3170 = vadd.f32 %v3124, %v3162
      %v3171 = vadd.f32 %v3125, %v3162
      %v3172 = vadd.f32 %v3126, %v3162
      %v3173 = vadd.f32 %v3127, %v3162
      %v3174 = vadd.f32 %v3128, %v3162
      %v3175 = vadd.f32 %v3129, %v3162
      %v3176 = vadd.f32 %v3130, %v3162
      %v3177 = vadd.f32 %v3131, %v3162
      %v3178 = vadd.f32 %v3132, %v3162
      %v3179 = vadd.f32 %v3133, %v3162
      %v3180 = vadd.f32 %v3134, %v3162
      %v3181 = vadd.f32 %v3135, %v3162
      %v3182 = vadd.f32 %v3136, %v3162
      %v3183 = vadd.f32 %v3137, %v3162
      %v3184 = vadd.f32 %v3138, %v3162
      %v3185 = vadd.f32 %v3139, %v3162
      %v3186 = vadd.f32 %v3140, %v3162
      %v3187 = vadd.f32 %v3141, %v3162
      %v3188 = vadd.f32 %v3142, %v3162
      %v3189 = vadd.f32 %v3143, %v3162
      %v3190 = vadd.f32 %v3144, %v3162
      %v3191 = vadd.f32 %v3145, %v3162
      %v3192 = vadd.f32 %v3146, %v3162
      %v3193 = vadd.f32 %v3147, %v3162
      %v3194 = vadd.f32 %v3148, %v3162
      %v3195 = vadd.f32 %v3149, %v3162
      %v3196 = vadd.f32 %v3150, %v3162
      %v3197 = vadd.f32 %v3151, %v3162
      %v3198 = vadd.f32 %v3152, %v3162
      %v3199 = vadd.f32 %v3153, %v3162
      %v3200 = vadd.f32 %v3154, %v3162
      %v3201 = vadd.f32 %v3155, %v3162
      %v3202 = vadd.f32 %v3156, %v3162
      %v3203 = vmax.f32 %v3164, 0.0
      %v3204 = vmax.f32 %v3165, 0.0
      %v3205 = vmax.f32 %v3166, 0.0
      %v3206 = vmax.f32 %v3167, 0.0
      %v3207 = vmax.f32 %v3168, 0.0
      %v3208 = vmax.f32 %v3169, 0.0
      %v3209 = vmax.f32 %v3170, 0.0
      %v3210 = vmax.f32 %v3171, 0.0
      %v3211 = vmax.f32 %v3172, 0.0
      %v3212 = vmax.f32 %v3173, 0.0
      %v3213 = vmax.f32 %v3174, 0.0
      %v3214 = vmax.f32 %v3175, 0.0
      %v3215 = vmax.f32 %v3176, 0.0
      %v3216 = vmax.f32 %v3177, 0.0
      %v3217 = vmax.f32 %v3178, 0.0
      %v3218 = vmax.f32 %v3179, 0.0
      %v3219 = vmax.f32 %v3180, 0.0
      %v3220 = vmax.f32 %v3181, 0.0
      %v3221 = vmax.f32 %v3182, 0.0
      %v3222 = vmax.f32 %v3183, 0.0
      %v3223 = vmax.f32 %v3184, 0.0
      %v3224 = vmax.f32 %v3185, 0.0
      %v3225 = vmax.f32 %v3186, 0.0
      %v3226 = vmax.f32 %v3187, 0.0
      %v3227 = vmax.f32 %v3188, 0.0
      %v3228 = vmax.f32 %v3189, 0.0
      %v3229 = vmax.f32 %v3190, 0.0
      %v3230 = vmax.f32 %v3191, 0.0
      %v3231 = vmax.f32 %v3192, 0.0
      %v3232 = vmax.f32 %v3193, 0.0
      %v3233 = vmax.f32 %v3194, 0.0
      %v3234 = vmax.f32 %v3195, 0.0
      %v3235 = vmax.f32 %v3196, 0.0
      %v3236 = vmax.f32 %v3197, 0.0
      %v3237 = vmax.f32 %v3198, 0.0
      %v3238 = vmax.f32 %v3199, 0.0
      %v3239 = vmax.f32 %v3200, 0.0
      %v3240 = vmax.f32 %v3201, 0.0
      %v3241 = vmax.f32 %v3202, 0.0
      %v3242 = vpack.c.bf16 %v3204, %v3203
      %v3243 = vpack.c.bf16 %v3205, %v3205
      %v3244 = vpack.c.bf16 %v3207, %v3206
      %v3245 = vpack.c.bf16 %v3208, %v3208
      %v3246 = vpack.c.bf16 %v3210, %v3209
      %v3247 = vpack.c.bf16 %v3211, %v3211
      %v3248 = vpack.c.bf16 %v3213, %v3212
      %v3249 = vpack.c.bf16 %v3214, %v3214
      %v3250 = vpack.c.bf16 %v3216, %v3215
      %v3251 = vpack.c.bf16 %v3217, %v3217
      %v3252 = vpack.c.bf16 %v3219, %v3218
      %v3253 = vpack.c.bf16 %v3220, %v3220
      %v3254 = vpack.c.bf16 %v3222, %v3221
      %v3255 = vpack.c.bf16 %v3223, %v3223
      %v3256 = vpack.c.bf16 %v3225, %v3224
      %v3257 = vpack.c.bf16 %v3226, %v3226
      %v3258 = vpack.c.bf16 %v3228, %v3227
      %v3259 = vpack.c.bf16 %v3229, %v3229
      %v3260 = vpack.c.bf16 %v3231, %v3230
      %v3261 = vpack.c.bf16 %v3232, %v3232
      %v3262 = vpack.c.bf16 %v3234, %v3233
      %v3263 = vpack.c.bf16 %v3235, %v3235
      %v3264 = vpack.c.bf16 %v3237, %v3236
      %v3265 = vpack.c.bf16 %v3238, %v3238
      %v3266 = vpack.c.bf16 %v3240, %v3239
      %v3267 = vpack.c.bf16 %v3241, %v3241
      %v3294 = vunpack.c.l.b16 %v3242
      %v3295 = vunpack.c.h.b16 %v3242
      %v3296 = vunpack.c.l.b16 %v3243
      %v3297 = vunpack.c.l.b16 %v3244
      %v3298 = vunpack.c.h.b16 %v3244
      %v3299 = vunpack.c.l.b16 %v3245
      %v3300 = vunpack.c.l.b16 %v3246
      %v3301 = vunpack.c.h.b16 %v3246
      %v3302 = vunpack.c.l.b16 %v3247
      %v3303 = vunpack.c.l.b16 %v3248
      %v3304 = vunpack.c.h.b16 %v3248
      %v3305 = vunpack.c.l.b16 %v3249
      %v3306 = vunpack.c.l.b16 %v3250
      %v3307 = vunpack.c.h.b16 %v3250
      %v3308 = vunpack.c.l.b16 %v3251
      %v3309 = vunpack.c.l.b16 %v3252
      %v3310 = vunpack.c.h.b16 %v3252
      %v3311 = vunpack.c.l.b16 %v3253
      %v3312 = vunpack.c.l.b16 %v3254
      %v3313 = vunpack.c.h.b16 %v3254
      %v3314 = vunpack.c.l.b16 %v3255
      %v3315 = vunpack.c.l.b16 %v3256
      %v3316 = vunpack.c.h.b16 %v3256
      %v3317 = vunpack.c.l.b16 %v3257
      %v3318 = vunpack.c.l.b16 %v3258
      %v3319 = vunpack.c.h.b16 %v3258
      %v3320 = vunpack.c.l.b16 %v3259
      %v3321 = vunpack.c.l.b16 %v3260
      %v3322 = vunpack.c.h.b16 %v3260
      %v3323 = vunpack.c.l.b16 %v3261
      %v3324 = vunpack.c.l.b16 %v3262
      %v3325 = vunpack.c.h.b16 %v3262
      %v3326 = vunpack.c.l.b16 %v3263
      %v3327 = vunpack.c.l.b16 %v3264
      %v3328 = vunpack.c.h.b16 %v3264
      %v3329 = vunpack.c.l.b16 %v3265
      %v3330 = vunpack.c.l.b16 %v3266
      %v3331 = vunpack.c.h.b16 %v3266
      %v3332 = vunpack.c.l.b16 %v3267
      %v3333 = vpack.c.b16 %v3294, %v3294
      %v3334 = vpack.c.b16 %v3295, %v3295
      %v3335 = vpack.c.b16 %v3296, %v3296
      %v3336 = vpack.c.b16 %v3297, %v3297
      %v3337 = vpack.c.b16 %v3298, %v3298
      %v3338 = vpack.c.b16 %v3299, %v3299
      %v3339 = vpack.c.b16 %v3300, %v3300
      %v3340 = vpack.c.b16 %v3301, %v3301
      %v3341 = vpack.c.b16 %v3302, %v3302
      %v3342 = vpack.c.b16 %v3303, %v3303
      %v3343 = vpack.c.b16 %v3304, %v3304
      %v3344 = vpack.c.b16 %v3305, %v3305
      %v3345 = vpack.c.b16 %v3306, %v3306
      %v3346 = vpack.c.b16 %v3307, %v3307
      %v3347 = vpack.c.b16 %v3308, %v3308
      %v3348 = vpack.c.b16 %v3309, %v3309
      %v3349 = vpack.c.b16 %v3310, %v3310
      %v3350 = vpack.c.b16 %v3311, %v3311
      %v3351 = vpack.c.b16 %v3312, %v3312
      %v3352 = vpack.c.b16 %v3313, %v3313
      %v3353 = vpack.c.b16 %v3314, %v3314
      %v3354 = vpack.c.b16 %v3315, %v3315
      %v3355 = vpack.c.b16 %v3316, %v3316
      %v3356 = vpack.c.b16 %v3317, %v3317
      %v3357 = vpack.c.b16 %v3318, %v3318
      %v3358 = vpack.c.b16 %v3319, %v3319
      %v3359 = vpack.c.b16 %v3320, %v3320
      %v3360 = vpack.c.b16 %v3321, %v3321
      %v3361 = vpack.c.b16 %v3322, %v3322
      %v3362 = vpack.c.b16 %v3323, %v3323
      %v3363 = vpack.c.b16 %v3324, %v3324
      %v3364 = vpack.c.b16 %v3325, %v3325
      %v3365 = vpack.c.b16 %v3326, %v3326
      %v3366 = vpack.c.b16 %v3327, %v3327
      %v3367 = vpack.c.b16 %v3328, %v3328
      %v3368 = vpack.c.b16 %v3329, %v3329
      %v3369 = vpack.c.b16 %v3330, %v3330
      %v3370 = vpack.c.b16 %v3331, %v3331
      %v3371 = vpack.c.b16 %v3332, %v3332
      %vm3411 = vcmask 257024
      %3412 = vst.msk [vmem:[%s194] sm:$0xf] %vm3411, %v3333
      %3413 = vst.msk [vmem:[%s194 + $0x4] sm:$0xf] %vm3411, %v3334
      %vm3414 = vcmask 256000
      %vm3415 = vsmask.f32 2304
      %vm3416 = vmand %vm3414, %vm3415
      %v3417 = vld [vmem:[%s194 + $0x8] sm:$0x7]
      %v3418 = vsel %vm3416, %v3335, %v3417
      %3419 = vst [vmem:[%s194 + $0x8] sm:$0x7] %v3418
      %3420 = vst.msk [vmem:[%s194 + $0xc] sm:$0xf] %vm3411, %v3336
      %3421 = vst.msk [vmem:[%s194 + $0x10] sm:$0xf] %vm3411, %v3337
      %v3422 = vld [vmem:[%s194 + $0x14] sm:$0x7]
      %v3423 = vsel %vm3416, %v3338, %v3422
      %3424 = vst [vmem:[%s194 + $0x14] sm:$0x7] %v3423
      %3425 = vst.msk [vmem:[%s194 + $0x18] sm:$0xf] %vm3411, %v3339
      %3426 = vst.msk [vmem:[%s194 + $0x1c] sm:$0xf] %vm3411, %v3340
      %v3427 = vld [vmem:[%s194 + $0x20] sm:$0x7]
      %v3428 = vsel %vm3416, %v3341, %v3427
      %3429 = vst [vmem:[%s194 + $0x20] sm:$0x7] %v3428
      %3430 = vst.msk [vmem:[%s194 + $0x24] sm:$0xf] %vm3411, %v3342
      %3431 = vst.msk [vmem:[%s194 + $0x28] sm:$0xf] %vm3411, %v3343
      %v3432 = vld [vmem:[%s194 + $0x2c] sm:$0x7]
      %v3433 = vsel %vm3416, %v3344, %v3432
      %3434 = vst [vmem:[%s194 + $0x2c] sm:$0x7] %v3433
      %3435 = vst.msk [vmem:[%s194 + $0x30] sm:$0xf] %vm3411, %v3345
      %3436 = vst.msk [vmem:[%s194 + $0x34] sm:$0xf] %vm3411, %v3346
      %v3437 = vld [vmem:[%s194 + $0x38] sm:$0x7]
      %v3438 = vsel %vm3416, %v3347, %v3437
      %3439 = vst [vmem:[%s194 + $0x38] sm:$0x7] %v3438
      %3440 = vst.msk [vmem:[%s194 + $0x3c] sm:$0xf] %vm3411, %v3348
      %3441 = vst.msk [vmem:[%s194 + $0x40] sm:$0xf] %vm3411, %v3349
      %v3442 = vld [vmem:[%s194 + $0x44] sm:$0x7]
      %v3443 = vsel %vm3416, %v3350, %v3442
      %3444 = vst [vmem:[%s194 + $0x44] sm:$0x7] %v3443
      %3445 = vst.msk [vmem:[%s194 + $0x48] sm:$0xf] %vm3411, %v3351
      %3446 = vst.msk [vmem:[%s194 + $0x4c] sm:$0xf] %vm3411, %v3352
      %v3447 = vld [vmem:[%s194 + $0x50] sm:$0x7]
      %v3448 = vsel %vm3416, %v3353, %v3447
      %3449 = vst [vmem:[%s194 + $0x50] sm:$0x7] %v3448
      %3450 = vst.msk [vmem:[%s194 + $0x54] sm:$0xf] %vm3411, %v3354
      %3451 = vst.msk [vmem:[%s194 + $0x58] sm:$0xf] %vm3411, %v3355
      %v3452 = vld [vmem:[%s194 + $0x5c] sm:$0x7]
      %v3453 = vsel %vm3416, %v3356, %v3452
      %3454 = vst [vmem:[%s194 + $0x5c] sm:$0x7] %v3453
      %3455 = vst.msk [vmem:[%s194 + $0x60] sm:$0xf] %vm3411, %v3357
      %3456 = vst.msk [vmem:[%s194 + $0x64] sm:$0xf] %vm3411, %v3358
      %v3457 = vld [vmem:[%s194 + $0x68] sm:$0x7]
      %v3458 = vsel %vm3416, %v3359, %v3457
      %3459 = vst [vmem:[%s194 + $0x68] sm:$0x7] %v3458
      %3460 = vst.msk [vmem:[%s194 + $0x6c] sm:$0xf] %vm3411, %v3360
      %3461 = vst.msk [vmem:[%s194 + $0x70] sm:$0xf] %vm3411, %v3361
      %v3462 = vld [vmem:[%s194 + $0x74] sm:$0x7]
      %v3463 = vsel %vm3416, %v3362, %v3462
      %3464 = vst [vmem:[%s194 + $0x74] sm:$0x7] %v3463
      %3465 = vst.msk [vmem:[%s194 + $0x78] sm:$0xf] %vm3411, %v3363
      %3466 = vst.msk [vmem:[%s194 + $0x7c] sm:$0xf] %vm3411, %v3364
      %v3467 = vld [vmem:[%s194 + $0x80] sm:$0x7]
      %v3468 = vsel %vm3416, %v3365, %v3467
      %3469 = vst [vmem:[%s194 + $0x80] sm:$0x7] %v3468
      %3470 = vst.msk [vmem:[%s194 + $0x84] sm:$0xf] %vm3411, %v3366
      %3471 = vst.msk [vmem:[%s194 + $0x88] sm:$0xf] %vm3411, %v3367
      %v3472 = vld [vmem:[%s194 + $0x8c] sm:$0x7]
      %v3473 = vsel %vm3416, %v3368, %v3472
      %3474 = vst [vmem:[%s194 + $0x8c] sm:$0x7] %v3473
      %3475 = vst.msk [vmem:[%s194 + $0x90] sm:$0xf] %vm3411, %v3369
      %3476 = vst.msk [vmem:[%s194 + $0x94] sm:$0xf] %vm3411, %v3370
      %v3477 = vld [vmem:[%s194 + $0x98] sm:$0x7]
      %v3478 = vsel %vm3416, %v3371, %v3477
      %3479 = vst [vmem:[%s194 + $0x98] sm:$0x7] %v3478
      %s3480 = smul.u32 13, %s19
      %p3481 = scmp.lt.s32.totalorder %s18, 0
      %s3482 = scalar_select %p3481, %s18, 0
      %p3483 = scmp.lt.s32.totalorder %s3480, 38
      %s3484 = scalar_select %p3483, %s3480, 38
      %s3485 = smul.addr %s3484, 3
      %s3486 = smul.addr %s3482, 117
      %s3487 = sadd.s32 %s3485, %s3486
      %s3488 = smul.addr %s3487, 4
      %s3489 = scalar_lea.vmem %s3, %s3488
      // Predicated region
      $region33: #{tpu_custom_call.1} parent=31 // pred_check
        %p3490 = pneg %p114
      $region34: #{tpu_custom_call.1} parent=31 // pred_check_branch
        %3492 = sbr.rel (%p3490) target = $region36
      $region35: #{tpu_custom_call.1} parent=31 // pred_region
        %s3493 = smul.u32 13, %s19
      $region36: #{tpu_custom_call.1} parent=31 // pred_fallthru
        _
    $region32: #{tpu_custom_call.1} parent=5 // pred_fallthru
      _
    %p3494 = scmp.le.s32.totalorder 2, %s9
    // Predicated region
    $region37: #{tpu_custom_call.1} parent=5 // pred_check
      %p3495 = pneg %p3494
    $region38: #{tpu_custom_call.1} parent=5 // pred_check_branch
      %3497 = sbr.rel (%p3495) target = $region40
    $region39: #{tpu_custom_call.1} parent=5 // pred_region
      %s3498 = ssub.s32 %s9, 2
      // Predicated region
      $region41: #{tpu_custom_call.1} parent=39 // pred_check
        %p3499 = pneg %p120
      $region42: #{tpu_custom_call.1} parent=39 // pred_check_branch
        %3501 = sbr.rel (%p3499) target = $region44
      $region43: #{tpu_custom_call.1} parent=39 // pred_region
        %s3502 = smul.u32 13, %s21
        %p3503 = scmp.lt.s32.totalorder %s20, 0
        %s3504 = scalar_select %p3503, %s20, 0
        %p3505 = scmp.lt.s32.totalorder %s3502, 38
        %s3506 = scalar_select %p3505, %s3502, 38
        %s3507 = smul.addr %s3506, 3
        %s3508 = smul.addr %s3504, 117
        %s3509 = sadd.s32 %s3507, %s3508
        %s3510 = smul.addr %s3509, 4
        %s3511 = scalar_lea.vmem %s3, %s3510
      $region44: #{tpu_custom_call.1} parent=39 // pred_fallthru
        _
    $region40: #{tpu_custom_call.1} parent=5 // pred_fallthru
      _
  $region6: #{tpu_custom_call.1} parent=0 // loop_footer
    %s13 = sadd.s32 1, %s9
  $region7: #{tpu_custom_call.1} parent=0 // loop_footer_branch
    %8 = sbr.rel target = $region3
  $region8: #{tpu_custom_call.1} parent=0 // loop_exit
    _

</llo_original>
